<compile_context>
chip_gen: v7x
topology: tpu7x:2x2x1
jax: 0.10.0
libtpu: 0.0.40
codegen_flags: <defaults>
</compile_context>

<pallas_src>
import jax
import jax.numpy as jnp
import numpy as np
from jax.experimental import pallas as pl
from jax.experimental.pallas import tpu as pltpu


def _vmem():
    return pl.BlockSpec(memory_space=pltpu.MemorySpace.VMEM)


def _round_up(n, m):
    return ((n + m - 1) // m) * m


# ----------------------------------------------------------------------------
# Fused kernel: conv1d(k=3,pad=1,in_ch=1) + BN(folded) + ReLU
#             + BiLSTM (only lstm_out[:, -1, :]) + fc1 + ReLU + fc2
# ----------------------------------------------------------------------------
def fused_kernel(p_ref, w3_ref, bias_ref,
                 wihf_ref, whhf_ref, wihb_ref,
                 w1_ref, w2_ref,
                 out_ref, gx_ref):
    # p_ref:    (L*Bp, 3)   im2col patches, time-major rows (t*Bp + b), f32
    # w3_ref:   (3, C)      conv weight (tap-major), BN scale folded, f32
    # bias_ref: (1, TOT)    packed f32: [shift | b_fwd(4Hp) | b_bwd(3Hp) | b1 | b2]
    # wihf:     (C, 4Hp)    bf16 input->gate weights, gate order (i, f, o, g)
    # whhf:     (Hp, 4Hp)   bf16 recurrent weights (forward dir only)
    # wihb:     (C, 3Hp)    bf16 backward input->gate weights, gate order (i, o, g)
    # w1_ref:   (2Hp, 64)   bf16 fc1, rows [0:Hp]=fwd half, [Hp:2Hp]=bwd half
    # w2_ref:   (64, NC)    bf16 fc2
    # out_ref:  (Bp, NC)    f32
    # gx_ref:   (L*Bp, 4Hp) f32 VMEM scratch for the hoisted input projection
    Bp = out_ref.shape[0]
    NC = out_ref.shape[1]
    Hp = whhf_ref.shape[0]
    C = w3_ref.shape[1]
    L = p_ref.shape[0] // Bp

    # packed bias offsets (128-aligned; must match wrapper layout)
    o_bf = _round_up(C, 128)
    o_bb = o_bf + 4 * Hp
    o_b1 = o_bb + 3 * Hp
    o_b2 = o_b1 + 128

    shift = bias_ref[:, 0:C]                 # (1, C)
    bf = bias_ref[:, o_bf:o_bf + 4 * Hp]     # (1, 4Hp)
    bb = bias_ref[:, o_bb:o_bb + 3 * Hp]     # (1, 3Hp)
    b1 = bias_ref[:, o_b1:o_b1 + 64]         # (1, 64)
    b2 = bias_ref[:, o_b2:o_b2 + NC]         # (1, NC)

    def sig_block(v):
        # sigmoid(x) = 0.5 * (1 + tanh(x/2)): one EUP transcendental, wide VPU affine
        return 0.5 * jnp.tanh(0.5 * v) + 0.5

    # --- conv + folded BN + ReLU: channels-last, time-major (L*Bp, C), f32 VPU ---
    feat = jnp.maximum(
        p_ref[:, 0:1] * w3_ref[0:1, :]
        + p_ref[:, 1:2] * w3_ref[1:2, :]
        + p_ref[:, 2:3] * w3_ref[2:3, :]
        + shift, 0.0)
    feat_bf = feat.astype(jnp.bfloat16)

    # --- forward LSTM: input projection hoisted out of the recurrence and
    #     staged in explicit VMEM scratch (bounds vreg pressure) ---
    gx_ref[...] = jnp.dot(feat_bf, wihf_ref[...],
                          preferred_element_type=jnp.float32) + bf    # (L*Bp, 4Hp)
    whh = whhf_ref[...]                                               # bf16 (Hp, 4Hp)

    h = jnp.zeros((Bp, Hp), jnp.float32)
    c = jnp.zeros((Bp, Hp), jnp.float32)
    for t in range(L):  # static unroll: L known at trace time
        g = gx_ref[pl.ds(t * Bp, Bp), :] + jnp.dot(
            h.astype(jnp.bfloat16), whh, preferred_element_type=jnp.float32)
        # gate order (i, f, o, g): one fused sigmoid over the contiguous 3*Hp
        s = sig_block(g[:, 0:3 * Hp])
        i = s[:, 0:Hp]
        f = s[:, Hp:2 * Hp]
        o = s[:, 2 * Hp:3 * Hp]
        gg = jnp.tanh(g[:, 3 * Hp:4 * Hp])
        c = f * c + i * gg
        h = o * jnp.tanh(c)

    # --- backward direction: output at original position L-1 is one step of
    #     the reverse LSTM from a zero state; h0 = c0 = 0 so the W_hh_b matmul
    #     and the f gate vanish entirely (only i, o, g columns are computed). ---
    feat_last_bf = feat[(L - 1) * Bp:L * Bp, :].astype(jnp.bfloat16)
    gb = jnp.dot(feat_last_bf, wihb_ref[...],
                 preferred_element_type=jnp.float32) + bb             # (Bp, 3Hp)
    sb = sig_block(gb[:, 0:2 * Hp])
    ib = sb[:, 0:Hp]
    ob = sb[:, Hp:2 * Hp]
    ggb = jnp.tanh(gb[:, 2 * Hp:3 * Hp])
    hb = ob * jnp.tanh(ib * ggb)

    # --- head: fc1 as split matmul (no lane concat of h_fwd/h_bwd), ReLU, fc2 ---
    h1 = jnp.maximum(
        jnp.dot(h.astype(jnp.bfloat16), w1_ref[0:Hp, :],
                preferred_element_type=jnp.float32)
        + jnp.dot(hb.astype(jnp.bfloat16), w1_ref[Hp:2 * Hp, :],
                  preferred_element_type=jnp.float32)
        + b1, 0.0)
    out_ref[...] = jnp.dot(h1.astype(jnp.bfloat16), w2_ref[...],
                           preferred_element_type=jnp.float32) + b2


# ----------------------------------------------------------------------------
# Wrapper: layout plumbing / weight padding in plain JAX, one pallas_call
# ----------------------------------------------------------------------------
def cnn_bilstm_forward(x, p, eps=1e-5):
    B, _, L = x.shape
    C = p['conv_w'].shape[0]
    H = p['w_hh_f'].shape[1]
    NC = p['fc2_w'].shape[0]
    Hp = _round_up(H, 128)          # lane-align each gate block
    Bp = _round_up(B, 8)            # sublane-align the batch

    # im2col patches, zero-padded batch, time-major rows (t*Bp + b), f32
    xp = jnp.pad(x[:, 0, :], ((0, 0), (1, 1)))                        # (B, L+2)
    patches = jnp.stack([xp[:, k:k + L] for k in range(3)], axis=-1)  # (B, L, 3)
    patches = jnp.pad(patches, ((0, Bp - B), (0, 0), (0, 0)))
    patches = patches.transpose(1, 0, 2).reshape(L * Bp, 3)

    # fold BN (inference mode) into conv weight scale + shift
    inv = p['bn_gamma'] / jnp.sqrt(p['bn_var'] + eps)
    w3s = jnp.transpose(p['conv_w'][:, 0, :]) * inv[None, :]          # (3, C)
    shift = ((p['conv_b'] - p['bn_mean']) * inv + p['bn_beta']).reshape(1, C)

    def pad_block(w):  # (in, H) -> (in, Hp), zero pad lanes (invariant: pad == 0)
        return jnp.pad(w, ((0, 0), (0, Hp - H)))

    def gate_cols(w, order):  # w: (in, 4H) in PyTorch gate order (i, f, g, o)
        blk = {'i': w[:, 0:H], 'f': w[:, H:2 * H],
               'g': w[:, 2 * H:3 * H], 'o': w[:, 3 * H:4 * H]}
        return jnp.concatenate([pad_block(blk[k]) for k in order], axis=1)

    FWD = ('i', 'f', 'o', 'g')   # sigmoid gates contiguous first, tanh gate last
    BWD = ('i', 'o', 'g')        # f gate dead for the one-step backward output

    wihf = gate_cols(p['w_ih_f'].T, FWD).astype(jnp.bfloat16)             # (C, 4Hp)
    whhf = gate_cols(jnp.pad(p['w_hh_f'].T, ((0, Hp - H), (0, 0))),
                     FWD).astype(jnp.bfloat16)                            # (Hp, 4Hp)
    bf = gate_cols((p['b_ih_f'] + p['b_hh_f']).reshape(1, 4 * H), FWD)    # (1, 4Hp)
    wihb = gate_cols(p['w_ih_b'].T, BWD).astype(jnp.bfloat16)             # (C, 3Hp)
    bb = gate_cols((p['b_ih_b'] + p['b_hh_b']).reshape(1, 4 * H), BWD)    # (1, 3Hp)

    w1f = jnp.pad(p['fc1_w'][:, :H].T, ((0, Hp - H), (0, 0)))             # (Hp, 64)
    w1b = jnp.pad(p['fc1_w'][:, H:].T, ((0, Hp - H), (0, 0)))             # (Hp, 64)
    w1 = jnp.concatenate([w1f, w1b], axis=0).astype(jnp.bfloat16)         # (2Hp, 64)
    w2 = p['fc2_w'].T.astype(jnp.bfloat16)                                # (64, NC)

    # pack the five tiny (1, K) vectors at 128-aligned lane offsets into one array
    o_bf = _round_up(C, 128)
    o_bb = o_bf + 4 * Hp
    o_b1 = o_bb + 3 * Hp
    o_b2 = o_b1 + 128
    tot = o_b2 + 128
    biases = jnp.zeros((1, tot), jnp.float32)
    biases = biases.at[:, 0:C].set(shift)
    biases = biases.at[:, o_bf:o_bf + 4 * Hp].set(bf)
    biases = biases.at[:, o_bb:o_bb + 3 * Hp].set(bb)
    biases = biases.at[:, o_b1:o_b1 + 64].set(p['fc1_b'].reshape(1, -1))
    biases = biases.at[:, o_b2:o_b2 + NC].set(p['fc2_b'].reshape(1, -1))

    out = pl.pallas_call(
        fused_kernel,
        out_shape=jax.ShapeDtypeStruct((Bp, NC), jnp.float32),
        in_specs=[_vmem()] * 8,
        out_specs=_vmem(),
        scratch_shapes=[pltpu.VMEM((L * Bp, 4 * Hp), jnp.float32)],
    )(patches, w3s, biases, wihf, whhf, wihb, w1, w2)
    return out[:B]


# ----------------------------------------------------------------------------
# Pure-JAX reference (mirrors the PyTorch forward, full bidirectional pass)
# ----------------------------------------------------------------------------
def reference_forward(x, p, eps=1e-5):
    B, _, L = x.shape
    H = p['w_hh_f'].shape[1]

    xp = jnp.pad(x[:, 0, :], ((0, 0), (1, 1)))
    patches = jnp.stack([xp[:, k:k + L] for k in range(3)], axis=-1)  # (B, L, 3)
    conv = jnp.einsum('blk,ck->bcl', patches, p['conv_w'][:, 0, :]) \
        + p['conv_b'][None, :, None]
    inv = p['bn_gamma'] / jnp.sqrt(p['bn_var'] + eps)
    y = (conv - p['bn_mean'][None, :, None]) * inv[None, :, None] \
        + p['bn_beta'][None, :, None]
    y = jnp.maximum(y, 0.0)
    seq = jnp.transpose(y, (0, 2, 1))                                 # (B, L, C)

    def lstm_dir(s, w_ih, w_hh, b_ih, b_hh):
        h = jnp.zeros((B, H), jnp.float32)
        c = jnp.zeros((B, H), jnp.float32)
        outs = []
        for t in range(L):
            g = s[:, t, :] @ w_ih.T + h @ w_hh.T + b_ih + b_hh
            i = jax.nn.sigmoid(g[:, :H])
            f = jax.nn.sigmoid(g[:, H:2 * H])
            gg = jnp.tanh(g[:, 2 * H:3 * H])
            o = jax.nn.sigmoid(g[:, 3 * H:])
            c = f * c + i * gg
            h = o * jnp.tanh(c)
            outs.append(h)
        return jnp.stack(outs, axis=1)

    out_f = lstm_dir(seq, p['w_ih_f'], p['w_hh_f'], p['b_ih_f'], p['b_hh_f'])
    out_b = lstm_dir(seq[:, ::-1, :], p['w_ih_b'], p['w_hh_b'],
                     p['b_ih_b'], p['b_hh_b'])[:, ::-1, :]
    last = jnp.concatenate([out_f[:, -1, :], out_b[:, -1, :]], axis=-1)
    h1 = jnp.maximum(last @ p['fc1_w'].T + p['fc1_b'], 0.0)
    return h1 @ p['fc2_w'].T + p['fc2_b']


# ----------------------------------------------------------------------------
# Deterministic parameter construction (PyTorch-style shapes)
# ----------------------------------------------------------------------------
def init_params(key, C=32, H=64, NC=4):
    ks = jax.random.split(key, 16)

    def u(k, shape, fan_in):
        b = 1.0 / np.sqrt(fan_in)
        return jax.random.uniform(k, shape, jnp.float32, -b, b)

    p = {
        'conv_w': u(ks[0], (C, 1, 3), 3),
        'conv_b': u(ks[1], (C,), 3),
        'bn_gamma': jnp.ones((C,), jnp.float32),
        'bn_beta': jnp.zeros((C,), jnp.float32),
        'bn_mean': jnp.zeros((C,), jnp.float32),
        'bn_var': jnp.ones((C,), jnp.float32),
        'w_ih_f': u(ks[2], (4 * H, C), H),
        'w_hh_f': u(ks[3], (4 * H, H), H),
        'b_ih_f': u(ks[4], (4 * H,), H),
        'b_hh_f': u(ks[5], (4 * H,), H),
        'w_ih_b': u(ks[6], (4 * H, C), H),
        'w_hh_b': u(ks[7], (4 * H, H), H),
        'b_ih_b': u(ks[8], (4 * H,), H),
        'b_hh_b': u(ks[9], (4 * H,), H),
        'fc1_w': u(ks[10], (64, 2 * H), 2 * H),
        'fc1_b': u(ks[11], (64,), 2 * H),
        'fc2_w': u(ks[12], (NC, 64), 64),
        'fc2_b': u(ks[13], (NC,), 64),
    }
    return p


if __name__ == "__main__":
    B, L = 2, 16          # batch=2, input_features (sequence length) = 16
    C, H, NC = 32, 64, 4  # module defaults

    key = jax.random.PRNGKey(0)
    k_x, k_p = jax.random.split(key)
    x = jax.random.normal(k_x, (B, 1, L), jnp.float32)   # PyTorch NCL input
    params = init_params(k_p, C=C, H=H, NC=NC)

    out = jax.jit(cnn_bilstm_forward)(x, params)
    out = jax.block_until_ready(out)

    ref = reference_forward(x, params)
    assert out.shape == (B, NC), out.shape
    # bf16 MXU operands (f32 accumulation): slightly looser tolerance than pure f32
    np.testing.assert_allclose(np.asarray(out), np.asarray(ref),
                               rtol=2e-2, atol=2e-2)
    print("KERNEL_OK")
</pallas_src>

<mosaic_0001>
module attributes {stable_mosaic.version = 11 : i64} {
  func.func @fused_kernel(%arg0: memref<128x3xf32, #tpu.memory_space<vmem>>, %arg1: memref<3x32xf32, #tpu.memory_space<vmem>>, %arg2: memref<1x1280xf32, #tpu.memory_space<vmem>>, %arg3: memref<32x512xbf16, #tpu.memory_space<vmem>>, %arg4: memref<128x512xbf16, #tpu.memory_space<vmem>>, %arg5: memref<32x384xbf16, #tpu.memory_space<vmem>>, %arg6: memref<256x64xbf16, #tpu.memory_space<vmem>>, %arg7: memref<64x4xbf16, #tpu.memory_space<vmem>>, %arg8: memref<8x4xf32, #tpu.memory_space<vmem>>, %arg9: memref<128x512xf32, #tpu.memory_space<vmem>>) attributes {dimension_semantics = [], scalar_prefetch = 0 : i64, scratch_operands = 1 : i64, tpu.core_type = #tpu.core_type<tc>} {
    %c0 = arith.constant 0 : index
    %c0_0 = arith.constant 0 : index
    %0 = vector.load %arg2[%c0, %c0_0] : memref<1x1280xf32, #tpu.memory_space<vmem>>, vector<1x32xf32>
    %c0_1 = arith.constant 0 : index
    %c128 = arith.constant 128 : index
    %1 = vector.load %arg2[%c0_1, %c128] : memref<1x1280xf32, #tpu.memory_space<vmem>>, vector<1x512xf32>
    %c0_2 = arith.constant 0 : index
    %c640 = arith.constant 640 : index
    %2 = vector.load %arg2[%c0_2, %c640] : memref<1x1280xf32, #tpu.memory_space<vmem>>, vector<1x384xf32>
    %c0_3 = arith.constant 0 : index
    %c1024 = arith.constant 1024 : index
    %3 = vector.load %arg2[%c0_3, %c1024] : memref<1x1280xf32, #tpu.memory_space<vmem>>, vector<1x64xf32>
    %c0_4 = arith.constant 0 : index
    %c1152 = arith.constant 1152 : index
    %4 = vector.load %arg2[%c0_4, %c1152] : memref<1x1280xf32, #tpu.memory_space<vmem>>, vector<1x4xf32>
    %c0_5 = arith.constant 0 : index
    %c0_6 = arith.constant 0 : index
    %5 = vector.load %arg0[%c0_5, %c0_6] : memref<128x3xf32, #tpu.memory_space<vmem>>, vector<128x1xf32>
    %c0_7 = arith.constant 0 : index
    %c0_8 = arith.constant 0 : index
    %6 = vector.load %arg1[%c0_7, %c0_8] : memref<3x32xf32, #tpu.memory_space<vmem>>, vector<1x32xf32>
    %7 = vector.broadcast %5 : vector<128x1xf32> to vector<128x32xf32>
    %8 = vector.broadcast %6 : vector<1x32xf32> to vector<128x32xf32>
    %9 = arith.mulf %7, %8 : vector<128x32xf32>
    %c0_9 = arith.constant 0 : index
    %c1 = arith.constant 1 : index
    %10 = vector.load %arg0[%c0_9, %c1] : memref<128x3xf32, #tpu.memory_space<vmem>>, vector<128x1xf32>
    %c1_10 = arith.constant 1 : index
    %c0_11 = arith.constant 0 : index
    %11 = vector.load %arg1[%c1_10, %c0_11] : memref<3x32xf32, #tpu.memory_space<vmem>>, vector<1x32xf32>
    %12 = vector.broadcast %10 : vector<128x1xf32> to vector<128x32xf32>
    %13 = vector.broadcast %11 : vector<1x32xf32> to vector<128x32xf32>
    %14 = arith.mulf %12, %13 : vector<128x32xf32>
    %15 = arith.addf %9, %14 : vector<128x32xf32>
    %c0_12 = arith.constant 0 : index
    %c2 = arith.constant 2 : index
    %16 = vector.load %arg0[%c0_12, %c2] : memref<128x3xf32, #tpu.memory_space<vmem>>, vector<128x1xf32>
    %c2_13 = arith.constant 2 : index
    %c0_14 = arith.constant 0 : index
    %17 = vector.load %arg1[%c2_13, %c0_14] : memref<3x32xf32, #tpu.memory_space<vmem>>, vector<1x32xf32>
    %18 = vector.broadcast %16 : vector<128x1xf32> to vector<128x32xf32>
    %19 = vector.broadcast %17 : vector<1x32xf32> to vector<128x32xf32>
    %20 = arith.mulf %18, %19 : vector<128x32xf32>
    %21 = arith.addf %15, %20 : vector<128x32xf32>
    %22 = vector.broadcast %0 : vector<1x32xf32> to vector<128x32xf32>
    %23 = arith.addf %21, %22 : vector<128x32xf32>
    %cst = arith.constant 0.000000e+00 : f32
    %24 = vector.broadcast %cst : f32 to vector<128x32xf32>
    %25 = arith.maximumf %23, %24 : vector<128x32xf32>
    %26 = arith.truncf %25 : vector<128x32xf32> to vector<128x32xbf16>
    %c0_15 = arith.constant 0 : index
    %c0_16 = arith.constant 0 : index
    %27 = vector.load %arg3[%c0_15, %c0_16] : memref<32x512xbf16, #tpu.memory_space<vmem>>, vector<32x512xbf16>
    %cst_17 = arith.constant dense<0.000000e+00> : vector<128x512xf32>
    %28 = tpu.matmul %26, %27, %cst_17 {dimension_numbers = #tpu.dot_dimension_numbers<[1], [0], [0], [1], [0, 0, 1, 1], [], []>} : vector<128x32xbf16>, vector<32x512xbf16>, vector<128x512xf32> -> vector<128x512xf32>
    %29 = vector.broadcast %1 : vector<1x512xf32> to vector<128x512xf32>
    %30 = arith.addf %28, %29 : vector<128x512xf32>
    %c0_18 = arith.constant 0 : index
    %c0_19 = arith.constant 0 : index
    %31 = vector.load %arg9[%c0_18, %c0_19] : memref<128x512xf32, #tpu.memory_space<vmem>>, vector<128x512xf32>
    tpu.vector_store %arg9[%c0_18, %c0_19], %30 {strides = array<i32>} : memref<128x512xf32, #tpu.memory_space<vmem>>, vector<128x512xf32>,
    %c0_20 = arith.constant 0 : index
    %c0_21 = arith.constant 0 : index
    %32 = vector.load %arg4[%c0_20, %c0_21] : memref<128x512xbf16, #tpu.memory_space<vmem>>, vector<128x512xbf16>
    %cst_22 = arith.constant 0.000000e+00 : f32
    %33 = vector.broadcast %cst_22 : f32 to vector<8x128xf32>
    %cst_23 = arith.constant 0.000000e+00 : f32
    %34 = vector.broadcast %cst_23 : f32 to vector<8x128xf32>
    %c0_24 = arith.constant 0 : index
    %c0_25 = arith.constant 0 : index
    %35 = vector.load %arg9[%c0_24, %c0_25] : memref<128x512xf32, #tpu.memory_space<vmem>>, vector<8x512xf32>
    %36 = arith.truncf %33 : vector<8x128xf32> to vector<8x128xbf16>
    %cst_26 = arith.constant dense<0.000000e+00> : vector<8x512xf32>
    %37 = tpu.matmul %36, %32, %cst_26 {dimension_numbers = #tpu.dot_dimension_numbers<[1], [0], [0], [1], [0, 0, 1, 1], [], []>} : vector<8x128xbf16>, vector<128x512xbf16>, vector<8x512xf32> -> vector<8x512xf32>
    %38 = arith.addf %35, %37 : vector<8x512xf32>
    %39 = vector.extract_strided_slice %38 {offsets = [0, 0], sizes = [8, 384], strides = [1, 1]} : vector<8x512xf32> to vector<8x384xf32>
    %cst_27 = arith.constant 5.000000e-01 : f32
    %40 = vector.broadcast %cst_27 : f32 to vector<8x384xf32>
    %41 = arith.mulf %40, %39 : vector<8x384xf32>
    %42 = math.tanh %41 : vector<8x384xf32>
    %cst_28 = arith.constant 5.000000e-01 : f32
    %43 = vector.broadcast %cst_28 : f32 to vector<8x384xf32>
    %44 = arith.mulf %43, %42 : vector<8x384xf32>
    %cst_29 = arith.constant 5.000000e-01 : f32
    %45 = vector.broadcast %cst_29 : f32 to vector<8x384xf32>
    %46 = arith.addf %44, %45 : vector<8x384xf32>
    %47 = vector.extract_strided_slice %46 {offsets = [0, 0], sizes = [8, 128], strides = [1, 1]} : vector<8x384xf32> to vector<8x128xf32>
    %48 = vector.extract_strided_slice %46 {offsets = [0, 128], sizes = [8, 128], strides = [1, 1]} : vector<8x384xf32> to vector<8x128xf32>
    %49 = vector.extract_strided_slice %46 {offsets = [0, 256], sizes = [8, 128], strides = [1, 1]} : vector<8x384xf32> to vector<8x128xf32>
    %50 = vector.extract_strided_slice %38 {offsets = [0, 384], sizes = [8, 128], strides = [1, 1]} : vector<8x512xf32> to vector<8x128xf32>
    %51 = math.tanh %50 : vector<8x128xf32>
    %52 = arith.mulf %48, %34 : vector<8x128xf32>
    %53 = arith.mulf %47, %51 : vector<8x128xf32>
    %54 = arith.addf %52, %53 : vector<8x128xf32>
    %55 = math.tanh %54 : vector<8x128xf32>
    %56 = arith.mulf %49, %55 : vector<8x128xf32>
    %c8 = arith.constant 8 : index
    %c0_30 = arith.constant 0 : index
    %57 = vector.load %arg9[%c8, %c0_30] : memref<128x512xf32, #tpu.memory_space<vmem>>, vector<8x512xf32>
    %58 = arith.truncf %56 : vector<8x128xf32> to vector<8x128xbf16>
    %cst_31 = arith.constant dense<0.000000e+00> : vector<8x512xf32>
    %59 = tpu.matmul %58, %32, %cst_31 {dimension_numbers = #tpu.dot_dimension_numbers<[1], [0], [0], [1], [0, 0, 1, 1], [], []>} : vector<8x128xbf16>, vector<128x512xbf16>, vector<8x512xf32> -> vector<8x512xf32>
    %60 = arith.addf %57, %59 : vector<8x512xf32>
    %61 = vector.extract_strided_slice %60 {offsets = [0, 0], sizes = [8, 384], strides = [1, 1]} : vector<8x512xf32> to vector<8x384xf32>
    %cst_32 = arith.constant 5.000000e-01 : f32
    %62 = vector.broadcast %cst_32 : f32 to vector<8x384xf32>
    %63 = arith.mulf %62, %61 : vector<8x384xf32>
    %64 = math.tanh %63 : vector<8x384xf32>
    %cst_33 = arith.constant 5.000000e-01 : f32
    %65 = vector.broadcast %cst_33 : f32 to vector<8x384xf32>
    %66 = arith.mulf %65, %64 : vector<8x384xf32>
    %cst_34 = arith.constant 5.000000e-01 : f32
    %67 = vector.broadcast %cst_34 : f32 to vector<8x384xf32>
    %68 = arith.addf %66, %67 : vector<8x384xf32>
    %69 = vector.extract_strided_slice %68 {offsets = [0, 0], sizes = [8, 128], strides = [1, 1]} : vector<8x384xf32> to vector<8x128xf32>
    %70 = vector.extract_strided_slice %68 {offsets = [0, 128], sizes = [8, 128], strides = [1, 1]} : vector<8x384xf32> to vector<8x128xf32>
    %71 = vector.extract_strided_slice %68 {offsets = [0, 256], sizes = [8, 128], strides = [1, 1]} : vector<8x384xf32> to vector<8x128xf32>
    %72 = vector.extract_strided_slice %60 {offsets = [0, 384], sizes = [8, 128], strides = [1, 1]} : vector<8x512xf32> to vector<8x128xf32>
    %73 = math.tanh %72 : vector<8x128xf32>
    %74 = arith.mulf %70, %54 : vector<8x128xf32>
    %75 = arith.mulf %69, %73 : vector<8x128xf32>
    %76 = arith.addf %74, %75 : vector<8x128xf32>
    %77 = math.tanh %76 : vector<8x128xf32>
    %78 = arith.mulf %71, %77 : vector<8x128xf32>
    %c16 = arith.constant 16 : index
    %c0_35 = arith.constant 0 : index
    %79 = vector.load %arg9[%c16, %c0_35] : memref<128x512xf32, #tpu.memory_space<vmem>>, vector<8x512xf32>
    %80 = arith.truncf %78 : vector<8x128xf32> to vector<8x128xbf16>
    %cst_36 = arith.constant dense<0.000000e+00> : vector<8x512xf32>
    %81 = tpu.matmul %80, %32, %cst_36 {dimension_numbers = #tpu.dot_dimension_numbers<[1], [0], [0], [1], [0, 0, 1, 1], [], []>} : vector<8x128xbf16>, vector<128x512xbf16>, vector<8x512xf32> -> vector<8x512xf32>
    %82 = arith.addf %79, %81 : vector<8x512xf32>
    %83 = vector.extract_strided_slice %82 {offsets = [0, 0], sizes = [8, 384], strides = [1, 1]} : vector<8x512xf32> to vector<8x384xf32>
    %cst_37 = arith.constant 5.000000e-01 : f32
    %84 = vector.broadcast %cst_37 : f32 to vector<8x384xf32>
    %85 = arith.mulf %84, %83 : vector<8x384xf32>
    %86 = math.tanh %85 : vector<8x384xf32>
    %cst_38 = arith.constant 5.000000e-01 : f32
    %87 = vector.broadcast %cst_38 : f32 to vector<8x384xf32>
    %88 = arith.mulf %87, %86 : vector<8x384xf32>
    %cst_39 = arith.constant 5.000000e-01 : f32
    %89 = vector.broadcast %cst_39 : f32 to vector<8x384xf32>
    %90 = arith.addf %88, %89 : vector<8x384xf32>
    %91 = vector.extract_strided_slice %90 {offsets = [0, 0], sizes = [8, 128], strides = [1, 1]} : vector<8x384xf32> to vector<8x128xf32>
    %92 = vector.extract_strided_slice %90 {offsets = [0, 128], sizes = [8, 128], strides = [1, 1]} : vector<8x384xf32> to vector<8x128xf32>
    %93 = vector.extract_strided_slice %90 {offsets = [0, 256], sizes = [8, 128], strides = [1, 1]} : vector<8x384xf32> to vector<8x128xf32>
    %94 = vector.extract_strided_slice %82 {offsets = [0, 384], sizes = [8, 128], strides = [1, 1]} : vector<8x512xf32> to vector<8x128xf32>
    %95 = math.tanh %94 : vector<8x128xf32>
    %96 = arith.mulf %92, %76 : vector<8x128xf32>
    %97 = arith.mulf %91, %95 : vector<8x128xf32>
    %98 = arith.addf %96, %97 : vector<8x128xf32>
    %99 = math.tanh %98 : vector<8x128xf32>
    %100 = arith.mulf %93, %99 : vector<8x128xf32>
    %c24 = arith.constant 24 : index
    %c0_40 = arith.constant 0 : index
    %101 = vector.load %arg9[%c24, %c0_40] : memref<128x512xf32, #tpu.memory_space<vmem>>, vector<8x512xf32>
    %102 = arith.truncf %100 : vector<8x128xf32> to vector<8x128xbf16>
    %cst_41 = arith.constant dense<0.000000e+00> : vector<8x512xf32>
    %103 = tpu.matmul %102, %32, %cst_41 {dimension_numbers = #tpu.dot_dimension_numbers<[1], [0], [0], [1], [0, 0, 1, 1], [], []>} : vector<8x128xbf16>, vector<128x512xbf16>, vector<8x512xf32> -> vector<8x512xf32>
    %104 = arith.addf %101, %103 : vector<8x512xf32>
    %105 = vector.extract_strided_slice %104 {offsets = [0, 0], sizes = [8, 384], strides = [1, 1]} : vector<8x512xf32> to vector<8x384xf32>
    %cst_42 = arith.constant 5.000000e-01 : f32
    %106 = vector.broadcast %cst_42 : f32 to vector<8x384xf32>
    %107 = arith.mulf %106, %105 : vector<8x384xf32>
    %108 = math.tanh %107 : vector<8x384xf32>
    %cst_43 = arith.constant 5.000000e-01 : f32
    %109 = vector.broadcast %cst_43 : f32 to vector<8x384xf32>
    %110 = arith.mulf %109, %108 : vector<8x384xf32>
    %cst_44 = arith.constant 5.000000e-01 : f32
    %111 = vector.broadcast %cst_44 : f32 to vector<8x384xf32>
    %112 = arith.addf %110, %111 : vector<8x384xf32>
    %113 = vector.extract_strided_slice %112 {offsets = [0, 0], sizes = [8, 128], strides = [1, 1]} : vector<8x384xf32> to vector<8x128xf32>
    %114 = vector.extract_strided_slice %112 {offsets = [0, 128], sizes = [8, 128], strides = [1, 1]} : vector<8x384xf32> to vector<8x128xf32>
    %115 = vector.extract_strided_slice %112 {offsets = [0, 256], sizes = [8, 128], strides = [1, 1]} : vector<8x384xf32> to vector<8x128xf32>
    %116 = vector.extract_strided_slice %104 {offsets = [0, 384], sizes = [8, 128], strides = [1, 1]} : vector<8x512xf32> to vector<8x128xf32>
    %117 = math.tanh %116 : vector<8x128xf32>
    %118 = arith.mulf %114, %98 : vector<8x128xf32>
    %119 = arith.mulf %113, %117 : vector<8x128xf32>
    %120 = arith.addf %118, %119 : vector<8x128xf32>
    %121 = math.tanh %120 : vector<8x128xf32>
    %122 = arith.mulf %115, %121 : vector<8x128xf32>
    %c32 = arith.constant 32 : index
    %c0_45 = arith.constant 0 : index
    %123 = vector.load %arg9[%c32, %c0_45] : memref<128x512xf32, #tpu.memory_space<vmem>>, vector<8x512xf32>
    %124 = arith.truncf %122 : vector<8x128xf32> to vector<8x128xbf16>
    %cst_46 = arith.constant dense<0.000000e+00> : vector<8x512xf32>
    %125 = tpu.matmul %124, %32, %cst_46 {dimension_numbers = #tpu.dot_dimension_numbers<[1], [0], [0], [1], [0, 0, 1, 1], [], []>} : vector<8x128xbf16>, vector<128x512xbf16>, vector<8x512xf32> -> vector<8x512xf32>
    %126 = arith.addf %123, %125 : vector<8x512xf32>
    %127 = vector.extract_strided_slice %126 {offsets = [0, 0], sizes = [8, 384], strides = [1, 1]} : vector<8x512xf32> to vector<8x384xf32>
    %cst_47 = arith.constant 5.000000e-01 : f32
    %128 = vector.broadcast %cst_47 : f32 to vector<8x384xf32>
    %129 = arith.mulf %128, %127 : vector<8x384xf32>
    %130 = math.tanh %129 : vector<8x384xf32>
    %cst_48 = arith.constant 5.000000e-01 : f32
    %131 = vector.broadcast %cst_48 : f32 to vector<8x384xf32>
    %132 = arith.mulf %131, %130 : vector<8x384xf32>
    %cst_49 = arith.constant 5.000000e-01 : f32
    %133 = vector.broadcast %cst_49 : f32 to vector<8x384xf32>
    %134 = arith.addf %132, %133 : vector<8x384xf32>
    %135 = vector.extract_strided_slice %134 {offsets = [0, 0], sizes = [8, 128], strides = [1, 1]} : vector<8x384xf32> to vector<8x128xf32>
    %136 = vector.extract_strided_slice %134 {offsets = [0, 128], sizes = [8, 128], strides = [1, 1]} : vector<8x384xf32> to vector<8x128xf32>
    %137 = vector.extract_strided_slice %134 {offsets = [0, 256], sizes = [8, 128], strides = [1, 1]} : vector<8x384xf32> to vector<8x128xf32>
    %138 = vector.extract_strided_slice %126 {offsets = [0, 384], sizes = [8, 128], strides = [1, 1]} : vector<8x512xf32> to vector<8x128xf32>
    %139 = math.tanh %138 : vector<8x128xf32>
    %140 = arith.mulf %136, %120 : vector<8x128xf32>
    %141 = arith.mulf %135, %139 : vector<8x128xf32>
    %142 = arith.addf %140, %141 : vector<8x128xf32>
    %143 = math.tanh %142 : vector<8x128xf32>
    %144 = arith.mulf %137, %143 : vector<8x128xf32>
    %c40 = arith.constant 40 : index
    %c0_50 = arith.constant 0 : index
    %145 = vector.load %arg9[%c40, %c0_50] : memref<128x512xf32, #tpu.memory_space<vmem>>, vector<8x512xf32>
    %146 = arith.truncf %144 : vector<8x128xf32> to vector<8x128xbf16>
    %cst_51 = arith.constant dense<0.000000e+00> : vector<8x512xf32>
    %147 = tpu.matmul %146, %32, %cst_51 {dimension_numbers = #tpu.dot_dimension_numbers<[1], [0], [0], [1], [0, 0, 1, 1], [], []>} : vector<8x128xbf16>, vector<128x512xbf16>, vector<8x512xf32> -> vector<8x512xf32>
    %148 = arith.addf %145, %147 : vector<8x512xf32>
    %149 = vector.extract_strided_slice %148 {offsets = [0, 0], sizes = [8, 384], strides = [1, 1]} : vector<8x512xf32> to vector<8x384xf32>
    %cst_52 = arith.constant 5.000000e-01 : f32
    %150 = vector.broadcast %cst_52 : f32 to vector<8x384xf32>
    %151 = arith.mulf %150, %149 : vector<8x384xf32>
    %152 = math.tanh %151 : vector<8x384xf32>
    %cst_53 = arith.constant 5.000000e-01 : f32
    %153 = vector.broadcast %cst_53 : f32 to vector<8x384xf32>
    %154 = arith.mulf %153, %152 : vector<8x384xf32>
    %cst_54 = arith.constant 5.000000e-01 : f32
    %155 = vector.broadcast %cst_54 : f32 to vector<8x384xf32>
    %156 = arith.addf %154, %155 : vector<8x384xf32>
    %157 = vector.extract_strided_slice %156 {offsets = [0, 0], sizes = [8, 128], strides = [1, 1]} : vector<8x384xf32> to vector<8x128xf32>
    %158 = vector.extract_strided_slice %156 {offsets = [0, 128], sizes = [8, 128], strides = [1, 1]} : vector<8x384xf32> to vector<8x128xf32>
    %159 = vector.extract_strided_slice %156 {offsets = [0, 256], sizes = [8, 128], strides = [1, 1]} : vector<8x384xf32> to vector<8x128xf32>
    %160 = vector.extract_strided_slice %148 {offsets = [0, 384], sizes = [8, 128], strides = [1, 1]} : vector<8x512xf32> to vector<8x128xf32>
    %161 = math.tanh %160 : vector<8x128xf32>
    %162 = arith.mulf %158, %142 : vector<8x128xf32>
    %163 = arith.mulf %157, %161 : vector<8x128xf32>
    %164 = arith.addf %162, %163 : vector<8x128xf32>
    %165 = math.tanh %164 : vector<8x128xf32>
    %166 = arith.mulf %159, %165 : vector<8x128xf32>
    %c48 = arith.constant 48 : index
    %c0_55 = arith.constant 0 : index
    %167 = vector.load %arg9[%c48, %c0_55] : memref<128x512xf32, #tpu.memory_space<vmem>>, vector<8x512xf32>
    %168 = arith.truncf %166 : vector<8x128xf32> to vector<8x128xbf16>
    %cst_56 = arith.constant dense<0.000000e+00> : vector<8x512xf32>
    %169 = tpu.matmul %168, %32, %cst_56 {dimension_numbers = #tpu.dot_dimension_numbers<[1], [0], [0], [1], [0, 0, 1, 1], [], []>} : vector<8x128xbf16>, vector<128x512xbf16>, vector<8x512xf32> -> vector<8x512xf32>
    %170 = arith.addf %167, %169 : vector<8x512xf32>
    %171 = vector.extract_strided_slice %170 {offsets = [0, 0], sizes = [8, 384], strides = [1, 1]} : vector<8x512xf32> to vector<8x384xf32>
    %cst_57 = arith.constant 5.000000e-01 : f32
    %172 = vector.broadcast %cst_57 : f32 to vector<8x384xf32>
    %173 = arith.mulf %172, %171 : vector<8x384xf32>
    %174 = math.tanh %173 : vector<8x384xf32>
    %cst_58 = arith.constant 5.000000e-01 : f32
    %175 = vector.broadcast %cst_58 : f32 to vector<8x384xf32>
    %176 = arith.mulf %175, %174 : vector<8x384xf32>
    %cst_59 = arith.constant 5.000000e-01 : f32
    %177 = vector.broadcast %cst_59 : f32 to vector<8x384xf32>
    %178 = arith.addf %176, %177 : vector<8x384xf32>
    %179 = vector.extract_strided_slice %178 {offsets = [0, 0], sizes = [8, 128], strides = [1, 1]} : vector<8x384xf32> to vector<8x128xf32>
    %180 = vector.extract_strided_slice %178 {offsets = [0, 128], sizes = [8, 128], strides = [1, 1]} : vector<8x384xf32> to vector<8x128xf32>
    %181 = vector.extract_strided_slice %178 {offsets = [0, 256], sizes = [8, 128], strides = [1, 1]} : vector<8x384xf32> to vector<8x128xf32>
    %182 = vector.extract_strided_slice %170 {offsets = [0, 384], sizes = [8, 128], strides = [1, 1]} : vector<8x512xf32> to vector<8x128xf32>
    %183 = math.tanh %182 : vector<8x128xf32>
    %184 = arith.mulf %180, %164 : vector<8x128xf32>
    %185 = arith.mulf %179, %183 : vector<8x128xf32>
    %186 = arith.addf %184, %185 : vector<8x128xf32>
    %187 = math.tanh %186 : vector<8x128xf32>
    %188 = arith.mulf %181, %187 : vector<8x128xf32>
    %c56 = arith.constant 56 : index
    %c0_60 = arith.constant 0 : index
    %189 = vector.load %arg9[%c56, %c0_60] : memref<128x512xf32, #tpu.memory_space<vmem>>, vector<8x512xf32>
    %190 = arith.truncf %188 : vector<8x128xf32> to vector<8x128xbf16>
    %cst_61 = arith.constant dense<0.000000e+00> : vector<8x512xf32>
    %191 = tpu.matmul %190, %32, %cst_61 {dimension_numbers = #tpu.dot_dimension_numbers<[1], [0], [0], [1], [0, 0, 1, 1], [], []>} : vector<8x128xbf16>, vector<128x512xbf16>, vector<8x512xf32> -> vector<8x512xf32>
    %192 = arith.addf %189, %191 : vector<8x512xf32>
    %193 = vector.extract_strided_slice %192 {offsets = [0, 0], sizes = [8, 384], strides = [1, 1]} : vector<8x512xf32> to vector<8x384xf32>
    %cst_62 = arith.constant 5.000000e-01 : f32
    %194 = vector.broadcast %cst_62 : f32 to vector<8x384xf32>
    %195 = arith.mulf %194, %193 : vector<8x384xf32>
    %196 = math.tanh %195 : vector<8x384xf32>
    %cst_63 = arith.constant 5.000000e-01 : f32
    %197 = vector.broadcast %cst_63 : f32 to vector<8x384xf32>
    %198 = arith.mulf %197, %196 : vector<8x384xf32>
    %cst_64 = arith.constant 5.000000e-01 : f32
    %199 = vector.broadcast %cst_64 : f32 to vector<8x384xf32>
    %200 = arith.addf %198, %199 : vector<8x384xf32>
    %201 = vector.extract_strided_slice %200 {offsets = [0, 0], sizes = [8, 128], strides = [1, 1]} : vector<8x384xf32> to vector<8x128xf32>
    %202 = vector.extract_strided_slice %200 {offsets = [0, 128], sizes = [8, 128], strides = [1, 1]} : vector<8x384xf32> to vector<8x128xf32>
    %203 = vector.extract_strided_slice %200 {offsets = [0, 256], sizes = [8, 128], strides = [1, 1]} : vector<8x384xf32> to vector<8x128xf32>
    %204 = vector.extract_strided_slice %192 {offsets = [0, 384], sizes = [8, 128], strides = [1, 1]} : vector<8x512xf32> to vector<8x128xf32>
    %205 = math.tanh %204 : vector<8x128xf32>
    %206 = arith.mulf %202, %186 : vector<8x128xf32>
    %207 = arith.mulf %201, %205 : vector<8x128xf32>
    %208 = arith.addf %206, %207 : vector<8x128xf32>
    %209 = math.tanh %208 : vector<8x128xf32>
    %210 = arith.mulf %203, %209 : vector<8x128xf32>
    %c64 = arith.constant 64 : index
    %c0_65 = arith.constant 0 : index
    %211 = vector.load %arg9[%c64, %c0_65] : memref<128x512xf32, #tpu.memory_space<vmem>>, vector<8x512xf32>
    %212 = arith.truncf %210 : vector<8x128xf32> to vector<8x128xbf16>
    %cst_66 = arith.constant dense<0.000000e+00> : vector<8x512xf32>
    %213 = tpu.matmul %212, %32, %cst_66 {dimension_numbers = #tpu.dot_dimension_numbers<[1], [0], [0], [1], [0, 0, 1, 1], [], []>} : vector<8x128xbf16>, vector<128x512xbf16>, vector<8x512xf32> -> vector<8x512xf32>
    %214 = arith.addf %211, %213 : vector<8x512xf32>
    %215 = vector.extract_strided_slice %214 {offsets = [0, 0], sizes = [8, 384], strides = [1, 1]} : vector<8x512xf32> to vector<8x384xf32>
    %cst_67 = arith.constant 5.000000e-01 : f32
    %216 = vector.broadcast %cst_67 : f32 to vector<8x384xf32>
    %217 = arith.mulf %216, %215 : vector<8x384xf32>
    %218 = math.tanh %217 : vector<8x384xf32>
    %cst_68 = arith.constant 5.000000e-01 : f32
    %219 = vector.broadcast %cst_68 : f32 to vector<8x384xf32>
    %220 = arith.mulf %219, %218 : vector<8x384xf32>
    %cst_69 = arith.constant 5.000000e-01 : f32
    %221 = vector.broadcast %cst_69 : f32 to vector<8x384xf32>
    %222 = arith.addf %220, %221 : vector<8x384xf32>
    %223 = vector.extract_strided_slice %222 {offsets = [0, 0], sizes = [8, 128], strides = [1, 1]} : vector<8x384xf32> to vector<8x128xf32>
    %224 = vector.extract_strided_slice %222 {offsets = [0, 128], sizes = [8, 128], strides = [1, 1]} : vector<8x384xf32> to vector<8x128xf32>
    %225 = vector.extract_strided_slice %222 {offsets = [0, 256], sizes = [8, 128], strides = [1, 1]} : vector<8x384xf32> to vector<8x128xf32>
    %226 = vector.extract_strided_slice %214 {offsets = [0, 384], sizes = [8, 128], strides = [1, 1]} : vector<8x512xf32> to vector<8x128xf32>
    %227 = math.tanh %226 : vector<8x128xf32>
    %228 = arith.mulf %224, %208 : vector<8x128xf32>
    %229 = arith.mulf %223, %227 : vector<8x128xf32>
    %230 = arith.addf %228, %229 : vector<8x128xf32>
    %231 = math.tanh %230 : vector<8x128xf32>
    %232 = arith.mulf %225, %231 : vector<8x128xf32>
    %c72 = arith.constant 72 : index
    %c0_70 = arith.constant 0 : index
    %233 = vector.load %arg9[%c72, %c0_70] : memref<128x512xf32, #tpu.memory_space<vmem>>, vector<8x512xf32>
    %234 = arith.truncf %232 : vector<8x128xf32> to vector<8x128xbf16>
    %cst_71 = arith.constant dense<0.000000e+00> : vector<8x512xf32>
    %235 = tpu.matmul %234, %32, %cst_71 {dimension_numbers = #tpu.dot_dimension_numbers<[1], [0], [0], [1], [0, 0, 1, 1], [], []>} : vector<8x128xbf16>, vector<128x512xbf16>, vector<8x512xf32> -> vector<8x512xf32>
    %236 = arith.addf %233, %235 : vector<8x512xf32>
    %237 = vector.extract_strided_slice %236 {offsets = [0, 0], sizes = [8, 384], strides = [1, 1]} : vector<8x512xf32> to vector<8x384xf32>
    %cst_72 = arith.constant 5.000000e-01 : f32
    %238 = vector.broadcast %cst_72 : f32 to vector<8x384xf32>
    %239 = arith.mulf %238, %237 : vector<8x384xf32>
    %240 = math.tanh %239 : vector<8x384xf32>
    %cst_73 = arith.constant 5.000000e-01 : f32
    %241 = vector.broadcast %cst_73 : f32 to vector<8x384xf32>
    %242 = arith.mulf %241, %240 : vector<8x384xf32>
    %cst_74 = arith.constant 5.000000e-01 : f32
    %243 = vector.broadcast %cst_74 : f32 to vector<8x384xf32>
    %244 = arith.addf %242, %243 : vector<8x384xf32>
    %245 = vector.extract_strided_slice %244 {offsets = [0, 0], sizes = [8, 128], strides = [1, 1]} : vector<8x384xf32> to vector<8x128xf32>
    %246 = vector.extract_strided_slice %244 {offsets = [0, 128], sizes = [8, 128], strides = [1, 1]} : vector<8x384xf32> to vector<8x128xf32>
    %247 = vector.extract_strided_slice %244 {offsets = [0, 256], sizes = [8, 128], strides = [1, 1]} : vector<8x384xf32> to vector<8x128xf32>
    %248 = vector.extract_strided_slice %236 {offsets = [0, 384], sizes = [8, 128], strides = [1, 1]} : vector<8x512xf32> to vector<8x128xf32>
    %249 = math.tanh %248 : vector<8x128xf32>
    %250 = arith.mulf %246, %230 : vector<8x128xf32>
    %251 = arith.mulf %245, %249 : vector<8x128xf32>
    %252 = arith.addf %250, %251 : vector<8x128xf32>
    %253 = math.tanh %252 : vector<8x128xf32>
    %254 = arith.mulf %247, %253 : vector<8x128xf32>
    %c80 = arith.constant 80 : index
    %c0_75 = arith.constant 0 : index
    %255 = vector.load %arg9[%c80, %c0_75] : memref<128x512xf32, #tpu.memory_space<vmem>>, vector<8x512xf32>
    %256 = arith.truncf %254 : vector<8x128xf32> to vector<8x128xbf16>
    %cst_76 = arith.constant dense<0.000000e+00> : vector<8x512xf32>
    %257 = tpu.matmul %256, %32, %cst_76 {dimension_numbers = #tpu.dot_dimension_numbers<[1], [0], [0], [1], [0, 0, 1, 1], [], []>} : vector<8x128xbf16>, vector<128x512xbf16>, vector<8x512xf32> -> vector<8x512xf32>
    %258 = arith.addf %255, %257 : vector<8x512xf32>
    %259 = vector.extract_strided_slice %258 {offsets = [0, 0], sizes = [8, 384], strides = [1, 1]} : vector<8x512xf32> to vector<8x384xf32>
    %cst_77 = arith.constant 5.000000e-01 : f32
    %260 = vector.broadcast %cst_77 : f32 to vector<8x384xf32>
    %261 = arith.mulf %260, %259 : vector<8x384xf32>
    %262 = math.tanh %261 : vector<8x384xf32>
    %cst_78 = arith.constant 5.000000e-01 : f32
    %263 = vector.broadcast %cst_78 : f32 to vector<8x384xf32>
    %264 = arith.mulf %263, %262 : vector<8x384xf32>
    %cst_79 = arith.constant 5.000000e-01 : f32
    %265 = vector.broadcast %cst_79 : f32 to vector<8x384xf32>
    %266 = arith.addf %264, %265 : vector<8x384xf32>
    %267 = vector.extract_strided_slice %266 {offsets = [0, 0], sizes = [8, 128], strides = [1, 1]} : vector<8x384xf32> to vector<8x128xf32>
    %268 = vector.extract_strided_slice %266 {offsets = [0, 128], sizes = [8, 128], strides = [1, 1]} : vector<8x384xf32> to vector<8x128xf32>
    %269 = vector.extract_strided_slice %266 {offsets = [0, 256], sizes = [8, 128], strides = [1, 1]} : vector<8x384xf32> to vector<8x128xf32>
    %270 = vector.extract_strided_slice %258 {offsets = [0, 384], sizes = [8, 128], strides = [1, 1]} : vector<8x512xf32> to vector<8x128xf32>
    %271 = math.tanh %270 : vector<8x128xf32>
    %272 = arith.mulf %268, %252 : vector<8x128xf32>
    %273 = arith.mulf %267, %271 : vector<8x128xf32>
    %274 = arith.addf %272, %273 : vector<8x128xf32>
    %275 = math.tanh %274 : vector<8x128xf32>
    %276 = arith.mulf %269, %275 : vector<8x128xf32>
    %c88 = arith.constant 88 : index
    %c0_80 = arith.constant 0 : index
    %277 = vector.load %arg9[%c88, %c0_80] : memref<128x512xf32, #tpu.memory_space<vmem>>, vector<8x512xf32>
    %278 = arith.truncf %276 : vector<8x128xf32> to vector<8x128xbf16>
    %cst_81 = arith.constant dense<0.000000e+00> : vector<8x512xf32>
    %279 = tpu.matmul %278, %32, %cst_81 {dimension_numbers = #tpu.dot_dimension_numbers<[1], [0], [0], [1], [0, 0, 1, 1], [], []>} : vector<8x128xbf16>, vector<128x512xbf16>, vector<8x512xf32> -> vector<8x512xf32>
    %280 = arith.addf %277, %279 : vector<8x512xf32>
    %281 = vector.extract_strided_slice %280 {offsets = [0, 0], sizes = [8, 384], strides = [1, 1]} : vector<8x512xf32> to vector<8x384xf32>
    %cst_82 = arith.constant 5.000000e-01 : f32
    %282 = vector.broadcast %cst_82 : f32 to vector<8x384xf32>
    %283 = arith.mulf %282, %281 : vector<8x384xf32>
    %284 = math.tanh %283 : vector<8x384xf32>
    %cst_83 = arith.constant 5.000000e-01 : f32
    %285 = vector.broadcast %cst_83 : f32 to vector<8x384xf32>
    %286 = arith.mulf %285, %284 : vector<8x384xf32>
    %cst_84 = arith.constant 5.000000e-01 : f32
    %287 = vector.broadcast %cst_84 : f32 to vector<8x384xf32>
    %288 = arith.addf %286, %287 : vector<8x384xf32>
    %289 = vector.extract_strided_slice %288 {offsets = [0, 0], sizes = [8, 128], strides = [1, 1]} : vector<8x384xf32> to vector<8x128xf32>
    %290 = vector.extract_strided_slice %288 {offsets = [0, 128], sizes = [8, 128], strides = [1, 1]} : vector<8x384xf32> to vector<8x128xf32>
    %291 = vector.extract_strided_slice %288 {offsets = [0, 256], sizes = [8, 128], strides = [1, 1]} : vector<8x384xf32> to vector<8x128xf32>
    %292 = vector.extract_strided_slice %280 {offsets = [0, 384], sizes = [8, 128], strides = [1, 1]} : vector<8x512xf32> to vector<8x128xf32>
    %293 = math.tanh %292 : vector<8x128xf32>
    %294 = arith.mulf %290, %274 : vector<8x128xf32>
    %295 = arith.mulf %289, %293 : vector<8x128xf32>
    %296 = arith.addf %294, %295 : vector<8x128xf32>
    %297 = math.tanh %296 : vector<8x128xf32>
    %298 = arith.mulf %291, %297 : vector<8x128xf32>
    %c96 = arith.constant 96 : index
    %c0_85 = arith.constant 0 : index
    %299 = vector.load %arg9[%c96, %c0_85] : memref<128x512xf32, #tpu.memory_space<vmem>>, vector<8x512xf32>
    %300 = arith.truncf %298 : vector<8x128xf32> to vector<8x128xbf16>
    %cst_86 = arith.constant dense<0.000000e+00> : vector<8x512xf32>
    %301 = tpu.matmul %300, %32, %cst_86 {dimension_numbers = #tpu.dot_dimension_numbers<[1], [0], [0], [1], [0, 0, 1, 1], [], []>} : vector<8x128xbf16>, vector<128x512xbf16>, vector<8x512xf32> -> vector<8x512xf32>
    %302 = arith.addf %299, %301 : vector<8x512xf32>
    %303 = vector.extract_strided_slice %302 {offsets = [0, 0], sizes = [8, 384], strides = [1, 1]} : vector<8x512xf32> to vector<8x384xf32>
    %cst_87 = arith.constant 5.000000e-01 : f32
    %304 = vector.broadcast %cst_87 : f32 to vector<8x384xf32>
    %305 = arith.mulf %304, %303 : vector<8x384xf32>
    %306 = math.tanh %305 : vector<8x384xf32>
    %cst_88 = arith.constant 5.000000e-01 : f32
    %307 = vector.broadcast %cst_88 : f32 to vector<8x384xf32>
    %308 = arith.mulf %307, %306 : vector<8x384xf32>
    %cst_89 = arith.constant 5.000000e-01 : f32
    %309 = vector.broadcast %cst_89 : f32 to vector<8x384xf32>
    %310 = arith.addf %308, %309 : vector<8x384xf32>
    %311 = vector.extract_strided_slice %310 {offsets = [0, 0], sizes = [8, 128], strides = [1, 1]} : vector<8x384xf32> to vector<8x128xf32>
    %312 = vector.extract_strided_slice %310 {offsets = [0, 128], sizes = [8, 128], strides = [1, 1]} : vector<8x384xf32> to vector<8x128xf32>
    %313 = vector.extract_strided_slice %310 {offsets = [0, 256], sizes = [8, 128], strides = [1, 1]} : vector<8x384xf32> to vector<8x128xf32>
    %314 = vector.extract_strided_slice %302 {offsets = [0, 384], sizes = [8, 128], strides = [1, 1]} : vector<8x512xf32> to vector<8x128xf32>
    %315 = math.tanh %314 : vector<8x128xf32>
    %316 = arith.mulf %312, %296 : vector<8x128xf32>
    %317 = arith.mulf %311, %315 : vector<8x128xf32>
    %318 = arith.addf %316, %317 : vector<8x128xf32>
    %319 = math.tanh %318 : vector<8x128xf32>
    %320 = arith.mulf %313, %319 : vector<8x128xf32>
    %c104 = arith.constant 104 : index
    %c0_90 = arith.constant 0 : index
    %321 = vector.load %arg9[%c104, %c0_90] : memref<128x512xf32, #tpu.memory_space<vmem>>, vector<8x512xf32>
    %322 = arith.truncf %320 : vector<8x128xf32> to vector<8x128xbf16>
    %cst_91 = arith.constant dense<0.000000e+00> : vector<8x512xf32>
    %323 = tpu.matmul %322, %32, %cst_91 {dimension_numbers = #tpu.dot_dimension_numbers<[1], [0], [0], [1], [0, 0, 1, 1], [], []>} : vector<8x128xbf16>, vector<128x512xbf16>, vector<8x512xf32> -> vector<8x512xf32>
    %324 = arith.addf %321, %323 : vector<8x512xf32>
    %325 = vector.extract_strided_slice %324 {offsets = [0, 0], sizes = [8, 384], strides = [1, 1]} : vector<8x512xf32> to vector<8x384xf32>
    %cst_92 = arith.constant 5.000000e-01 : f32
    %326 = vector.broadcast %cst_92 : f32 to vector<8x384xf32>
    %327 = arith.mulf %326, %325 : vector<8x384xf32>
    %328 = math.tanh %327 : vector<8x384xf32>
    %cst_93 = arith.constant 5.000000e-01 : f32
    %329 = vector.broadcast %cst_93 : f32 to vector<8x384xf32>
    %330 = arith.mulf %329, %328 : vector<8x384xf32>
    %cst_94 = arith.constant 5.000000e-01 : f32
    %331 = vector.broadcast %cst_94 : f32 to vector<8x384xf32>
    %332 = arith.addf %330, %331 : vector<8x384xf32>
    %333 = vector.extract_strided_slice %332 {offsets = [0, 0], sizes = [8, 128], strides = [1, 1]} : vector<8x384xf32> to vector<8x128xf32>
    %334 = vector.extract_strided_slice %332 {offsets = [0, 128], sizes = [8, 128], strides = [1, 1]} : vector<8x384xf32> to vector<8x128xf32>
    %335 = vector.extract_strided_slice %332 {offsets = [0, 256], sizes = [8, 128], strides = [1, 1]} : vector<8x384xf32> to vector<8x128xf32>
    %336 = vector.extract_strided_slice %324 {offsets = [0, 384], sizes = [8, 128], strides = [1, 1]} : vector<8x512xf32> to vector<8x128xf32>
    %337 = math.tanh %336 : vector<8x128xf32>
    %338 = arith.mulf %334, %318 : vector<8x128xf32>
    %339 = arith.mulf %333, %337 : vector<8x128xf32>
    %340 = arith.addf %338, %339 : vector<8x128xf32>
    %341 = math.tanh %340 : vector<8x128xf32>
    %342 = arith.mulf %335, %341 : vector<8x128xf32>
    %c112 = arith.constant 112 : index
    %c0_95 = arith.constant 0 : index
    %343 = vector.load %arg9[%c112, %c0_95] : memref<128x512xf32, #tpu.memory_space<vmem>>, vector<8x512xf32>
    %344 = arith.truncf %342 : vector<8x128xf32> to vector<8x128xbf16>
    %cst_96 = arith.constant dense<0.000000e+00> : vector<8x512xf32>
    %345 = tpu.matmul %344, %32, %cst_96 {dimension_numbers = #tpu.dot_dimension_numbers<[1], [0], [0], [1], [0, 0, 1, 1], [], []>} : vector<8x128xbf16>, vector<128x512xbf16>, vector<8x512xf32> -> vector<8x512xf32>
    %346 = arith.addf %343, %345 : vector<8x512xf32>
    %347 = vector.extract_strided_slice %346 {offsets = [0, 0], sizes = [8, 384], strides = [1, 1]} : vector<8x512xf32> to vector<8x384xf32>
    %cst_97 = arith.constant 5.000000e-01 : f32
    %348 = vector.broadcast %cst_97 : f32 to vector<8x384xf32>
    %349 = arith.mulf %348, %347 : vector<8x384xf32>
    %350 = math.tanh %349 : vector<8x384xf32>
    %cst_98 = arith.constant 5.000000e-01 : f32
    %351 = vector.broadcast %cst_98 : f32 to vector<8x384xf32>
    %352 = arith.mulf %351, %350 : vector<8x384xf32>
    %cst_99 = arith.constant 5.000000e-01 : f32
    %353 = vector.broadcast %cst_99 : f32 to vector<8x384xf32>
    %354 = arith.addf %352, %353 : vector<8x384xf32>
    %355 = vector.extract_strided_slice %354 {offsets = [0, 0], sizes = [8, 128], strides = [1, 1]} : vector<8x384xf32> to vector<8x128xf32>
    %356 = vector.extract_strided_slice %354 {offsets = [0, 128], sizes = [8, 128], strides = [1, 1]} : vector<8x384xf32> to vector<8x128xf32>
    %357 = vector.extract_strided_slice %354 {offsets = [0, 256], sizes = [8, 128], strides = [1, 1]} : vector<8x384xf32> to vector<8x128xf32>
    %358 = vector.extract_strided_slice %346 {offsets = [0, 384], sizes = [8, 128], strides = [1, 1]} : vector<8x512xf32> to vector<8x128xf32>
    %359 = math.tanh %358 : vector<8x128xf32>
    %360 = arith.mulf %356, %340 : vector<8x128xf32>
    %361 = arith.mulf %355, %359 : vector<8x128xf32>
    %362 = arith.addf %360, %361 : vector<8x128xf32>
    %363 = math.tanh %362 : vector<8x128xf32>
    %364 = arith.mulf %357, %363 : vector<8x128xf32>
    %c120 = arith.constant 120 : index
    %c0_100 = arith.constant 0 : index
    %365 = vector.load %arg9[%c120, %c0_100] : memref<128x512xf32, #tpu.memory_space<vmem>>, vector<8x512xf32>
    %366 = arith.truncf %364 : vector<8x128xf32> to vector<8x128xbf16>
    %cst_101 = arith.constant dense<0.000000e+00> : vector<8x512xf32>
    %367 = tpu.matmul %366, %32, %cst_101 {dimension_numbers = #tpu.dot_dimension_numbers<[1], [0], [0], [1], [0, 0, 1, 1], [], []>} : vector<8x128xbf16>, vector<128x512xbf16>, vector<8x512xf32> -> vector<8x512xf32>
    %368 = arith.addf %365, %367 : vector<8x512xf32>
    %369 = vector.extract_strided_slice %368 {offsets = [0, 0], sizes = [8, 384], strides = [1, 1]} : vector<8x512xf32> to vector<8x384xf32>
    %cst_102 = arith.constant 5.000000e-01 : f32
    %370 = vector.broadcast %cst_102 : f32 to vector<8x384xf32>
    %371 = arith.mulf %370, %369 : vector<8x384xf32>
    %372 = math.tanh %371 : vector<8x384xf32>
    %cst_103 = arith.constant 5.000000e-01 : f32
    %373 = vector.broadcast %cst_103 : f32 to vector<8x384xf32>
    %374 = arith.mulf %373, %372 : vector<8x384xf32>
    %cst_104 = arith.constant 5.000000e-01 : f32
    %375 = vector.broadcast %cst_104 : f32 to vector<8x384xf32>
    %376 = arith.addf %374, %375 : vector<8x384xf32>
    %377 = vector.extract_strided_slice %376 {offsets = [0, 0], sizes = [8, 128], strides = [1, 1]} : vector<8x384xf32> to vector<8x128xf32>
    %378 = vector.extract_strided_slice %376 {offsets = [0, 128], sizes = [8, 128], strides = [1, 1]} : vector<8x384xf32> to vector<8x128xf32>
    %379 = vector.extract_strided_slice %376 {offsets = [0, 256], sizes = [8, 128], strides = [1, 1]} : vector<8x384xf32> to vector<8x128xf32>
    %380 = vector.extract_strided_slice %368 {offsets = [0, 384], sizes = [8, 128], strides = [1, 1]} : vector<8x512xf32> to vector<8x128xf32>
    %381 = math.tanh %380 : vector<8x128xf32>
    %382 = arith.mulf %378, %362 : vector<8x128xf32>
    %383 = arith.mulf %377, %381 : vector<8x128xf32>
    %384 = arith.addf %382, %383 : vector<8x128xf32>
    %385 = math.tanh %384 : vector<8x128xf32>
    %386 = arith.mulf %379, %385 : vector<8x128xf32>
    %387 = vector.extract_strided_slice %25 {offsets = [120, 0], sizes = [8, 32], strides = [1, 1]} : vector<128x32xf32> to vector<8x32xf32>
    %388 = arith.truncf %387 : vector<8x32xf32> to vector<8x32xbf16>
    %c0_105 = arith.constant 0 : index
    %c0_106 = arith.constant 0 : index
    %389 = vector.load %arg5[%c0_105, %c0_106] : memref<32x384xbf16, #tpu.memory_space<vmem>>, vector<32x384xbf16>
    %cst_107 = arith.constant dense<0.000000e+00> : vector<8x384xf32>
    %390 = tpu.matmul %388, %389, %cst_107 {dimension_numbers = #tpu.dot_dimension_numbers<[1], [0], [0], [1], [0, 0, 1, 1], [], []>} : vector<8x32xbf16>, vector<32x384xbf16>, vector<8x384xf32> -> vector<8x384xf32>
    %391 = vector.broadcast %2 : vector<1x384xf32> to vector<8x384xf32>
    %392 = arith.addf %390, %391 : vector<8x384xf32>
    %393 = vector.extract_strided_slice %392 {offsets = [0, 0], sizes = [8, 256], strides = [1, 1]} : vector<8x384xf32> to vector<8x256xf32>
    %cst_108 = arith.constant 5.000000e-01 : f32
    %394 = vector.broadcast %cst_108 : f32 to vector<8x256xf32>
    %395 = arith.mulf %394, %393 : vector<8x256xf32>
    %396 = math.tanh %395 : vector<8x256xf32>
    %cst_109 = arith.constant 5.000000e-01 : f32
    %397 = vector.broadcast %cst_109 : f32 to vector<8x256xf32>
    %398 = arith.mulf %397, %396 : vector<8x256xf32>
    %cst_110 = arith.constant 5.000000e-01 : f32
    %399 = vector.broadcast %cst_110 : f32 to vector<8x256xf32>
    %400 = arith.addf %398, %399 : vector<8x256xf32>
    %401 = vector.extract_strided_slice %400 {offsets = [0, 0], sizes = [8, 128], strides = [1, 1]} : vector<8x256xf32> to vector<8x128xf32>
    %402 = vector.extract_strided_slice %400 {offsets = [0, 128], sizes = [8, 128], strides = [1, 1]} : vector<8x256xf32> to vector<8x128xf32>
    %403 = vector.extract_strided_slice %392 {offsets = [0, 256], sizes = [8, 128], strides = [1, 1]} : vector<8x384xf32> to vector<8x128xf32>
    %404 = math.tanh %403 : vector<8x128xf32>
    %405 = arith.mulf %401, %404 : vector<8x128xf32>
    %406 = math.tanh %405 : vector<8x128xf32>
    %407 = arith.mulf %402, %406 : vector<8x128xf32>
    %408 = arith.truncf %386 : vector<8x128xf32> to vector<8x128xbf16>
    %c0_111 = arith.constant 0 : index
    %c0_112 = arith.constant 0 : index
    %409 = vector.load %arg6[%c0_111, %c0_112] : memref<256x64xbf16, #tpu.memory_space<vmem>>, vector<128x64xbf16>
    %cst_113 = arith.constant dense<0.000000e+00> : vector<8x64xf32>
    %410 = tpu.matmul %408, %409, %cst_113 {dimension_numbers = #tpu.dot_dimension_numbers<[1], [0], [0], [1], [0, 0, 1, 1], [], []>} : vector<8x128xbf16>, vector<128x64xbf16>, vector<8x64xf32> -> vector<8x64xf32>
    %411 = arith.truncf %407 : vector<8x128xf32> to vector<8x128xbf16>
    %c128_114 = arith.constant 128 : index
    %c0_115 = arith.constant 0 : index
    %412 = vector.load %arg6[%c128_114, %c0_115] : memref<256x64xbf16, #tpu.memory_space<vmem>>, vector<128x64xbf16>
    %cst_116 = arith.constant dense<0.000000e+00> : vector<8x64xf32>
    %413 = tpu.matmul %411, %412, %cst_116 {dimension_numbers = #tpu.dot_dimension_numbers<[1], [0], [0], [1], [0, 0, 1, 1], [], []>} : vector<8x128xbf16>, vector<128x64xbf16>, vector<8x64xf32> -> vector<8x64xf32>
    %414 = arith.addf %410, %413 : vector<8x64xf32>
    %415 = vector.broadcast %3 : vector<1x64xf32> to vector<8x64xf32>
    %416 = arith.addf %414, %415 : vector<8x64xf32>
    %cst_117 = arith.constant 0.000000e+00 : f32
    %417 = vector.broadcast %cst_117 : f32 to vector<8x64xf32>
    %418 = arith.maximumf %416, %417 : vector<8x64xf32>
    %419 = arith.truncf %418 : vector<8x64xf32> to vector<8x64xbf16>
    %c0_118 = arith.constant 0 : index
    %c0_119 = arith.constant 0 : index
    %420 = vector.load %arg7[%c0_118, %c0_119] : memref<64x4xbf16, #tpu.memory_space<vmem>>, vector<64x4xbf16>
    %cst_120 = arith.constant dense<0.000000e+00> : vector<8x4xf32>
    %421 = tpu.matmul %419, %420, %cst_120 {dimension_numbers = #tpu.dot_dimension_numbers<[1], [0], [0], [1], [0, 0, 1, 1], [], []>} : vector<8x64xbf16>, vector<64x4xbf16>, vector<8x4xf32> -> vector<8x4xf32>
    %422 = vector.broadcast %4 : vector<1x4xf32> to vector<8x4xf32>
    %423 = arith.addf %421, %422 : vector<8x4xf32>
    %c0_121 = arith.constant 0 : index
    %c0_122 = arith.constant 0 : index
    %424 = vector.load %arg8[%c0_121, %c0_122] : memref<8x4xf32, #tpu.memory_space<vmem>>, vector<8x4xf32>
    tpu.vector_store %arg8[%c0_121, %c0_122], %423 {strides = array<i32>} : memref<8x4xf32, #tpu.memory_space<vmem>>, vector<8x4xf32>,
    return
  }
}

</mosaic_0001>

<llo_original>
// kernel: cnn_bilstm_forward.1
$region0: #{cnn_bilstm_forward.1}
  #allocation0 [shape = 'u32[]', space=smem, size = 0x4, offset = 0x4, fixed_abs, tag = 'smem constant byte address 0x4 - core index']
  #allocation1 [shape = 'u32[144,128]{1,0:T(1,128)}', space=vmem, size = 0x12000, scoped, tag = 'internal scratch']
  #allocation2 [shape = 'f32[128,512]{1,0:T(8,128)}', space=vmem, size = 0x40000, scoped, tag = 'scratch operand']
  %s0 = inlined_call_operand.vmem [shape: f32[128,3], index: 0, kind: input, shape index: {}]
  %s1 = inlined_call_operand.vmem [shape: f32[3,32], index: 1, kind: input, shape index: {}]
  %s2 = inlined_call_operand.vmem [shape: f32[1,1280], index: 2, kind: input, shape index: {}]
  %s3 = inlined_call_operand.vmem [shape: bf16[32,512], index: 3, kind: input, shape index: {}]
  %s4 = inlined_call_operand.vmem [shape: bf16[128,512], index: 4, kind: input, shape index: {}]
  %s5 = inlined_call_operand.vmem [shape: bf16[32,384], index: 5, kind: input, shape index: {}]
  %s6 = inlined_call_operand.vmem [shape: bf16[256,64], index: 6, kind: input, shape index: {}]
  %s7 = inlined_call_operand.vmem [shape: bf16[64,4], index: 7, kind: input, shape index: {}]
  %s8 = inlined_call_operand.vmem [shape: f32[8,4], index: 8, kind: output, shape index: {}]
  %s9 = sld [smem:[#allocation0]]
  $region42: #{cnn_bilstm_forward.1} parent=0
    _
  %s11 = ssub.s32 1, %s9
  %s12 = scalar_select 0, %s11, %s9
  // Predicated region
  $region2: #{cnn_bilstm_forward.1} parent=0 // pred_check
    _
  $region3: #{cnn_bilstm_forward.1} parent=0 // pred_check_branch
    %14 = sbr.rel (0) target = $region5
  $region4: #{cnn_bilstm_forward.1} parent=0 // pred_region
    _
  $region5: #{cnn_bilstm_forward.1} parent=0 // pred_fallthru
    _
  // Predicated region
  $region6: #{cnn_bilstm_forward.1} parent=0 // pred_check
    _
  $region7: #{cnn_bilstm_forward.1} parent=0 // pred_check_branch
    %16 = sbr.rel (0) target = $region9
  $region8: #{cnn_bilstm_forward.1} parent=0 // pred_region
    _
  $region9: #{cnn_bilstm_forward.1} parent=0 // pred_fallthru
    _
  // Predicated region
  $region10: #{cnn_bilstm_forward.1} parent=0 // pred_check
    _
  $region11: #{cnn_bilstm_forward.1} parent=0 // pred_check_branch
    %18 = sbr.rel (0) target = $region13
  $region12: #{cnn_bilstm_forward.1} parent=0 // pred_region
    _
  $region13: #{cnn_bilstm_forward.1} parent=0 // pred_fallthru
    _
  // Predicated region
  $region14: #{cnn_bilstm_forward.1} parent=0 // pred_check
    _
  $region15: #{cnn_bilstm_forward.1} parent=0 // pred_check_branch
    %20 = sbr.rel (0) target = $region17
  $region16: #{cnn_bilstm_forward.1} parent=0 // pred_region
    _
  $region17: #{cnn_bilstm_forward.1} parent=0 // pred_fallthru
    _
  // Predicated region
  $region18: #{cnn_bilstm_forward.1} parent=0 // pred_check
    _
  $region19: #{cnn_bilstm_forward.1} parent=0 // pred_check_branch
    %22 = sbr.rel (0) target = $region21
  $region20: #{cnn_bilstm_forward.1} parent=0 // pred_region
    _
  $region21: #{cnn_bilstm_forward.1} parent=0 // pred_fallthru
    _
  // Predicated region
  $region22: #{cnn_bilstm_forward.1} parent=0 // pred_check
    _
  $region23: #{cnn_bilstm_forward.1} parent=0 // pred_check_branch
    %24 = sbr.rel (0) target = $region25
  $region24: #{cnn_bilstm_forward.1} parent=0 // pred_region
    _
  $region25: #{cnn_bilstm_forward.1} parent=0 // pred_fallthru
    _
  // Predicated region
  $region26: #{cnn_bilstm_forward.1} parent=0 // pred_check
    _
  $region27: #{cnn_bilstm_forward.1} parent=0 // pred_check_branch
    %26 = sbr.rel (0) target = $region29
  $region28: #{cnn_bilstm_forward.1} parent=0 // pred_region
    _
  $region29: #{cnn_bilstm_forward.1} parent=0 // pred_fallthru
    _
  // Predicated region
  $region30: #{cnn_bilstm_forward.1} parent=0 // pred_check
    _
  $region31: #{cnn_bilstm_forward.1} parent=0 // pred_check_branch
    %28 = sbr.rel (0) target = $region33
  $region32: #{cnn_bilstm_forward.1} parent=0 // pred_region
    _
  $region33: #{cnn_bilstm_forward.1} parent=0 // pred_fallthru
    _
  %v30 = vld [vmem:[%s2] sm:$0x1]
  %v31 = vld [vmem:[%s2 + $0x1] sm:$0xf]
  %v32 = vld [vmem:[%s2 + $0x5] sm:$0x7]
  %v33 = vld [vmem:[%s2 + $0x8] sm:$0x1]
  %v34 = vld [vmem:[%s2 + $0x9] sm:$0x1]
  %v35 = vld [vmem:[%s0] sm:$0xff]
  %v36 = vld [vmem:[%s0 + $0x8] sm:$0xff]
  %v37 = vld [vmem:[%s0 + $0x10] sm:$0xff]
  %v38 = vld [vmem:[%s0 + $0x18] sm:$0xff]
  %v39 = vld [vmem:[%s0 + $0x20] sm:$0xff]
  %v40 = vld [vmem:[%s0 + $0x28] sm:$0xff]
  %v41 = vld [vmem:[%s0 + $0x30] sm:$0xff]
  %v42 = vld [vmem:[%s0 + $0x38] sm:$0xff]
  %v43 = vld [vmem:[%s0 + $0x40] sm:$0xff]
  %v44 = vld [vmem:[%s0 + $0x48] sm:$0xff]
  %v45 = vld [vmem:[%s0 + $0x50] sm:$0xff]
  %v46 = vld [vmem:[%s0 + $0x58] sm:$0xff]
  %v47 = vld [vmem:[%s0 + $0x60] sm:$0xff]
  %v48 = vld [vmem:[%s0 + $0x68] sm:$0xff]
  %v49 = vld [vmem:[%s0 + $0x70] sm:$0xff]
  %v50 = vld [vmem:[%s0 + $0x78] sm:$0xff]
  %v51 = vld [vmem:[%s1] sm:$0x1]
  %53 = vset.pattern.permute.xlu0 0
  %54 = vperm.xlu0 %53, %v35
  %v55 = vpop.permute.xlu0 %54
  %58 = vset.pattern.permute.xlu0 0
  %59 = vperm.xlu0 %58, %v36
  %v60 = vpop.permute.xlu0 %59
  %63 = vset.pattern.permute.xlu0 0
  %64 = vperm.xlu0 %63, %v37
  %v65 = vpop.permute.xlu0 %64
  %68 = vset.pattern.permute.xlu0 0
  %69 = vperm.xlu0 %68, %v38
  %v70 = vpop.permute.xlu0 %69
  %73 = vset.pattern.permute.xlu0 0
  %74 = vperm.xlu0 %73, %v39
  %v75 = vpop.permute.xlu0 %74
  %78 = vset.pattern.permute.xlu0 0
  %79 = vperm.xlu0 %78, %v40
  %v80 = vpop.permute.xlu0 %79
  %83 = vset.pattern.permute.xlu0 0
  %84 = vperm.xlu0 %83, %v41
  %v85 = vpop.permute.xlu0 %84
  %88 = vset.pattern.permute.xlu0 0
  %89 = vperm.xlu0 %88, %v42
  %v90 = vpop.permute.xlu0 %89
  %93 = vset.pattern.permute.xlu0 0
  %94 = vperm.xlu0 %93, %v43
  %v95 = vpop.permute.xlu0 %94
  %98 = vset.pattern.permute.xlu0 0
  %99 = vperm.xlu0 %98, %v44
  %v100 = vpop.permute.xlu0 %99
  %103 = vset.pattern.permute.xlu0 0
  %104 = vperm.xlu0 %103, %v45
  %v105 = vpop.permute.xlu0 %104
  %108 = vset.pattern.permute.xlu0 0
  %109 = vperm.xlu0 %108, %v46
  %v110 = vpop.permute.xlu0 %109
  %113 = vset.pattern.permute.xlu0 0
  %114 = vperm.xlu0 %113, %v47
  %v115 = vpop.permute.xlu0 %114
  %118 = vset.pattern.permute.xlu0 0
  %119 = vperm.xlu0 %118, %v48
  %v120 = vpop.permute.xlu0 %119
  %123 = vset.pattern.permute.xlu0 0
  %124 = vperm.xlu0 %123, %v49
  %v125 = vpop.permute.xlu0 %124
  %128 = vset.pattern.permute.xlu0 0
  %129 = vperm.xlu0 %128, %v50
  %v130 = vpop.permute.xlu0 %129
  %v132 = vlaneseq
  %v133 = vshrl.u32 %v132, 7
  %v134 = vsub.s32 0, %v133
  %v135 = vrot.slane %v51, %v134
  %v136 = vmul.f32 %v55, %v135
  %v137 = vmul.f32 %v60, %v135
  %v138 = vmul.f32 %v65, %v135
  %v139 = vmul.f32 %v70, %v135
  %v140 = vmul.f32 %v75, %v135
  %v141 = vmul.f32 %v80, %v135
  %v142 = vmul.f32 %v85, %v135
  %v143 = vmul.f32 %v90, %v135
  %v144 = vmul.f32 %v95, %v135
  %v145 = vmul.f32 %v100, %v135
  %v146 = vmul.f32 %v105, %v135
  %v147 = vmul.f32 %v110, %v135
  %v148 = vmul.f32 %v115, %v135
  %v149 = vmul.f32 %v120, %v135
  %v150 = vmul.f32 %v125, %v135
  %v151 = vmul.f32 %v130, %v135
  %v152 = vld [vmem:[%s1 + $0x1] sm:$0x1]
  %153 = vset.pattern.permute.xlu0 1
  %154 = vperm.xlu0 %153, %v35
  %v155 = vpop.permute.xlu0 %154
  %157 = vset.pattern.permute.xlu0 1
  %158 = vperm.xlu0 %157, %v36
  %v159 = vpop.permute.xlu0 %158
  %161 = vset.pattern.permute.xlu0 1
  %162 = vperm.xlu0 %161, %v37
  %v163 = vpop.permute.xlu0 %162
  %165 = vset.pattern.permute.xlu0 1
  %166 = vperm.xlu0 %165, %v38
  %v167 = vpop.permute.xlu0 %166
  %169 = vset.pattern.permute.xlu0 1
  %170 = vperm.xlu0 %169, %v39
  %v171 = vpop.permute.xlu0 %170
  %173 = vset.pattern.permute.xlu0 1
  %174 = vperm.xlu0 %173, %v40
  %v175 = vpop.permute.xlu0 %174
  %177 = vset.pattern.permute.xlu0 1
  %178 = vperm.xlu0 %177, %v41
  %v179 = vpop.permute.xlu0 %178
  %181 = vset.pattern.permute.xlu0 1
  %182 = vperm.xlu0 %181, %v42
  %v183 = vpop.permute.xlu0 %182
  %185 = vset.pattern.permute.xlu0 1
  %186 = vperm.xlu0 %185, %v43
  %v187 = vpop.permute.xlu0 %186
  %189 = vset.pattern.permute.xlu0 1
  %190 = vperm.xlu0 %189, %v44
  %v191 = vpop.permute.xlu0 %190
  %193 = vset.pattern.permute.xlu0 1
  %194 = vperm.xlu0 %193, %v45
  %v195 = vpop.permute.xlu0 %194
  %197 = vset.pattern.permute.xlu0 1
  %198 = vperm.xlu0 %197, %v46
  %v199 = vpop.permute.xlu0 %198
  %201 = vset.pattern.permute.xlu0 1
  %202 = vperm.xlu0 %201, %v47
  %v203 = vpop.permute.xlu0 %202
  %205 = vset.pattern.permute.xlu0 1
  %206 = vperm.xlu0 %205, %v48
  %v207 = vpop.permute.xlu0 %206
  %209 = vset.pattern.permute.xlu0 1
  %210 = vperm.xlu0 %209, %v49
  %v211 = vpop.permute.xlu0 %210
  %213 = vset.pattern.permute.xlu0 1
  %214 = vperm.xlu0 %213, %v50
  %v215 = vpop.permute.xlu0 %214
  %v217 = vlaneseq
  %v218 = vshrl.u32 %v217, 7
  %v219 = vsub.s32 0, %v218
  %v220 = vrot.slane %v152, %v219
  %v221 = vmul.f32 %v155, %v220
  %v222 = vmul.f32 %v159, %v220
  %v223 = vmul.f32 %v163, %v220
  %v224 = vmul.f32 %v167, %v220
  %v225 = vmul.f32 %v171, %v220
  %v226 = vmul.f32 %v175, %v220
  %v227 = vmul.f32 %v179, %v220
  %v228 = vmul.f32 %v183, %v220
  %v229 = vmul.f32 %v187, %v220
  %v230 = vmul.f32 %v191, %v220
  %v231 = vmul.f32 %v195, %v220
  %v232 = vmul.f32 %v199, %v220
  %v233 = vmul.f32 %v203, %v220
  %v234 = vmul.f32 %v207, %v220
  %v235 = vmul.f32 %v211, %v220
  %v236 = vmul.f32 %v215, %v220
  %v237 = vadd.f32 %v136, %v221
  %v238 = vadd.f32 %v137, %v222
  %v239 = vadd.f32 %v138, %v223
  %v240 = vadd.f32 %v139, %v224
  %v241 = vadd.f32 %v140, %v225
  %v242 = vadd.f32 %v141, %v226
  %v243 = vadd.f32 %v142, %v227
  %v244 = vadd.f32 %v143, %v228
  %v245 = vadd.f32 %v144, %v229
  %v246 = vadd.f32 %v145, %v230
  %v247 = vadd.f32 %v146, %v231
  %v248 = vadd.f32 %v147, %v232
  %v249 = vadd.f32 %v148, %v233
  %v250 = vadd.f32 %v149, %v234
  %v251 = vadd.f32 %v150, %v235
  %v252 = vadd.f32 %v151, %v236
  %v253 = vld [vmem:[%s1 + $0x2] sm:$0x1]
  %254 = vset.pattern.permute.xlu0 2
  %255 = vperm.xlu0 %254, %v35
  %v256 = vpop.permute.xlu0 %255
  %258 = vset.pattern.permute.xlu0 2
  %259 = vperm.xlu0 %258, %v36
  %v260 = vpop.permute.xlu0 %259
  %262 = vset.pattern.permute.xlu0 2
  %263 = vperm.xlu0 %262, %v37
  %v264 = vpop.permute.xlu0 %263
  %266 = vset.pattern.permute.xlu0 2
  %267 = vperm.xlu0 %266, %v38
  %v268 = vpop.permute.xlu0 %267
  %270 = vset.pattern.permute.xlu0 2
  %271 = vperm.xlu0 %270, %v39
  %v272 = vpop.permute.xlu0 %271
  %274 = vset.pattern.permute.xlu0 2
  %275 = vperm.xlu0 %274, %v40
  %v276 = vpop.permute.xlu0 %275
  %278 = vset.pattern.permute.xlu0 2
  %279 = vperm.xlu0 %278, %v41
  %v280 = vpop.permute.xlu0 %279
  %282 = vset.pattern.permute.xlu0 2
  %283 = vperm.xlu0 %282, %v42
  %v284 = vpop.permute.xlu0 %283
  %286 = vset.pattern.permute.xlu0 2
  %287 = vperm.xlu0 %286, %v43
  %v288 = vpop.permute.xlu0 %287
  %290 = vset.pattern.permute.xlu0 2
  %291 = vperm.xlu0 %290, %v44
  %v292 = vpop.permute.xlu0 %291
  %294 = vset.pattern.permute.xlu0 2
  %295 = vperm.xlu0 %294, %v45
  %v296 = vpop.permute.xlu0 %295
  %298 = vset.pattern.permute.xlu0 2
  %299 = vperm.xlu0 %298, %v46
  %v300 = vpop.permute.xlu0 %299
  %302 = vset.pattern.permute.xlu0 2
  %303 = vperm.xlu0 %302, %v47
  %v304 = vpop.permute.xlu0 %303
  %306 = vset.pattern.permute.xlu0 2
  %307 = vperm.xlu0 %306, %v48
  %v308 = vpop.permute.xlu0 %307
  %310 = vset.pattern.permute.xlu0 2
  %311 = vperm.xlu0 %310, %v49
  %v312 = vpop.permute.xlu0 %311
  %314 = vset.pattern.permute.xlu0 2
  %315 = vperm.xlu0 %314, %v50
  %v316 = vpop.permute.xlu0 %315
  %v318 = vlaneseq
  %v319 = vshrl.u32 %v318, 7
  %v320 = vsub.s32 0, %v319
  %v321 = vrot.slane %v253, %v320
  %v322 = vmul.f32 %v256, %v321
  %v323 = vmul.f32 %v260, %v321
  %v324 = vmul.f32 %v264, %v321
  %v325 = vmul.f32 %v268, %v321
  %v326 = vmul.f32 %v272, %v321
  %v327 = vmul.f32 %v276, %v321
  %v328 = vmul.f32 %v280, %v321
  %v329 = vmul.f32 %v284, %v321
  %v330 = vmul.f32 %v288, %v321
  %v331 = vmul.f32 %v292, %v321
  %v332 = vmul.f32 %v296, %v321
  %v333 = vmul.f32 %v300, %v321
  %v334 = vmul.f32 %v304, %v321
  %v335 = vmul.f32 %v308, %v321
  %v336 = vmul.f32 %v312, %v321
  %v337 = vmul.f32 %v316, %v321
  %v338 = vadd.f32 %v237, %v322
  %v339 = vadd.f32 %v238, %v323
  %v340 = vadd.f32 %v239, %v324
  %v341 = vadd.f32 %v240, %v325
  %v342 = vadd.f32 %v241, %v326
  %v343 = vadd.f32 %v242, %v327
  %v344 = vadd.f32 %v243, %v328
  %v345 = vadd.f32 %v244, %v329
  %v346 = vadd.f32 %v245, %v330
  %v347 = vadd.f32 %v246, %v331
  %v348 = vadd.f32 %v247, %v332
  %v349 = vadd.f32 %v248, %v333
  %v350 = vadd.f32 %v249, %v334
  %v351 = vadd.f32 %v250, %v335
  %v352 = vadd.f32 %v251, %v336
  %v353 = vadd.f32 %v252, %v337
  %v355 = vlaneseq
  %v356 = vshrl.u32 %v355, 7
  %v357 = vsub.s32 0, %v356
  %v358 = vrot.slane %v30, %v357
  %v360 = vadd.f32 %v338, %v358
  %v361 = vadd.f32 %v339, %v358
  %v362 = vadd.f32 %v340, %v358
  %v363 = vadd.f32 %v341, %v358
  %v364 = vadd.f32 %v342, %v358
  %v365 = vadd.f32 %v343, %v358
  %v366 = vadd.f32 %v344, %v358
  %v367 = vadd.f32 %v345, %v358
  %v368 = vadd.f32 %v346, %v358
  %v369 = vadd.f32 %v347, %v358
  %v370 = vadd.f32 %v348, %v358
  %v371 = vadd.f32 %v349, %v358
  %v372 = vadd.f32 %v350, %v358
  %v373 = vadd.f32 %v351, %v358
  %v374 = vadd.f32 %v352, %v358
  %v375 = vadd.f32 %v353, %v358
  %v376 = vmax.f32 %v360, 0.0
  %v377 = vmax.f32 %v361, 0.0
  %v378 = vmax.f32 %v362, 0.0
  %v379 = vmax.f32 %v363, 0.0
  %v380 = vmax.f32 %v364, 0.0
  %v381 = vmax.f32 %v365, 0.0
  %v382 = vmax.f32 %v366, 0.0
  %v383 = vmax.f32 %v367, 0.0
  %v384 = vmax.f32 %v368, 0.0
  %v385 = vmax.f32 %v369, 0.0
  %v386 = vmax.f32 %v370, 0.0
  %v387 = vmax.f32 %v371, 0.0
  %v388 = vmax.f32 %v372, 0.0
  %v389 = vmax.f32 %v373, 0.0
  %v390 = vmax.f32 %v374, 0.0
  %v391 = vmax.f32 %v375, 0.0
  %v392 = vpack.c.bf16 %v377, %v376
  %v393 = vpack.c.bf16 %v379, %v378
  %v394 = vpack.c.bf16 %v381, %v380
  %v395 = vpack.c.bf16 %v383, %v382
  %v396 = vpack.c.bf16 %v385, %v384
  %v397 = vpack.c.bf16 %v387, %v386
  %v398 = vpack.c.bf16 %v389, %v388
  %v399 = vpack.c.bf16 %v391, %v390
  %v400 = vld [vmem:[%s3] sm:$0xff]
  %v401 = vld [vmem:[%s3 + $0x8] sm:$0xff]
  %v402 = vld [vmem:[%s3 + $0x10] sm:$0xff]
  %v403 = vld [vmem:[%s3 + $0x18] sm:$0xff]
  %v404 = vld [vmem:[%s3 + $0x20] sm:$0xff]
  %v405 = vld [vmem:[%s3 + $0x28] sm:$0xff]
  %v406 = vld [vmem:[%s3 + $0x30] sm:$0xff]
  %v407 = vld [vmem:[%s3 + $0x38] sm:$0xff]
  %v409 = vlaneseq
  %v410 = vshrl.u32 %v409, 7
  %v411 = vsub.s32 0, %v410
  %v412 = vrot.slane %v31, %v411
  %v413 = vlaneseq
  %v414 = vshrl.u32 %v413, 7
  %v415 = vsub.s32 1, %v414
  %v416 = vrot.slane %v31, %v415
  %v417 = vlaneseq
  %v418 = vshrl.u32 %v417, 7
  %v419 = vsub.s32 2, %v418
  %v420 = vrot.slane %v31, %v419
  %v421 = vlaneseq
  %v422 = vshrl.u32 %v421, 7
  %v423 = vsub.s32 3, %v422
  %v424 = vrot.slane %v31, %v423
  %v437 = vunpack.c.l.b16 %v400
  %v438 = vunpack.c.h.b16 %v400
  %v439 = vunpack.c.l.b16 %v401
  %v440 = vunpack.c.h.b16 %v401
  %v441 = vunpack.c.l.b16 %v402
  %v442 = vunpack.c.h.b16 %v402
  %v443 = vunpack.c.l.b16 %v403
  %v444 = vunpack.c.h.b16 %v403
  %v445 = vunpack.c.l.b16 %v404
  %v446 = vunpack.c.h.b16 %v404
  %v447 = vunpack.c.l.b16 %v405
  %v448 = vunpack.c.h.b16 %v405
  %v449 = vunpack.c.l.b16 %v406
  %v450 = vunpack.c.h.b16 %v406
  %v451 = vunpack.c.l.b16 %v407
  %v452 = vunpack.c.h.b16 %v407
  %v453 = vpack.c.b16 %v441, %v437
  %v454 = vpack.c.b16 %v442, %v438
  %v455 = vpack.c.b16 %v443, %v439
  %v456 = vpack.c.b16 %v444, %v440
  %v457 = vpack.c.b16 %v449, %v445
  %v458 = vpack.c.b16 %v450, %v446
  %v459 = vpack.c.b16 %v451, %v447
  %v460 = vpack.c.b16 %v452, %v448
  %vm469 = vcmask 261120
  %v471 = vsel %vm469, %v392, 0
  %v474 = vsel %vm469, %v393, 0
  %v477 = vsel %vm469, %v394, 0
  %v480 = vsel %vm469, %v395, 0
  %v483 = vsel %vm469, %v396, 0
  %v486 = vsel %vm469, %v397, 0
  %v489 = vsel %vm469, %v398, 0
  %v492 = vsel %vm469, %v399, 0
  %494 = vmatprep.subr.bf16.mxu0 %v454
  %495 = vmatpush1.bf16.msra.mxu0 %v453
  %496 = vmatprep.subr.bf16.mxu0 %v458
  %497 = vmatpush1.bf16.msra.mxu0 %v457
  %498 = vmatprep.subr.bf16.mxu0 0
  %499 = vmatpush1.bf16.msra.mxu0 0
  %500 = vmatprep.subr.bf16.mxu0 0
  %501 = vmatpush1.bf16.msra.mxu0 0
  %502 = vmatprep.subr.bf16.mxu0 0
  %503 = vmatpush1.bf16.msra.mxu0 0
  %504 = vmatprep.subr.bf16.mxu0 0
  %505 = vmatpush1.bf16.msra.mxu0 0
  %506 = vmatprep.subr.bf16.mxu0 0
  %507 = vmatpush1.bf16.msra.mxu0 0
  %508 = vmatprep.subr.bf16.mxu0 0
  %509 = vmatpush1.bf16.msra.mxu0 0
  %510 = vmatprep.subr.bf16.mxu0 0
  %511 = vmatpush1.bf16.msra.mxu0 0
  %512 = vmatprep.subr.bf16.mxu0 0
  %513 = vmatpush1.bf16.msra.mxu0 0
  %514 = vmatprep.subr.bf16.mxu0 0
  %515 = vmatpush1.bf16.msra.mxu0 0
  %516 = vmatprep.subr.bf16.mxu0 0
  %517 = vmatpush1.bf16.msra.mxu0 0
  %518 = vmatprep.subr.bf16.mxu0 0
  %519 = vmatpush1.bf16.msra.mxu0 0
  %520 = vmatprep.subr.bf16.mxu0 0
  %521 = vmatpush1.bf16.msra.mxu0 0
  %522 = vmatprep.subr.bf16.mxu0 0
  %523 = vmatpush1.bf16.msra.mxu0 0
  %524 = vmatprep.subr.bf16.mxu0 0
  %525 = vmatpush1.bf16.msra.mxu0 0
  %526 = vmatprep.mubr.bf16.mxu0 0
  %527 = vmatmul.mubr.bf16.gmra.mrb[0].mxu0 %v471
  %v528 = vpop.f32.mrb[0].mxu0
  %v529 = vadd.f32 %v412, %v528
  %v530 = vpop.f32.mrb[0].mxu0
  %v531 = vadd.f32 %v416, %v530
  %v532 = vpop.f32.mrb[0].mxu0
  %v533 = vadd.f32 %v412, %v532
  %v534 = vpop.f32.mrb[0].mxu0
  %v535 = vadd.f32 %v416, %v534
  %536 = vmatprep.mubr.bf16.mxu0 0
  %537 = vmatmul.mubr.bf16.gmra.mrb[0].mxu0 %v474
  %v538 = vpop.f32.mrb[0].mxu0
  %v539 = vadd.f32 %v412, %v538
  %v540 = vpop.f32.mrb[0].mxu0
  %v541 = vadd.f32 %v416, %v540
  %v542 = vpop.f32.mrb[0].mxu0
  %v543 = vadd.f32 %v412, %v542
  %v544 = vpop.f32.mrb[0].mxu0
  %v545 = vadd.f32 %v416, %v544
  %546 = vmatprep.mubr.bf16.mxu0 0
  %547 = vmatmul.mubr.bf16.gmra.mrb[0].mxu0 %v477
  %v548 = vpop.f32.mrb[0].mxu0
  %v549 = vadd.f32 %v412, %v548
  %v550 = vpop.f32.mrb[0].mxu0
  %v551 = vadd.f32 %v416, %v550
  %v552 = vpop.f32.mrb[0].mxu0
  %v553 = vadd.f32 %v412, %v552
  %v554 = vpop.f32.mrb[0].mxu0
  %v555 = vadd.f32 %v416, %v554
  %556 = vmatprep.mubr.bf16.mxu0 0
  %557 = vmatmul.mubr.bf16.gmra.mrb[0].mxu0 %v480
  %v558 = vpop.f32.mrb[0].mxu0
  %v559 = vadd.f32 %v412, %v558
  %v560 = vpop.f32.mrb[0].mxu0
  %v561 = vadd.f32 %v416, %v560
  %v562 = vpop.f32.mrb[0].mxu0
  %v563 = vadd.f32 %v412, %v562
  %v564 = vpop.f32.mrb[0].mxu0
  %v565 = vadd.f32 %v416, %v564
  %566 = vmatprep.mubr.bf16.mxu0 0
  %567 = vmatmul.mubr.bf16.gmra.mrb[0].mxu0 %v483
  %v568 = vpop.f32.mrb[0].mxu0
  %v569 = vadd.f32 %v412, %v568
  %v570 = vpop.f32.mrb[0].mxu0
  %v571 = vadd.f32 %v416, %v570
  %v572 = vpop.f32.mrb[0].mxu0
  %v573 = vadd.f32 %v412, %v572
  %v574 = vpop.f32.mrb[0].mxu0
  %v575 = vadd.f32 %v416, %v574
  %576 = vmatprep.mubr.bf16.mxu0 0
  %577 = vmatmul.mubr.bf16.gmra.mrb[0].mxu0 %v486
  %v578 = vpop.f32.mrb[0].mxu0
  %v579 = vadd.f32 %v412, %v578
  %v580 = vpop.f32.mrb[0].mxu0
  %v581 = vadd.f32 %v416, %v580
  %v582 = vpop.f32.mrb[0].mxu0
  %v583 = vadd.f32 %v412, %v582
  %v584 = vpop.f32.mrb[0].mxu0
  %v585 = vadd.f32 %v416, %v584
  %586 = vmatprep.mubr.bf16.mxu0 0
  %587 = vmatmul.mubr.bf16.gmra.mrb[0].mxu0 %v489
  %v588 = vpop.f32.mrb[0].mxu0
  %v589 = vadd.f32 %v412, %v588
  %v590 = vpop.f32.mrb[0].mxu0
  %v591 = vadd.f32 %v416, %v590
  %v592 = vpop.f32.mrb[0].mxu0
  %v593 = vadd.f32 %v412, %v592
  %v594 = vpop.f32.mrb[0].mxu0
  %v595 = vadd.f32 %v416, %v594
  %596 = vmatprep.mubr.bf16.mxu0 0
  %597 = vmatmul.mubr.bf16.gmra.mrb[0].mxu0 %v492
  %v598 = vpop.f32.mrb[0].mxu0
  %v599 = vadd.f32 %v412, %v598
  %v600 = vpop.f32.mrb[0].mxu0
  %v601 = vadd.f32 %v416, %v600
  %v602 = vpop.f32.mrb[0].mxu0
  %v603 = vadd.f32 %v412, %v602
  %v604 = vpop.f32.mrb[0].mxu0
  %v605 = vadd.f32 %v416, %v604
  %606 = vdwg.mxu0
  %607 = vmatprep.subr.bf16.mxu0 %v456
  %608 = vmatpush1.bf16.msra.mxu0 %v455
  %609 = vmatprep.subr.bf16.mxu0 %v460
  %610 = vmatpush1.bf16.msra.mxu0 %v459
  %611 = vmatprep.subr.bf16.mxu0 0
  %612 = vmatpush1.bf16.msra.mxu0 0
  %613 = vmatprep.subr.bf16.mxu0 0
  %614 = vmatpush1.bf16.msra.mxu0 0
  %615 = vmatprep.subr.bf16.mxu0 0
  %616 = vmatpush1.bf16.msra.mxu0 0
  %617 = vmatprep.subr.bf16.mxu0 0
  %618 = vmatpush1.bf16.msra.mxu0 0
  %619 = vmatprep.subr.bf16.mxu0 0
  %620 = vmatpush1.bf16.msra.mxu0 0
  %621 = vmatprep.subr.bf16.mxu0 0
  %622 = vmatpush1.bf16.msra.mxu0 0
  %623 = vmatprep.subr.bf16.mxu0 0
  %624 = vmatpush1.bf16.msra.mxu0 0
  %625 = vmatprep.subr.bf16.mxu0 0
  %626 = vmatpush1.bf16.msra.mxu0 0
  %627 = vmatprep.subr.bf16.mxu0 0
  %628 = vmatpush1.bf16.msra.mxu0 0
  %629 = vmatprep.subr.bf16.mxu0 0
  %630 = vmatpush1.bf16.msra.mxu0 0
  %631 = vmatprep.subr.bf16.mxu0 0
  %632 = vmatpush1.bf16.msra.mxu0 0
  %633 = vmatprep.subr.bf16.mxu0 0
  %634 = vmatpush1.bf16.msra.mxu0 0
  %635 = vmatprep.subr.bf16.mxu0 0
  %636 = vmatpush1.bf16.msra.mxu0 0
  %637 = vmatprep.subr.bf16.mxu0 0
  %638 = vmatpush1.bf16.msra.mxu0 0
  %639 = vmatprep.mubr.bf16.mxu0 0
  %640 = vmatmul.mubr.bf16.gmra.mrb[0].mxu0 %v471
  %v641 = vpop.f32.mrb[0].mxu0
  %v642 = vadd.f32 %v420, %v641
  %v643 = vpop.f32.mrb[0].mxu0
  %v644 = vadd.f32 %v424, %v643
  %v645 = vpop.f32.mrb[0].mxu0
  %v646 = vadd.f32 %v420, %v645
  %v647 = vpop.f32.mrb[0].mxu0
  %v648 = vadd.f32 %v424, %v647
  %649 = vmatprep.mubr.bf16.mxu0 0
  %650 = vmatmul.mubr.bf16.gmra.mrb[0].mxu0 %v474
  %v651 = vpop.f32.mrb[0].mxu0
  %v652 = vadd.f32 %v420, %v651
  %v653 = vpop.f32.mrb[0].mxu0
  %v654 = vadd.f32 %v424, %v653
  %v655 = vpop.f32.mrb[0].mxu0
  %v656 = vadd.f32 %v420, %v655
  %v657 = vpop.f32.mrb[0].mxu0
  %v658 = vadd.f32 %v424, %v657
  %659 = vmatprep.mubr.bf16.mxu0 0
  %660 = vmatmul.mubr.bf16.gmra.mrb[0].mxu0 %v477
  %v661 = vpop.f32.mrb[0].mxu0
  %v662 = vadd.f32 %v420, %v661
  %v663 = vpop.f32.mrb[0].mxu0
  %v664 = vadd.f32 %v424, %v663
  %v665 = vpop.f32.mrb[0].mxu0
  %v666 = vadd.f32 %v420, %v665
  %v667 = vpop.f32.mrb[0].mxu0
  %v668 = vadd.f32 %v424, %v667
  %669 = vmatprep.mubr.bf16.mxu0 0
  %670 = vmatmul.mubr.bf16.gmra.mrb[0].mxu0 %v480
  %v671 = vpop.f32.mrb[0].mxu0
  %v672 = vadd.f32 %v420, %v671
  %v673 = vpop.f32.mrb[0].mxu0
  %v674 = vadd.f32 %v424, %v673
  %v675 = vpop.f32.mrb[0].mxu0
  %v676 = vadd.f32 %v420, %v675
  %v677 = vpop.f32.mrb[0].mxu0
  %v678 = vadd.f32 %v424, %v677
  %679 = vmatprep.mubr.bf16.mxu0 0
  %680 = vmatmul.mubr.bf16.gmra.mrb[0].mxu0 %v483
  %v681 = vpop.f32.mrb[0].mxu0
  %v682 = vadd.f32 %v420, %v681
  %v683 = vpop.f32.mrb[0].mxu0
  %v684 = vadd.f32 %v424, %v683
  %v685 = vpop.f32.mrb[0].mxu0
  %v686 = vadd.f32 %v420, %v685
  %v687 = vpop.f32.mrb[0].mxu0
  %v688 = vadd.f32 %v424, %v687
  %689 = vmatprep.mubr.bf16.mxu0 0
  %690 = vmatmul.mubr.bf16.gmra.mrb[0].mxu0 %v486
  %v691 = vpop.f32.mrb[0].mxu0
  %v692 = vadd.f32 %v420, %v691
  %v693 = vpop.f32.mrb[0].mxu0
  %v694 = vadd.f32 %v424, %v693
  %v695 = vpop.f32.mrb[0].mxu0
  %v696 = vadd.f32 %v420, %v695
  %v697 = vpop.f32.mrb[0].mxu0
  %v698 = vadd.f32 %v424, %v697
  %699 = vmatprep.mubr.bf16.mxu0 0
  %700 = vmatmul.mubr.bf16.gmra.mrb[0].mxu0 %v489
  %v701 = vpop.f32.mrb[0].mxu0
  %v702 = vadd.f32 %v420, %v701
  %v703 = vpop.f32.mrb[0].mxu0
  %v704 = vadd.f32 %v424, %v703
  %v705 = vpop.f32.mrb[0].mxu0
  %v706 = vadd.f32 %v420, %v705
  %v707 = vpop.f32.mrb[0].mxu0
  %v708 = vadd.f32 %v424, %v707
  %709 = vmatprep.mubr.bf16.mxu0 0
  %710 = vmatmul.mubr.bf16.gmra.mrb[0].mxu0 %v492
  %v711 = vpop.f32.mrb[0].mxu0
  %v712 = vadd.f32 %v420, %v711
  %v713 = vpop.f32.mrb[0].mxu0
  %v714 = vadd.f32 %v424, %v713
  %v715 = vpop.f32.mrb[0].mxu0
  %v716 = vadd.f32 %v420, %v715
  %v717 = vpop.f32.mrb[0].mxu0
  %v718 = vadd.f32 %v424, %v717
  %719 = vdwg.mxu0
  %720 = vst [vmem:[#allocation2] sm:$0xff] %v529
  %721 = vst [vmem:[#allocation2 + $0x8] sm:$0xff] %v531
  %722 = vst [vmem:[#allocation2 + $0x10] sm:$0xff] %v642
  %723 = vst [vmem:[#allocation2 + $0x18] sm:$0xff] %v644
  %724 = vst [vmem:[#allocation2 + $0x20] sm:$0xff] %v533
  %725 = vst [vmem:[#allocation2 + $0x28] sm:$0xff] %v535
  %726 = vst [vmem:[#allocation2 + $0x30] sm:$0xff] %v646
  %727 = vst [vmem:[#allocation2 + $0x38] sm:$0xff] %v648
  %728 = vst [vmem:[#allocation2 + $0x40] sm:$0xff] %v539
  %729 = vst [vmem:[#allocation2 + $0x48] sm:$0xff] %v541
  %730 = vst [vmem:[#allocation2 + $0x50] sm:$0xff] %v652
  %731 = vst [vmem:[#allocation2 + $0x58] sm:$0xff] %v654
  %732 = vst [vmem:[#allocation2 + $0x60] sm:$0xff] %v543
  %733 = vst [vmem:[#allocation2 + $0x68] sm:$0xff] %v545
  %734 = vst [vmem:[#allocation2 + $0x70] sm:$0xff] %v656
  %735 = vst [vmem:[#allocation2 + $0x78] sm:$0xff] %v658
  %736 = vst [vmem:[#allocation2 + $0x80] sm:$0xff] %v549
  %737 = vst [vmem:[#allocation2 + $0x88] sm:$0xff] %v551
  %738 = vst [vmem:[#allocation2 + $0x90] sm:$0xff] %v662
  %739 = vst [vmem:[#allocation2 + $0x98] sm:$0xff] %v664
  %740 = vst [vmem:[#allocation2 + $0xa0] sm:$0xff] %v553
  %741 = vst [vmem:[#allocation2 + $0xa8] sm:$0xff] %v555
  %742 = vst [vmem:[#allocation2 + $0xb0] sm:$0xff] %v666
  %743 = vst [vmem:[#allocation2 + $0xb8] sm:$0xff] %v668
  %744 = vst [vmem:[#allocation2 + $0xc0] sm:$0xff] %v559
  %745 = vst [vmem:[#allocation2 + $0xc8] sm:$0xff] %v561
  %746 = vst [vmem:[#allocation2 + $0xd0] sm:$0xff] %v672
  %747 = vst [vmem:[#allocation2 + $0xd8] sm:$0xff] %v674
  %748 = vst [vmem:[#allocation2 + $0xe0] sm:$0xff] %v563
  %749 = vst [vmem:[#allocation2 + $0xe8] sm:$0xff] %v565
  %750 = vst [vmem:[#allocation2 + $0xf0] sm:$0xff] %v676
  %751 = vst [vmem:[#allocation2 + $0xf8] sm:$0xff] %v678
  %752 = vst [vmem:[#allocation2 + $0x100] sm:$0xff] %v569
  %753 = vst [vmem:[#allocation2 + $0x108] sm:$0xff] %v571
  %754 = vst [vmem:[#allocation2 + $0x110] sm:$0xff] %v682
  %755 = vst [vmem:[#allocation2 + $0x118] sm:$0xff] %v684
  %756 = vst [vmem:[#allocation2 + $0x120] sm:$0xff] %v573
  %757 = vst [vmem:[#allocation2 + $0x128] sm:$0xff] %v575
  %758 = vst [vmem:[#allocation2 + $0x130] sm:$0xff] %v686
  %759 = vst [vmem:[#allocation2 + $0x138] sm:$0xff] %v688
  %760 = vst [vmem:[#allocation2 + $0x140] sm:$0xff] %v579
  %761 = vst [vmem:[#allocation2 + $0x148] sm:$0xff] %v581
  %762 = vst [vmem:[#allocation2 + $0x150] sm:$0xff] %v692
  %763 = vst [vmem:[#allocation2 + $0x158] sm:$0xff] %v694
  %764 = vst [vmem:[#allocation2 + $0x160] sm:$0xff] %v583
  %765 = vst [vmem:[#allocation2 + $0x168] sm:$0xff] %v585
  %766 = vst [vmem:[#allocation2 + $0x170] sm:$0xff] %v696
  %767 = vst [vmem:[#allocation2 + $0x178] sm:$0xff] %v698
  %768 = vst [vmem:[#allocation2 + $0x180] sm:$0xff] %v589
  %769 = vst [vmem:[#allocation2 + $0x188] sm:$0xff] %v591
  %770 = vst [vmem:[#allocation2 + $0x190] sm:$0xff] %v702
  %771 = vst [vmem:[#allocation2 + $0x198] sm:$0xff] %v704
  %772 = vst [vmem:[#allocation2 + $0x1a0] sm:$0xff] %v593
  %773 = vst [vmem:[#allocation2 + $0x1a8] sm:$0xff] %v595
  %774 = vst [vmem:[#allocation2 + $0x1b0] sm:$0xff] %v706
  %775 = vst [vmem:[#allocation2 + $0x1b8] sm:$0xff] %v708
  %776 = vst [vmem:[#allocation2 + $0x1c0] sm:$0xff] %v599
  %777 = vst [vmem:[#allocation2 + $0x1c8] sm:$0xff] %v601
  %778 = vst [vmem:[#allocation2 + $0x1d0] sm:$0xff] %v712
  %779 = vst [vmem:[#allocation2 + $0x1d8] sm:$0xff] %v714
  %780 = vst [vmem:[#allocation2 + $0x1e0] sm:$0xff] %v603
  %781 = vst [vmem:[#allocation2 + $0x1e8] sm:$0xff] %v605
  %782 = vst [vmem:[#allocation2 + $0x1f0] sm:$0xff] %v716
  %783 = vst [vmem:[#allocation2 + $0x1f8] sm:$0xff] %v718
  %v784 = vld [vmem:[%s4] sm:$0xff]
  %v785 = vld [vmem:[%s4 + $0x8] sm:$0xff]
  %v786 = vld [vmem:[%s4 + $0x10] sm:$0xff]
  %v787 = vld [vmem:[%s4 + $0x18] sm:$0xff]
  %v788 = vld [vmem:[%s4 + $0x20] sm:$0xff]
  %v789 = vld [vmem:[%s4 + $0x28] sm:$0xff]
  %v790 = vld [vmem:[%s4 + $0x30] sm:$0xff]
  %v791 = vld [vmem:[%s4 + $0x38] sm:$0xff]
  %v792 = vld [vmem:[%s4 + $0x40] sm:$0xff]
  %v793 = vld [vmem:[%s4 + $0x48] sm:$0xff]
  %v794 = vld [vmem:[%s4 + $0x50] sm:$0xff]
  %v795 = vld [vmem:[%s4 + $0x58] sm:$0xff]
  %v796 = vld [vmem:[%s4 + $0x60] sm:$0xff]
  %v797 = vld [vmem:[%s4 + $0x68] sm:$0xff]
  %v798 = vld [vmem:[%s4 + $0x70] sm:$0xff]
  %v799 = vld [vmem:[%s4 + $0x78] sm:$0xff]
  %v800 = vld [vmem:[%s4 + $0x80] sm:$0xff]
  %v801 = vld [vmem:[%s4 + $0x88] sm:$0xff]
  %v802 = vld [vmem:[%s4 + $0x90] sm:$0xff]
  %v803 = vld [vmem:[%s4 + $0x98] sm:$0xff]
  %v804 = vld [vmem:[%s4 + $0xa0] sm:$0xff]
  %v805 = vld [vmem:[%s4 + $0xa8] sm:$0xff]
  %v806 = vld [vmem:[%s4 + $0xb0] sm:$0xff]
  %v807 = vld [vmem:[%s4 + $0xb8] sm:$0xff]
  %v808 = vld [vmem:[%s4 + $0xc0] sm:$0xff]
  %v809 = vld [vmem:[%s4 + $0xc8] sm:$0xff]
  %v810 = vld [vmem:[%s4 + $0xd0] sm:$0xff]
  %v811 = vld [vmem:[%s4 + $0xd8] sm:$0xff]
  %v812 = vld [vmem:[%s4 + $0xe0] sm:$0xff]
  %v813 = vld [vmem:[%s4 + $0xe8] sm:$0xff]
  %v814 = vld [vmem:[%s4 + $0xf0] sm:$0xff]
  %v815 = vld [vmem:[%s4 + $0xf8] sm:$0xff]
  %v816 = vld [vmem:[#allocation2] sm:$0xff]
  %v817 = vld [vmem:[#allocation2 + $0x8] sm:$0xff]
  %v818 = vld [vmem:[#allocation2 + $0x10] sm:$0xff]
  %v819 = vld [vmem:[#allocation2 + $0x18] sm:$0xff]
  %v852 = vunpack.c.l.b16 %v784
  %v853 = vunpack.c.h.b16 %v784
  %v854 = vunpack.c.l.b16 %v785
  %v855 = vunpack.c.h.b16 %v785
  %v856 = vunpack.c.l.b16 %v786
  %v857 = vunpack.c.h.b16 %v786
  %v858 = vunpack.c.l.b16 %v787
  %v859 = vunpack.c.h.b16 %v787
  %v860 = vunpack.c.l.b16 %v788
  %v861 = vunpack.c.h.b16 %v788
  %v862 = vunpack.c.l.b16 %v789
  %v863 = vunpack.c.h.b16 %v789
  %v864 = vunpack.c.l.b16 %v790
  %v865 = vunpack.c.h.b16 %v790
  %v866 = vunpack.c.l.b16 %v791
  %v867 = vunpack.c.h.b16 %v791
  %v868 = vunpack.c.l.b16 %v792
  %v869 = vunpack.c.h.b16 %v792
  %v870 = vunpack.c.l.b16 %v793
  %v871 = vunpack.c.h.b16 %v793
  %v872 = vunpack.c.l.b16 %v794
  %v873 = vunpack.c.h.b16 %v794
  %v874 = vunpack.c.l.b16 %v795
  %v875 = vunpack.c.h.b16 %v795
  %v876 = vunpack.c.l.b16 %v796
  %v877 = vunpack.c.h.b16 %v796
  %v878 = vunpack.c.l.b16 %v797
  %v879 = vunpack.c.h.b16 %v797
  %v880 = vunpack.c.l.b16 %v798
  %v881 = vunpack.c.h.b16 %v798
  %v882 = vunpack.c.l.b16 %v799
  %v883 = vunpack.c.h.b16 %v799
  %v884 = vunpack.c.l.b16 %v800
  %v885 = vunpack.c.h.b16 %v800
  %v886 = vunpack.c.l.b16 %v801
  %v887 = vunpack.c.h.b16 %v801
  %v888 = vunpack.c.l.b16 %v802
  %v889 = vunpack.c.h.b16 %v802
  %v890 = vunpack.c.l.b16 %v803
  %v891 = vunpack.c.h.b16 %v803
  %v892 = vunpack.c.l.b16 %v804
  %v893 = vunpack.c.h.b16 %v804
  %v894 = vunpack.c.l.b16 %v805
  %v895 = vunpack.c.h.b16 %v805
  %v896 = vunpack.c.l.b16 %v806
  %v897 = vunpack.c.h.b16 %v806
  %v898 = vunpack.c.l.b16 %v807
  %v899 = vunpack.c.h.b16 %v807
  %v900 = vunpack.c.l.b16 %v808
  %v901 = vunpack.c.h.b16 %v808
  %v902 = vunpack.c.l.b16 %v809
  %v903 = vunpack.c.h.b16 %v809
  %v904 = vunpack.c.l.b16 %v810
  %v905 = vunpack.c.h.b16 %v810
  %v906 = vunpack.c.l.b16 %v811
  %v907 = vunpack.c.h.b16 %v811
  %v908 = vunpack.c.l.b16 %v812
  %v909 = vunpack.c.h.b16 %v812
  %v910 = vunpack.c.l.b16 %v813
  %v911 = vunpack.c.h.b16 %v813
  %v912 = vunpack.c.l.b16 %v814
  %v913 = vunpack.c.h.b16 %v814
  %v914 = vunpack.c.l.b16 %v815
  %v915 = vunpack.c.h.b16 %v815
  %v916 = vpack.c.b16 %v856, %v852
  %v917 = vpack.c.b16 %v857, %v853
  %v918 = vpack.c.b16 %v858, %v854
  %v919 = vpack.c.b16 %v859, %v855
  %v920 = vpack.c.b16 %v864, %v860
  %v921 = vpack.c.b16 %v865, %v861
  %v922 = vpack.c.b16 %v866, %v862
  %v923 = vpack.c.b16 %v867, %v863
  %v924 = vpack.c.b16 %v872, %v868
  %v925 = vpack.c.b16 %v873, %v869
  %v926 = vpack.c.b16 %v874, %v870
  %v927 = vpack.c.b16 %v875, %v871
  %v928 = vpack.c.b16 %v880, %v876
  %v929 = vpack.c.b16 %v881, %v877
  %v930 = vpack.c.b16 %v882, %v878
  %v931 = vpack.c.b16 %v883, %v879
  %v932 = vpack.c.b16 %v888, %v884
  %v933 = vpack.c.b16 %v889, %v885
  %v934 = vpack.c.b16 %v890, %v886
  %v935 = vpack.c.b16 %v891, %v887
  %v936 = vpack.c.b16 %v896, %v892
  %v937 = vpack.c.b16 %v897, %v893
  %v938 = vpack.c.b16 %v898, %v894
  %v939 = vpack.c.b16 %v899, %v895
  %v940 = vpack.c.b16 %v904, %v900
  %v941 = vpack.c.b16 %v905, %v901
  %v942 = vpack.c.b16 %v906, %v902
  %v943 = vpack.c.b16 %v907, %v903
  %v944 = vpack.c.b16 %v912, %v908
  %v945 = vpack.c.b16 %v913, %v909
  %v946 = vpack.c.b16 %v914, %v910
  %v947 = vpack.c.b16 %v915, %v911
  %980 = vmatprep.subr.bf16.mxu0 %v917
  %981 = vmatpush1.bf16.msra.mxu0 %v916
  %982 = vmatprep.subr.bf16.mxu0 %v921
  %983 = vmatpush1.bf16.msra.mxu0 %v920
  %984 = vmatprep.subr.bf16.mxu0 %v925
  %985 = vmatpush1.bf16.msra.mxu0 %v924
  %986 = vmatprep.subr.bf16.mxu0 %v929
  %987 = vmatpush1.bf16.msra.mxu0 %v928
  %988 = vmatprep.subr.bf16.mxu0 %v933
  %989 = vmatpush1.bf16.msra.mxu0 %v932
  %990 = vmatprep.subr.bf16.mxu0 %v937
  %991 = vmatpush1.bf16.msra.mxu0 %v936
  %992 = vmatprep.subr.bf16.mxu0 %v941
  %993 = vmatpush1.bf16.msra.mxu0 %v940
  %994 = vmatprep.subr.bf16.mxu0 %v945
  %995 = vmatpush1.bf16.msra.mxu0 %v944
  %996 = vmatprep.subr.bf16.mxu0 0
  %997 = vmatpush1.bf16.msra.mxu0 0
  %998 = vmatprep.subr.bf16.mxu0 0
  %999 = vmatpush1.bf16.msra.mxu0 0
  %1000 = vmatprep.subr.bf16.mxu0 0
  %1001 = vmatpush1.bf16.msra.mxu0 0
  %1002 = vmatprep.subr.bf16.mxu0 0
  %1003 = vmatpush1.bf16.msra.mxu0 0
  %1004 = vmatprep.subr.bf16.mxu0 0
  %1005 = vmatpush1.bf16.msra.mxu0 0
  %1006 = vmatprep.subr.bf16.mxu0 0
  %1007 = vmatpush1.bf16.msra.mxu0 0
  %1008 = vmatprep.subr.bf16.mxu0 0
  %1009 = vmatpush1.bf16.msra.mxu0 0
  %1010 = vmatprep.subr.bf16.mxu0 0
  %1011 = vmatpush1.bf16.msra.mxu0 0
  %1012 = vmatprep.mubr.bf16.mxu0 0
  %1013 = vmatmul.mubr.bf16.gmra.mrb[0].mxu0 0
  %v1014 = vpop.f32.mrb[0].mxu0
  %v1015 = vadd.f32 0.0, %v1014
  %v1016 = vpop.f32.mrb[0].mxu0
  %v1017 = vadd.f32 0.0, %v1016
  %v1018 = vpop.f32.mrb[0].mxu0
  %v1019 = vpop.f32.mrb[0].mxu0
  %1020 = vdwg.mxu0
  %1021 = vmatprep.subr.bf16.mxu0 %v919
  %1022 = vmatpush1.bf16.msra.mxu0 %v918
  %1023 = vmatprep.subr.bf16.mxu0 %v923
  %1024 = vmatpush1.bf16.msra.mxu0 %v922
  %1025 = vmatprep.subr.bf16.mxu0 %v927
  %1026 = vmatpush1.bf16.msra.mxu0 %v926
  %1027 = vmatprep.subr.bf16.mxu0 %v931
  %1028 = vmatpush1.bf16.msra.mxu0 %v930
  %1029 = vmatprep.subr.bf16.mxu0 %v935
  %1030 = vmatpush1.bf16.msra.mxu0 %v934
  %1031 = vmatprep.subr.bf16.mxu0 %v939
  %1032 = vmatpush1.bf16.msra.mxu0 %v938
  %1033 = vmatprep.subr.bf16.mxu0 %v943
  %1034 = vmatpush1.bf16.msra.mxu0 %v942
  %1035 = vmatprep.subr.bf16.mxu0 %v947
  %1036 = vmatpush1.bf16.msra.mxu0 %v946
  %1037 = vmatprep.subr.bf16.mxu0 0
  %1038 = vmatpush1.bf16.msra.mxu0 0
  %1039 = vmatprep.subr.bf16.mxu0 0
  %1040 = vmatpush1.bf16.msra.mxu0 0
  %1041 = vmatprep.subr.bf16.mxu0 0
  %1042 = vmatpush1.bf16.msra.mxu0 0
  %1043 = vmatprep.subr.bf16.mxu0 0
  %1044 = vmatpush1.bf16.msra.mxu0 0
  %1045 = vmatprep.subr.bf16.mxu0 0
  %1046 = vmatpush1.bf16.msra.mxu0 0
  %1047 = vmatprep.subr.bf16.mxu0 0
  %1048 = vmatpush1.bf16.msra.mxu0 0
  %1049 = vmatprep.subr.bf16.mxu0 0
  %1050 = vmatpush1.bf16.msra.mxu0 0
  %1051 = vmatprep.subr.bf16.mxu0 0
  %1052 = vmatpush1.bf16.msra.mxu0 0
  %1053 = vmatprep.mubr.bf16.mxu0 0
  %1054 = vmatmul.mubr.bf16.gmra.mrb[0].mxu0 0
  %v1055 = vpop.f32.mrb[0].mxu0
  %v1056 = vadd.f32 0.0, %v1055
  %v1057 = vpop.f32.mrb[0].mxu0
  %v1058 = vadd.f32 0.0, %v1057
  %v1059 = vpop.f32.mrb[0].mxu0
  %v1060 = vpop.f32.mrb[0].mxu0
  %1061 = vdwg.mxu0
  %v1062 = vadd.f32 %v816, %v1015
  %v1063 = vadd.f32 %v817, %v1017
  %v1064 = vadd.f32 %v818, %v1056
  %v1065 = vadd.f32 %v819, %v1058
  %v1066 = vmul.f32 %v1062, 0.5
  %v1067 = vmul.f32 %v1063, 0.5
  %v1068 = vmul.f32 %v1064, 0.5
  %v1069 = vtanh.pop %v1066
  %v1070 = vtanh.pop %v1067
  %v1071 = vtanh.pop %v1068
  %v1072 = vmul.f32 %v1069, 0.5
  %v1073 = vmul.f32 %v1070, 0.5
  %v1074 = vmul.f32 %v1071, 0.5
  %v1075 = vadd.f32 %v1072, 0.5
  %v1076 = vadd.f32 %v1073, 0.5
  %v1077 = vadd.f32 %v1074, 0.5
  %v1078 = vtanh.pop %v1065
  %v1079 = vmul.f32 %v1076, 0.0
  %v1080 = vmul.f32 %v1075, %v1078
  %v1081 = vadd.f32 %v1079, %v1080
  %v1082 = vtanh.pop %v1081
  %v1083 = vmul.f32 %v1077, %v1082
  %v1084 = vld [vmem:[#allocation2 + $0x20] sm:$0xff]
  %v1085 = vld [vmem:[#allocation2 + $0x28] sm:$0xff]
  %v1086 = vld [vmem:[#allocation2 + $0x30] sm:$0xff]
  %v1087 = vld [vmem:[#allocation2 + $0x38] sm:$0xff]
  %v1088 = vpack.c.bf16 %v1083, %v1083
  %1089 = vmatprep.subr.bf16.mxu0 %v917
  %1090 = vmatpush1.bf16.msra.mxu0 %v916
  %1091 = vmatprep.subr.bf16.mxu0 %v921
  %1092 = vmatpush1.bf16.msra.mxu0 %v920
  %1093 = vmatprep.subr.bf16.mxu0 %v925
  %1094 = vmatpush1.bf16.msra.mxu0 %v924
  %1095 = vmatprep.subr.bf16.mxu0 %v929
  %1096 = vmatpush1.bf16.msra.mxu0 %v928
  %1097 = vmatprep.subr.bf16.mxu0 %v933
  %1098 = vmatpush1.bf16.msra.mxu0 %v932
  %1099 = vmatprep.subr.bf16.mxu0 %v937
  %1100 = vmatpush1.bf16.msra.mxu0 %v936
  %1101 = vmatprep.subr.bf16.mxu0 %v941
  %1102 = vmatpush1.bf16.msra.mxu0 %v940
  %1103 = vmatprep.subr.bf16.mxu0 %v945
  %1104 = vmatpush1.bf16.msra.mxu0 %v944
  %1105 = vmatprep.subr.bf16.mxu0 0
  %1106 = vmatpush1.bf16.msra.mxu0 0
  %1107 = vmatprep.subr.bf16.mxu0 0
  %1108 = vmatpush1.bf16.msra.mxu0 0
  %1109 = vmatprep.subr.bf16.mxu0 0
  %1110 = vmatpush1.bf16.msra.mxu0 0
  %1111 = vmatprep.subr.bf16.mxu0 0
  %1112 = vmatpush1.bf16.msra.mxu0 0
  %1113 = vmatprep.subr.bf16.mxu0 0
  %1114 = vmatpush1.bf16.msra.mxu0 0
  %1115 = vmatprep.subr.bf16.mxu0 0
  %1116 = vmatpush1.bf16.msra.mxu0 0
  %1117 = vmatprep.subr.bf16.mxu0 0
  %1118 = vmatpush1.bf16.msra.mxu0 0
  %1119 = vmatprep.subr.bf16.mxu0 0
  %1120 = vmatpush1.bf16.msra.mxu0 0
  %1121 = vmatprep.mubr.bf16.mxu0 0
  %1122 = vmatmul.mubr.bf16.gmra.mrb[0].mxu0 %v1088
  %v1123 = vpop.f32.mrb[0].mxu0
  %v1124 = vadd.f32 0.0, %v1123
  %v1125 = vpop.f32.mrb[0].mxu0
  %v1126 = vadd.f32 0.0, %v1125
  %v1127 = vpop.f32.mrb[0].mxu0
  %v1128 = vpop.f32.mrb[0].mxu0
  %1129 = vdwg.mxu0
  %1130 = vmatprep.subr.bf16.mxu0 %v919
  %1131 = vmatpush1.bf16.msra.mxu0 %v918
  %1132 = vmatprep.subr.bf16.mxu0 %v923
  %1133 = vmatpush1.bf16.msra.mxu0 %v922
  %1134 = vmatprep.subr.bf16.mxu0 %v927
  %1135 = vmatpush1.bf16.msra.mxu0 %v926
  %1136 = vmatprep.subr.bf16.mxu0 %v931
  %1137 = vmatpush1.bf16.msra.mxu0 %v930
  %1138 = vmatprep.subr.bf16.mxu0 %v935
  %1139 = vmatpush1.bf16.msra.mxu0 %v934
  %1140 = vmatprep.subr.bf16.mxu0 %v939
  %1141 = vmatpush1.bf16.msra.mxu0 %v938
  %1142 = vmatprep.subr.bf16.mxu0 %v943
  %1143 = vmatpush1.bf16.msra.mxu0 %v942
  %1144 = vmatprep.subr.bf16.mxu0 %v947
  %1145 = vmatpush1.bf16.msra.mxu0 %v946
  %1146 = vmatprep.subr.bf16.mxu0 0
  %1147 = vmatpush1.bf16.msra.mxu0 0
  %1148 = vmatprep.subr.bf16.mxu0 0
  %1149 = vmatpush1.bf16.msra.mxu0 0
  %1150 = vmatprep.subr.bf16.mxu0 0
  %1151 = vmatpush1.bf16.msra.mxu0 0
  %1152 = vmatprep.subr.bf16.mxu0 0
  %1153 = vmatpush1.bf16.msra.mxu0 0
  %1154 = vmatprep.subr.bf16.mxu0 0
  %1155 = vmatpush1.bf16.msra.mxu0 0
  %1156 = vmatprep.subr.bf16.mxu0 0
  %1157 = vmatpush1.bf16.msra.mxu0 0
  %1158 = vmatprep.subr.bf16.mxu0 0
  %1159 = vmatpush1.bf16.msra.mxu0 0
  %1160 = vmatprep.subr.bf16.mxu0 0
  %1161 = vmatpush1.bf16.msra.mxu0 0
  %1162 = vmatprep.mubr.bf16.mxu0 0
  %1163 = vmatmul.mubr.bf16.gmra.mrb[0].mxu0 %v1088
  %v1164 = vpop.f32.mrb[0].mxu0
  %v1165 = vadd.f32 0.0, %v1164
  %v1166 = vpop.f32.mrb[0].mxu0
  %v1167 = vadd.f32 0.0, %v1166
  %v1168 = vpop.f32.mrb[0].mxu0
  %v1169 = vpop.f32.mrb[0].mxu0
  %1170 = vdwg.mxu0
  %v1171 = vadd.f32 %v1084, %v1124
  %v1172 = vadd.f32 %v1085, %v1126
  %v1173 = vadd.f32 %v1086, %v1165
  %v1174 = vadd.f32 %v1087, %v1167
  %v1175 = vmul.f32 %v1171, 0.5
  %v1176 = vmul.f32 %v1172, 0.5
  %v1177 = vmul.f32 %v1173, 0.5
  %v1178 = vtanh.pop %v1175
  %v1179 = vtanh.pop %v1176
  %v1180 = vtanh.pop %v1177
  %v1181 = vmul.f32 %v1178, 0.5
  %v1182 = vmul.f32 %v1179, 0.5
  %v1183 = vmul.f32 %v1180, 0.5
  %v1184 = vadd.f32 %v1181, 0.5
  %v1185 = vadd.f32 %v1182, 0.5
  %v1186 = vadd.f32 %v1183, 0.5
  %v1187 = vtanh.pop %v1174
  %v1188 = vmul.f32 %v1185, %v1081
  %v1189 = vmul.f32 %v1184, %v1187
  %v1190 = vadd.f32 %v1188, %v1189
  %v1191 = vtanh.pop %v1190
  %v1192 = vmul.f32 %v1186, %v1191
  %v1193 = vld [vmem:[#allocation2 + $0x40] sm:$0xff]
  %v1194 = vld [vmem:[#allocation2 + $0x48] sm:$0xff]
  %v1195 = vld [vmem:[#allocation2 + $0x50] sm:$0xff]
  %v1196 = vld [vmem:[#allocation2 + $0x58] sm:$0xff]
  %v1197 = vpack.c.bf16 %v1192, %v1192
  %1198 = vmatprep.subr.bf16.mxu0 %v917
  %1199 = vmatpush1.bf16.msra.mxu0 %v916
  %1200 = vmatprep.subr.bf16.mxu0 %v921
  %1201 = vmatpush1.bf16.msra.mxu0 %v920
  %1202 = vmatprep.subr.bf16.mxu0 %v925
  %1203 = vmatpush1.bf16.msra.mxu0 %v924
  %1204 = vmatprep.subr.bf16.mxu0 %v929
  %1205 = vmatpush1.bf16.msra.mxu0 %v928
  %1206 = vmatprep.subr.bf16.mxu0 %v933
  %1207 = vmatpush1.bf16.msra.mxu0 %v932
  %1208 = vmatprep.subr.bf16.mxu0 %v937
  %1209 = vmatpush1.bf16.msra.mxu0 %v936
  %1210 = vmatprep.subr.bf16.mxu0 %v941
  %1211 = vmatpush1.bf16.msra.mxu0 %v940
  %1212 = vmatprep.subr.bf16.mxu0 %v945
  %1213 = vmatpush1.bf16.msra.mxu0 %v944
  %1214 = vmatprep.subr.bf16.mxu0 0
  %1215 = vmatpush1.bf16.msra.mxu0 0
  %1216 = vmatprep.subr.bf16.mxu0 0
  %1217 = vmatpush1.bf16.msra.mxu0 0
  %1218 = vmatprep.subr.bf16.mxu0 0
  %1219 = vmatpush1.bf16.msra.mxu0 0
  %1220 = vmatprep.subr.bf16.mxu0 0
  %1221 = vmatpush1.bf16.msra.mxu0 0
  %1222 = vmatprep.subr.bf16.mxu0 0
  %1223 = vmatpush1.bf16.msra.mxu0 0
  %1224 = vmatprep.subr.bf16.mxu0 0
  %1225 = vmatpush1.bf16.msra.mxu0 0
  %1226 = vmatprep.subr.bf16.mxu0 0
  %1227 = vmatpush1.bf16.msra.mxu0 0
  %1228 = vmatprep.subr.bf16.mxu0 0
  %1229 = vmatpush1.bf16.msra.mxu0 0
  %1230 = vmatprep.mubr.bf16.mxu0 0
  %1231 = vmatmul.mubr.bf16.gmra.mrb[0].mxu0 %v1197
  %v1232 = vpop.f32.mrb[0].mxu0
  %v1233 = vadd.f32 0.0, %v1232
  %v1234 = vpop.f32.mrb[0].mxu0
  %v1235 = vadd.f32 0.0, %v1234
  %v1236 = vpop.f32.mrb[0].mxu0
  %v1237 = vpop.f32.mrb[0].mxu0
  %1238 = vdwg.mxu0
  %1239 = vmatprep.subr.bf16.mxu0 %v919
  %1240 = vmatpush1.bf16.msra.mxu0 %v918
  %1241 = vmatprep.subr.bf16.mxu0 %v923
  %1242 = vmatpush1.bf16.msra.mxu0 %v922
  %1243 = vmatprep.subr.bf16.mxu0 %v927
  %1244 = vmatpush1.bf16.msra.mxu0 %v926
  %1245 = vmatprep.subr.bf16.mxu0 %v931
  %1246 = vmatpush1.bf16.msra.mxu0 %v930
  %1247 = vmatprep.subr.bf16.mxu0 %v935
  %1248 = vmatpush1.bf16.msra.mxu0 %v934
  %1249 = vmatprep.subr.bf16.mxu0 %v939
  %1250 = vmatpush1.bf16.msra.mxu0 %v938
  %1251 = vmatprep.subr.bf16.mxu0 %v943
  %1252 = vmatpush1.bf16.msra.mxu0 %v942
  %1253 = vmatprep.subr.bf16.mxu0 %v947
  %1254 = vmatpush1.bf16.msra.mxu0 %v946
  %1255 = vmatprep.subr.bf16.mxu0 0
  %1256 = vmatpush1.bf16.msra.mxu0 0
  %1257 = vmatprep.subr.bf16.mxu0 0
  %1258 = vmatpush1.bf16.msra.mxu0 0
  %1259 = vmatprep.subr.bf16.mxu0 0
  %1260 = vmatpush1.bf16.msra.mxu0 0
  %1261 = vmatprep.subr.bf16.mxu0 0
  %1262 = vmatpush1.bf16.msra.mxu0 0
  %1263 = vmatprep.subr.bf16.mxu0 0
  %1264 = vmatpush1.bf16.msra.mxu0 0
  %1265 = vmatprep.subr.bf16.mxu0 0
  %1266 = vmatpush1.bf16.msra.mxu0 0
  %1267 = vmatprep.subr.bf16.mxu0 0
  %1268 = vmatpush1.bf16.msra.mxu0 0
  %1269 = vmatprep.subr.bf16.mxu0 0
  %1270 = vmatpush1.bf16.msra.mxu0 0
  %1271 = vmatprep.mubr.bf16.mxu0 0
  %1272 = vmatmul.mubr.bf16.gmra.mrb[0].mxu0 %v1197
  %v1273 = vpop.f32.mrb[0].mxu0
  %v1274 = vadd.f32 0.0, %v1273
  %v1275 = vpop.f32.mrb[0].mxu0
  %v1276 = vadd.f32 0.0, %v1275
  %v1277 = vpop.f32.mrb[0].mxu0
  %v1278 = vpop.f32.mrb[0].mxu0
  %1279 = vdwg.mxu0
  %v1280 = vadd.f32 %v1193, %v1233
  %v1281 = vadd.f32 %v1194, %v1235
  %v1282 = vadd.f32 %v1195, %v1274
  %v1283 = vadd.f32 %v1196, %v1276
  %v1284 = vmul.f32 %v1280, 0.5
  %v1285 = vmul.f32 %v1281, 0.5
  %v1286 = vmul.f32 %v1282, 0.5
  %v1287 = vtanh.pop %v1284
  %v1288 = vtanh.pop %v1285
  %v1289 = vtanh.pop %v1286
  %v1290 = vmul.f32 %v1287, 0.5
  %v1291 = vmul.f32 %v1288, 0.5
  %v1292 = vmul.f32 %v1289, 0.5
  %v1293 = vadd.f32 %v1290, 0.5
  %v1294 = vadd.f32 %v1291, 0.5
  %v1295 = vadd.f32 %v1292, 0.5
  %v1296 = vtanh.pop %v1283
  %v1297 = vmul.f32 %v1294, %v1190
  %v1298 = vmul.f32 %v1293, %v1296
  %v1299 = vadd.f32 %v1297, %v1298
  %v1300 = vtanh.pop %v1299
  %v1301 = vmul.f32 %v1295, %v1300
  %v1302 = vld [vmem:[#allocation2 + $0x60] sm:$0xff]
  %v1303 = vld [vmem:[#allocation2 + $0x68] sm:$0xff]
  %v1304 = vld [vmem:[#allocation2 + $0x70] sm:$0xff]
  %v1305 = vld [vmem:[#allocation2 + $0x78] sm:$0xff]
  %v1306 = vpack.c.bf16 %v1301, %v1301
  %1307 = vmatprep.subr.bf16.mxu0 %v917
  %1308 = vmatpush1.bf16.msra.mxu0 %v916
  %1309 = vmatprep.subr.bf16.mxu0 %v921
  %1310 = vmatpush1.bf16.msra.mxu0 %v920
  %1311 = vmatprep.subr.bf16.mxu0 %v925
  %1312 = vmatpush1.bf16.msra.mxu0 %v924
  %1313 = vmatprep.subr.bf16.mxu0 %v929
  %1314 = vmatpush1.bf16.msra.mxu0 %v928
  %1315 = vmatprep.subr.bf16.mxu0 %v933
  %1316 = vmatpush1.bf16.msra.mxu0 %v932
  %1317 = vmatprep.subr.bf16.mxu0 %v937
  %1318 = vmatpush1.bf16.msra.mxu0 %v936
  %1319 = vmatprep.subr.bf16.mxu0 %v941
  %1320 = vmatpush1.bf16.msra.mxu0 %v940
  %1321 = vmatprep.subr.bf16.mxu0 %v945
  %1322 = vmatpush1.bf16.msra.mxu0 %v944
  %1323 = vmatprep.subr.bf16.mxu0 0
  %1324 = vmatpush1.bf16.msra.mxu0 0
  %1325 = vmatprep.subr.bf16.mxu0 0
  %1326 = vmatpush1.bf16.msra.mxu0 0
  %1327 = vmatprep.subr.bf16.mxu0 0
  %1328 = vmatpush1.bf16.msra.mxu0 0
  %1329 = vmatprep.subr.bf16.mxu0 0
  %1330 = vmatpush1.bf16.msra.mxu0 0
  %1331 = vmatprep.subr.bf16.mxu0 0
  %1332 = vmatpush1.bf16.msra.mxu0 0
  %1333 = vmatprep.subr.bf16.mxu0 0
  %1334 = vmatpush1.bf16.msra.mxu0 0
  %1335 = vmatprep.subr.bf16.mxu0 0
  %1336 = vmatpush1.bf16.msra.mxu0 0
  %1337 = vmatprep.subr.bf16.mxu0 0
  %1338 = vmatpush1.bf16.msra.mxu0 0
  %1339 = vmatprep.mubr.bf16.mxu0 0
  %1340 = vmatmul.mubr.bf16.gmra.mrb[0].mxu0 %v1306
  %v1341 = vpop.f32.mrb[0].mxu0
  %v1342 = vadd.f32 0.0, %v1341
  %v1343 = vpop.f32.mrb[0].mxu0
  %v1344 = vadd.f32 0.0, %v1343
  %v1345 = vpop.f32.mrb[0].mxu0
  %v1346 = vpop.f32.mrb[0].mxu0
  %1347 = vdwg.mxu0
  %1348 = vmatprep.subr.bf16.mxu0 %v919
  %1349 = vmatpush1.bf16.msra.mxu0 %v918
  %1350 = vmatprep.subr.bf16.mxu0 %v923
  %1351 = vmatpush1.bf16.msra.mxu0 %v922
  %1352 = vmatprep.subr.bf16.mxu0 %v927
  %1353 = vmatpush1.bf16.msra.mxu0 %v926
  %1354 = vmatprep.subr.bf16.mxu0 %v931
  %1355 = vmatpush1.bf16.msra.mxu0 %v930
  %1356 = vmatprep.subr.bf16.mxu0 %v935
  %1357 = vmatpush1.bf16.msra.mxu0 %v934
  %1358 = vmatprep.subr.bf16.mxu0 %v939
  %1359 = vmatpush1.bf16.msra.mxu0 %v938
  %1360 = vmatprep.subr.bf16.mxu0 %v943
  %1361 = vmatpush1.bf16.msra.mxu0 %v942
  %1362 = vmatprep.subr.bf16.mxu0 %v947
  %1363 = vmatpush1.bf16.msra.mxu0 %v946
  %1364 = vmatprep.subr.bf16.mxu0 0
  %1365 = vmatpush1.bf16.msra.mxu0 0
  %1366 = vmatprep.subr.bf16.mxu0 0
  %1367 = vmatpush1.bf16.msra.mxu0 0
  %1368 = vmatprep.subr.bf16.mxu0 0
  %1369 = vmatpush1.bf16.msra.mxu0 0
  %1370 = vmatprep.subr.bf16.mxu0 0
  %1371 = vmatpush1.bf16.msra.mxu0 0
  %1372 = vmatprep.subr.bf16.mxu0 0
  %1373 = vmatpush1.bf16.msra.mxu0 0
  %1374 = vmatprep.subr.bf16.mxu0 0
  %1375 = vmatpush1.bf16.msra.mxu0 0
  %1376 = vmatprep.subr.bf16.mxu0 0
  %1377 = vmatpush1.bf16.msra.mxu0 0
  %1378 = vmatprep.subr.bf16.mxu0 0
  %1379 = vmatpush1.bf16.msra.mxu0 0
  %1380 = vmatprep.mubr.bf16.mxu0 0
  %1381 = vmatmul.mubr.bf16.gmra.mrb[0].mxu0 %v1306
  %v1382 = vpop.f32.mrb[0].mxu0
  %v1383 = vadd.f32 0.0, %v1382
  %v1384 = vpop.f32.mrb[0].mxu0
  %v1385 = vadd.f32 0.0, %v1384
  %v1386 = vpop.f32.mrb[0].mxu0
  %v1387 = vpop.f32.mrb[0].mxu0
  %1388 = vdwg.mxu0
  %v1389 = vadd.f32 %v1302, %v1342
  %v1390 = vadd.f32 %v1303, %v1344
  %v1391 = vadd.f32 %v1304, %v1383
  %v1392 = vadd.f32 %v1305, %v1385
  %v1393 = vmul.f32 %v1389, 0.5
  %v1394 = vmul.f32 %v1390, 0.5
  %v1395 = vmul.f32 %v1391, 0.5
  %v1396 = vtanh.pop %v1393
  %v1397 = vtanh.pop %v1394
  %v1398 = vtanh.pop %v1395
  %v1399 = vmul.f32 %v1396, 0.5
  %v1400 = vmul.f32 %v1397, 0.5
  %v1401 = vmul.f32 %v1398, 0.5
  %v1402 = vadd.f32 %v1399, 0.5
  %v1403 = vadd.f32 %v1400, 0.5
  %v1404 = vadd.f32 %v1401, 0.5
  %v1405 = vtanh.pop %v1392
  %v1406 = vmul.f32 %v1403, %v1299
  %v1407 = vmul.f32 %v1402, %v1405
  %v1408 = vadd.f32 %v1406, %v1407
  %v1409 = vtanh.pop %v1408
  %v1410 = vmul.f32 %v1404, %v1409
  %v1411 = vld [vmem:[#allocation2 + $0x80] sm:$0xff]
  %v1412 = vld [vmem:[#allocation2 + $0x88] sm:$0xff]
  %v1413 = vld [vmem:[#allocation2 + $0x90] sm:$0xff]
  %v1414 = vld [vmem:[#allocation2 + $0x98] sm:$0xff]
  %v1415 = vpack.c.bf16 %v1410, %v1410
  %1416 = vmatprep.subr.bf16.mxu0 %v917
  %1417 = vmatpush1.bf16.msra.mxu0 %v916
  %1418 = vmatprep.subr.bf16.mxu0 %v921
  %1419 = vmatpush1.bf16.msra.mxu0 %v920
  %1420 = vmatprep.subr.bf16.mxu0 %v925
  %1421 = vmatpush1.bf16.msra.mxu0 %v924
  %1422 = vmatprep.subr.bf16.mxu0 %v929
  %1423 = vmatpush1.bf16.msra.mxu0 %v928
  %1424 = vmatprep.subr.bf16.mxu0 %v933
  %1425 = vmatpush1.bf16.msra.mxu0 %v932
  %1426 = vmatprep.subr.bf16.mxu0 %v937
  %1427 = vmatpush1.bf16.msra.mxu0 %v936
  %1428 = vmatprep.subr.bf16.mxu0 %v941
  %1429 = vmatpush1.bf16.msra.mxu0 %v940
  %1430 = vmatprep.subr.bf16.mxu0 %v945
  %1431 = vmatpush1.bf16.msra.mxu0 %v944
  %1432 = vmatprep.subr.bf16.mxu0 0
  %1433 = vmatpush1.bf16.msra.mxu0 0
  %1434 = vmatprep.subr.bf16.mxu0 0
  %1435 = vmatpush1.bf16.msra.mxu0 0
  %1436 = vmatprep.subr.bf16.mxu0 0
  %1437 = vmatpush1.bf16.msra.mxu0 0
  %1438 = vmatprep.subr.bf16.mxu0 0
  %1439 = vmatpush1.bf16.msra.mxu0 0
  %1440 = vmatprep.subr.bf16.mxu0 0
  %1441 = vmatpush1.bf16.msra.mxu0 0
  %1442 = vmatprep.subr.bf16.mxu0 0
  %1443 = vmatpush1.bf16.msra.mxu0 0
  %1444 = vmatprep.subr.bf16.mxu0 0
  %1445 = vmatpush1.bf16.msra.mxu0 0
  %1446 = vmatprep.subr.bf16.mxu0 0
  %1447 = vmatpush1.bf16.msra.mxu0 0
  %1448 = vmatprep.mubr.bf16.mxu0 0
  %1449 = vmatmul.mubr.bf16.gmra.mrb[0].mxu0 %v1415
  %v1450 = vpop.f32.mrb[0].mxu0
  %v1451 = vadd.f32 0.0, %v1450
  %v1452 = vpop.f32.mrb[0].mxu0
  %v1453 = vadd.f32 0.0, %v1452
  %v1454 = vpop.f32.mrb[0].mxu0
  %v1455 = vpop.f32.mrb[0].mxu0
  %1456 = vdwg.mxu0
  %1457 = vmatprep.subr.bf16.mxu0 %v919
  %1458 = vmatpush1.bf16.msra.mxu0 %v918
  %1459 = vmatprep.subr.bf16.mxu0 %v923
  %1460 = vmatpush1.bf16.msra.mxu0 %v922
  %1461 = vmatprep.subr.bf16.mxu0 %v927
  %1462 = vmatpush1.bf16.msra.mxu0 %v926
  %1463 = vmatprep.subr.bf16.mxu0 %v931
  %1464 = vmatpush1.bf16.msra.mxu0 %v930
  %1465 = vmatprep.subr.bf16.mxu0 %v935
  %1466 = vmatpush1.bf16.msra.mxu0 %v934
  %1467 = vmatprep.subr.bf16.mxu0 %v939
  %1468 = vmatpush1.bf16.msra.mxu0 %v938
  %1469 = vmatprep.subr.bf16.mxu0 %v943
  %1470 = vmatpush1.bf16.msra.mxu0 %v942
  %1471 = vmatprep.subr.bf16.mxu0 %v947
  %1472 = vmatpush1.bf16.msra.mxu0 %v946
  %1473 = vmatprep.subr.bf16.mxu0 0
  %1474 = vmatpush1.bf16.msra.mxu0 0
  %1475 = vmatprep.subr.bf16.mxu0 0
  %1476 = vmatpush1.bf16.msra.mxu0 0
  %1477 = vmatprep.subr.bf16.mxu0 0
  %1478 = vmatpush1.bf16.msra.mxu0 0
  %1479 = vmatprep.subr.bf16.mxu0 0
  %1480 = vmatpush1.bf16.msra.mxu0 0
  %1481 = vmatprep.subr.bf16.mxu0 0
  %1482 = vmatpush1.bf16.msra.mxu0 0
  %1483 = vmatprep.subr.bf16.mxu0 0
  %1484 = vmatpush1.bf16.msra.mxu0 0
  %1485 = vmatprep.subr.bf16.mxu0 0
  %1486 = vmatpush1.bf16.msra.mxu0 0
  %1487 = vmatprep.subr.bf16.mxu0 0
  %1488 = vmatpush1.bf16.msra.mxu0 0
  %1489 = vmatprep.mubr.bf16.mxu0 0
  %1490 = vmatmul.mubr.bf16.gmra.mrb[0].mxu0 %v1415
  %v1491 = vpop.f32.mrb[0].mxu0
  %v1492 = vadd.f32 0.0, %v1491
  %v1493 = vpop.f32.mrb[0].mxu0
  %v1494 = vadd.f32 0.0, %v1493
  %v1495 = vpop.f32.mrb[0].mxu0
  %v1496 = vpop.f32.mrb[0].mxu0
  %1497 = vdwg.mxu0
  %v1498 = vadd.f32 %v1411, %v1451
  %v1499 = vadd.f32 %v1412, %v1453
  %v1500 = vadd.f32 %v1413, %v1492
  %v1501 = vadd.f32 %v1414, %v1494
  %v1502 = vmul.f32 %v1498, 0.5
  %v1503 = vmul.f32 %v1499, 0.5
  %v1504 = vmul.f32 %v1500, 0.5
  %v1505 = vtanh.pop %v1502
  %v1506 = vtanh.pop %v1503
  %v1507 = vtanh.pop %v1504
  %v1508 = vmul.f32 %v1505, 0.5
  %v1509 = vmul.f32 %v1506, 0.5
  %v1510 = vmul.f32 %v1507, 0.5
  %v1511 = vadd.f32 %v1508, 0.5
  %v1512 = vadd.f32 %v1509, 0.5
  %v1513 = vadd.f32 %v1510, 0.5
  %v1514 = vtanh.pop %v1501
  %v1515 = vmul.f32 %v1512, %v1408
  %v1516 = vmul.f32 %v1511, %v1514
  %v1517 = vadd.f32 %v1515, %v1516
  %v1518 = vtanh.pop %v1517
  %v1519 = vmul.f32 %v1513, %v1518
  %v1520 = vld [vmem:[#allocation2 + $0xa0] sm:$0xff]
  %v1521 = vld [vmem:[#allocation2 + $0xa8] sm:$0xff]
  %v1522 = vld [vmem:[#allocation2 + $0xb0] sm:$0xff]
  %v1523 = vld [vmem:[#allocation2 + $0xb8] sm:$0xff]
  %v1524 = vpack.c.bf16 %v1519, %v1519
  %1525 = vmatprep.subr.bf16.mxu0 %v917
  %1526 = vmatpush1.bf16.msra.mxu0 %v916
  %1527 = vmatprep.subr.bf16.mxu0 %v921
  %1528 = vmatpush1.bf16.msra.mxu0 %v920
  %1529 = vmatprep.subr.bf16.mxu0 %v925
  %1530 = vmatpush1.bf16.msra.mxu0 %v924
  %1531 = vmatprep.subr.bf16.mxu0 %v929
  %1532 = vmatpush1.bf16.msra.mxu0 %v928
  %1533 = vmatprep.subr.bf16.mxu0 %v933
  %1534 = vmatpush1.bf16.msra.mxu0 %v932
  %1535 = vmatprep.subr.bf16.mxu0 %v937
  %1536 = vmatpush1.bf16.msra.mxu0 %v936
  %1537 = vmatprep.subr.bf16.mxu0 %v941
  %1538 = vmatpush1.bf16.msra.mxu0 %v940
  %1539 = vmatprep.subr.bf16.mxu0 %v945
  %1540 = vmatpush1.bf16.msra.mxu0 %v944
  %1541 = vmatprep.subr.bf16.mxu0 0
  %1542 = vmatpush1.bf16.msra.mxu0 0
  %1543 = vmatprep.subr.bf16.mxu0 0
  %1544 = vmatpush1.bf16.msra.mxu0 0
  %1545 = vmatprep.subr.bf16.mxu0 0
  %1546 = vmatpush1.bf16.msra.mxu0 0
  %1547 = vmatprep.subr.bf16.mxu0 0
  %1548 = vmatpush1.bf16.msra.mxu0 0
  %1549 = vmatprep.subr.bf16.mxu0 0
  %1550 = vmatpush1.bf16.msra.mxu0 0
  %1551 = vmatprep.subr.bf16.mxu0 0
  %1552 = vmatpush1.bf16.msra.mxu0 0
  %1553 = vmatprep.subr.bf16.mxu0 0
  %1554 = vmatpush1.bf16.msra.mxu0 0
  %1555 = vmatprep.subr.bf16.mxu0 0
  %1556 = vmatpush1.bf16.msra.mxu0 0
  %1557 = vmatprep.mubr.bf16.mxu0 0
  %1558 = vmatmul.mubr.bf16.gmra.mrb[0].mxu0 %v1524
  %v1559 = vpop.f32.mrb[0].mxu0
  %v1560 = vadd.f32 0.0, %v1559
  %v1561 = vpop.f32.mrb[0].mxu0
  %v1562 = vadd.f32 0.0, %v1561
  %v1563 = vpop.f32.mrb[0].mxu0
  %v1564 = vpop.f32.mrb[0].mxu0
  %1565 = vdwg.mxu0
  %1566 = vmatprep.subr.bf16.mxu0 %v919
  %1567 = vmatpush1.bf16.msra.mxu0 %v918
  %1568 = vmatprep.subr.bf16.mxu0 %v923
  %1569 = vmatpush1.bf16.msra.mxu0 %v922
  %1570 = vmatprep.subr.bf16.mxu0 %v927
  %1571 = vmatpush1.bf16.msra.mxu0 %v926
  %1572 = vmatprep.subr.bf16.mxu0 %v931
  %1573 = vmatpush1.bf16.msra.mxu0 %v930
  %1574 = vmatprep.subr.bf16.mxu0 %v935
  %1575 = vmatpush1.bf16.msra.mxu0 %v934
  %1576 = vmatprep.subr.bf16.mxu0 %v939
  %1577 = vmatpush1.bf16.msra.mxu0 %v938
  %1578 = vmatprep.subr.bf16.mxu0 %v943
  %1579 = vmatpush1.bf16.msra.mxu0 %v942
  %1580 = vmatprep.subr.bf16.mxu0 %v947
  %1581 = vmatpush1.bf16.msra.mxu0 %v946
  %1582 = vmatprep.subr.bf16.mxu0 0
  %1583 = vmatpush1.bf16.msra.mxu0 0
  %1584 = vmatprep.subr.bf16.mxu0 0
  %1585 = vmatpush1.bf16.msra.mxu0 0
  %1586 = vmatprep.subr.bf16.mxu0 0
  %1587 = vmatpush1.bf16.msra.mxu0 0
  %1588 = vmatprep.subr.bf16.mxu0 0
  %1589 = vmatpush1.bf16.msra.mxu0 0
  %1590 = vmatprep.subr.bf16.mxu0 0
  %1591 = vmatpush1.bf16.msra.mxu0 0
  %1592 = vmatprep.subr.bf16.mxu0 0
  %1593 = vmatpush1.bf16.msra.mxu0 0
  %1594 = vmatprep.subr.bf16.mxu0 0
  %1595 = vmatpush1.bf16.msra.mxu0 0
  %1596 = vmatprep.subr.bf16.mxu0 0
  %1597 = vmatpush1.bf16.msra.mxu0 0
  %1598 = vmatprep.mubr.bf16.mxu0 0
  %1599 = vmatmul.mubr.bf16.gmra.mrb[0].mxu0 %v1524
  %v1600 = vpop.f32.mrb[0].mxu0
  %v1601 = vadd.f32 0.0, %v1600
  %v1602 = vpop.f32.mrb[0].mxu0
  %v1603 = vadd.f32 0.0, %v1602
  %v1604 = vpop.f32.mrb[0].mxu0
  %v1605 = vpop.f32.mrb[0].mxu0
  %1606 = vdwg.mxu0
  %v1607 = vadd.f32 %v1520, %v1560
  %v1608 = vadd.f32 %v1521, %v1562
  %v1609 = vadd.f32 %v1522, %v1601
  %v1610 = vadd.f32 %v1523, %v1603
  %v1611 = vmul.f32 %v1607, 0.5
  %v1612 = vmul.f32 %v1608, 0.5
  %v1613 = vmul.f32 %v1609, 0.5
  %v1614 = vtanh.pop %v1611
  %v1615 = vtanh.pop %v1612
  %v1616 = vtanh.pop %v1613
  %v1617 = vmul.f32 %v1614, 0.5
  %v1618 = vmul.f32 %v1615, 0.5
  %v1619 = vmul.f32 %v1616, 0.5
  %v1620 = vadd.f32 %v1617, 0.5
  %v1621 = vadd.f32 %v1618, 0.5
  %v1622 = vadd.f32 %v1619, 0.5
  %v1623 = vtanh.pop %v1610
  %v1624 = vmul.f32 %v1621, %v1517
  %v1625 = vmul.f32 %v1620, %v1623
  %v1626 = vadd.f32 %v1624, %v1625
  %v1627 = vtanh.pop %v1626
  %v1628 = vmul.f32 %v1622, %v1627
  %v1629 = vld [vmem:[#allocation2 + $0xc0] sm:$0xff]
  %v1630 = vld [vmem:[#allocation2 + $0xc8] sm:$0xff]
  %v1631 = vld [vmem:[#allocation2 + $0xd0] sm:$0xff]
  %v1632 = vld [vmem:[#allocation2 + $0xd8] sm:$0xff]
  %v1633 = vpack.c.bf16 %v1628, %v1628
  %1634 = vmatprep.subr.bf16.mxu0 %v917
  %1635 = vmatpush1.bf16.msra.mxu0 %v916
  %1636 = vmatprep.subr.bf16.mxu0 %v921
  %1637 = vmatpush1.bf16.msra.mxu0 %v920
  %1638 = vmatprep.subr.bf16.mxu0 %v925
  %1639 = vmatpush1.bf16.msra.mxu0 %v924
  %1640 = vmatprep.subr.bf16.mxu0 %v929
  %1641 = vmatpush1.bf16.msra.mxu0 %v928
  %1642 = vmatprep.subr.bf16.mxu0 %v933
  %1643 = vmatpush1.bf16.msra.mxu0 %v932
  %1644 = vmatprep.subr.bf16.mxu0 %v937
  %1645 = vmatpush1.bf16.msra.mxu0 %v936
  %1646 = vmatprep.subr.bf16.mxu0 %v941
  %1647 = vmatpush1.bf16.msra.mxu0 %v940
  %1648 = vmatprep.subr.bf16.mxu0 %v945
  %1649 = vmatpush1.bf16.msra.mxu0 %v944
  %1650 = vmatprep.subr.bf16.mxu0 0
  %1651 = vmatpush1.bf16.msra.mxu0 0
  %1652 = vmatprep.subr.bf16.mxu0 0
  %1653 = vmatpush1.bf16.msra.mxu0 0
  %1654 = vmatprep.subr.bf16.mxu0 0
  %1655 = vmatpush1.bf16.msra.mxu0 0
  %1656 = vmatprep.subr.bf16.mxu0 0
  %1657 = vmatpush1.bf16.msra.mxu0 0
  %1658 = vmatprep.subr.bf16.mxu0 0
  %1659 = vmatpush1.bf16.msra.mxu0 0
  %1660 = vmatprep.subr.bf16.mxu0 0
  %1661 = vmatpush1.bf16.msra.mxu0 0
  %1662 = vmatprep.subr.bf16.mxu0 0
  %1663 = vmatpush1.bf16.msra.mxu0 0
  %1664 = vmatprep.subr.bf16.mxu0 0
  %1665 = vmatpush1.bf16.msra.mxu0 0
  %1666 = vmatprep.mubr.bf16.mxu0 0
  %1667 = vmatmul.mubr.bf16.gmra.mrb[0].mxu0 %v1633
  %v1668 = vpop.f32.mrb[0].mxu0
  %v1669 = vadd.f32 0.0, %v1668
  %v1670 = vpop.f32.mrb[0].mxu0
  %v1671 = vadd.f32 0.0, %v1670
  %v1672 = vpop.f32.mrb[0].mxu0
  %v1673 = vpop.f32.mrb[0].mxu0
  %1674 = vdwg.mxu0
  %1675 = vmatprep.subr.bf16.mxu0 %v919
  %1676 = vmatpush1.bf16.msra.mxu0 %v918
  %1677 = vmatprep.subr.bf16.mxu0 %v923
  %1678 = vmatpush1.bf16.msra.mxu0 %v922
  %1679 = vmatprep.subr.bf16.mxu0 %v927
  %1680 = vmatpush1.bf16.msra.mxu0 %v926
  %1681 = vmatprep.subr.bf16.mxu0 %v931
  %1682 = vmatpush1.bf16.msra.mxu0 %v930
  %1683 = vmatprep.subr.bf16.mxu0 %v935
  %1684 = vmatpush1.bf16.msra.mxu0 %v934
  %1685 = vmatprep.subr.bf16.mxu0 %v939
  %1686 = vmatpush1.bf16.msra.mxu0 %v938
  %1687 = vmatprep.subr.bf16.mxu0 %v943
  %1688 = vmatpush1.bf16.msra.mxu0 %v942
  %1689 = vmatprep.subr.bf16.mxu0 %v947
  %1690 = vmatpush1.bf16.msra.mxu0 %v946
  %1691 = vmatprep.subr.bf16.mxu0 0
  %1692 = vmatpush1.bf16.msra.mxu0 0
  %1693 = vmatprep.subr.bf16.mxu0 0
  %1694 = vmatpush1.bf16.msra.mxu0 0
  %1695 = vmatprep.subr.bf16.mxu0 0
  %1696 = vmatpush1.bf16.msra.mxu0 0
  %1697 = vmatprep.subr.bf16.mxu0 0
  %1698 = vmatpush1.bf16.msra.mxu0 0
  %1699 = vmatprep.subr.bf16.mxu0 0
  %1700 = vmatpush1.bf16.msra.mxu0 0
  %1701 = vmatprep.subr.bf16.mxu0 0
  %1702 = vmatpush1.bf16.msra.mxu0 0
  %1703 = vmatprep.subr.bf16.mxu0 0
  %1704 = vmatpush1.bf16.msra.mxu0 0
  %1705 = vmatprep.subr.bf16.mxu0 0
  %1706 = vmatpush1.bf16.msra.mxu0 0
  %1707 = vmatprep.mubr.bf16.mxu0 0
  %1708 = vmatmul.mubr.bf16.gmra.mrb[0].mxu0 %v1633
  %v1709 = vpop.f32.mrb[0].mxu0
  %v1710 = vadd.f32 0.0, %v1709
  %v1711 = vpop.f32.mrb[0].mxu0
  %v1712 = vadd.f32 0.0, %v1711
  %v1713 = vpop.f32.mrb[0].mxu0
  %v1714 = vpop.f32.mrb[0].mxu0
  %1715 = vdwg.mxu0
  %v1716 = vadd.f32 %v1629, %v1669
  %v1717 = vadd.f32 %v1630, %v1671
  %v1718 = vadd.f32 %v1631, %v1710
  %v1719 = vadd.f32 %v1632, %v1712
  %v1720 = vmul.f32 %v1716, 0.5
  %v1721 = vmul.f32 %v1717, 0.5
  %v1722 = vmul.f32 %v1718, 0.5
  %v1723 = vtanh.pop %v1720
  %v1724 = vtanh.pop %v1721
  %v1725 = vtanh.pop %v1722
  %v1726 = vmul.f32 %v1723, 0.5
  %v1727 = vmul.f32 %v1724, 0.5
  %v1728 = vmul.f32 %v1725, 0.5
  %v1729 = vadd.f32 %v1726, 0.5
  %v1730 = vadd.f32 %v1727, 0.5
  %v1731 = vadd.f32 %v1728, 0.5
  %v1732 = vtanh.pop %v1719
  %v1733 = vmul.f32 %v1730, %v1626
  %v1734 = vmul.f32 %v1729, %v1732
  %v1735 = vadd.f32 %v1733, %v1734
  %v1736 = vtanh.pop %v1735
  %v1737 = vmul.f32 %v1731, %v1736
  %v1738 = vld [vmem:[#allocation2 + $0xe0] sm:$0xff]
  %v1739 = vld [vmem:[#allocation2 + $0xe8] sm:$0xff]
  %v1740 = vld [vmem:[#allocation2 + $0xf0] sm:$0xff]
  %v1741 = vld [vmem:[#allocation2 + $0xf8] sm:$0xff]
  %v1742 = vpack.c.bf16 %v1737, %v1737
  %1743 = vmatprep.subr.bf16.mxu0 %v917
  %1744 = vmatpush1.bf16.msra.mxu0 %v916
  %1745 = vmatprep.subr.bf16.mxu0 %v921
  %1746 = vmatpush1.bf16.msra.mxu0 %v920
  %1747 = vmatprep.subr.bf16.mxu0 %v925
  %1748 = vmatpush1.bf16.msra.mxu0 %v924
  %1749 = vmatprep.subr.bf16.mxu0 %v929
  %1750 = vmatpush1.bf16.msra.mxu0 %v928
  %1751 = vmatprep.subr.bf16.mxu0 %v933
  %1752 = vmatpush1.bf16.msra.mxu0 %v932
  %1753 = vmatprep.subr.bf16.mxu0 %v937
  %1754 = vmatpush1.bf16.msra.mxu0 %v936
  %1755 = vmatprep.subr.bf16.mxu0 %v941
  %1756 = vmatpush1.bf16.msra.mxu0 %v940
  %1757 = vmatprep.subr.bf16.mxu0 %v945
  %1758 = vmatpush1.bf16.msra.mxu0 %v944
  %1759 = vmatprep.subr.bf16.mxu0 0
  %1760 = vmatpush1.bf16.msra.mxu0 0
  %1761 = vmatprep.subr.bf16.mxu0 0
  %1762 = vmatpush1.bf16.msra.mxu0 0
  %1763 = vmatprep.subr.bf16.mxu0 0
  %1764 = vmatpush1.bf16.msra.mxu0 0
  %1765 = vmatprep.subr.bf16.mxu0 0
  %1766 = vmatpush1.bf16.msra.mxu0 0
  %1767 = vmatprep.subr.bf16.mxu0 0
  %1768 = vmatpush1.bf16.msra.mxu0 0
  %1769 = vmatprep.subr.bf16.mxu0 0
  %1770 = vmatpush1.bf16.msra.mxu0 0
  %1771 = vmatprep.subr.bf16.mxu0 0
  %1772 = vmatpush1.bf16.msra.mxu0 0
  %1773 = vmatprep.subr.bf16.mxu0 0
  %1774 = vmatpush1.bf16.msra.mxu0 0
  %1775 = vmatprep.mubr.bf16.mxu0 0
  %1776 = vmatmul.mubr.bf16.gmra.mrb[0].mxu0 %v1742
  %v1777 = vpop.f32.mrb[0].mxu0
  %v1778 = vadd.f32 0.0, %v1777
  %v1779 = vpop.f32.mrb[0].mxu0
  %v1780 = vadd.f32 0.0, %v1779
  %v1781 = vpop.f32.mrb[0].mxu0
  %v1782 = vpop.f32.mrb[0].mxu0
  %1783 = vdwg.mxu0
  %1784 = vmatprep.subr.bf16.mxu0 %v919
  %1785 = vmatpush1.bf16.msra.mxu0 %v918
  %1786 = vmatprep.subr.bf16.mxu0 %v923
  %1787 = vmatpush1.bf16.msra.mxu0 %v922
  %1788 = vmatprep.subr.bf16.mxu0 %v927
  %1789 = vmatpush1.bf16.msra.mxu0 %v926
  %1790 = vmatprep.subr.bf16.mxu0 %v931
  %1791 = vmatpush1.bf16.msra.mxu0 %v930
  %1792 = vmatprep.subr.bf16.mxu0 %v935
  %1793 = vmatpush1.bf16.msra.mxu0 %v934
  %1794 = vmatprep.subr.bf16.mxu0 %v939
  %1795 = vmatpush1.bf16.msra.mxu0 %v938
  %1796 = vmatprep.subr.bf16.mxu0 %v943
  %1797 = vmatpush1.bf16.msra.mxu0 %v942
  %1798 = vmatprep.subr.bf16.mxu0 %v947
  %1799 = vmatpush1.bf16.msra.mxu0 %v946
  %1800 = vmatprep.subr.bf16.mxu0 0
  %1801 = vmatpush1.bf16.msra.mxu0 0
  %1802 = vmatprep.subr.bf16.mxu0 0
  %1803 = vmatpush1.bf16.msra.mxu0 0
  %1804 = vmatprep.subr.bf16.mxu0 0
  %1805 = vmatpush1.bf16.msra.mxu0 0
  %1806 = vmatprep.subr.bf16.mxu0 0
  %1807 = vmatpush1.bf16.msra.mxu0 0
  %1808 = vmatprep.subr.bf16.mxu0 0
  %1809 = vmatpush1.bf16.msra.mxu0 0
  %1810 = vmatprep.subr.bf16.mxu0 0
  %1811 = vmatpush1.bf16.msra.mxu0 0
  %1812 = vmatprep.subr.bf16.mxu0 0
  %1813 = vmatpush1.bf16.msra.mxu0 0
  %1814 = vmatprep.subr.bf16.mxu0 0
  %1815 = vmatpush1.bf16.msra.mxu0 0
  %1816 = vmatprep.mubr.bf16.mxu0 0
  %1817 = vmatmul.mubr.bf16.gmra.mrb[0].mxu0 %v1742
  %v1818 = vpop.f32.mrb[0].mxu0
  %v1819 = vadd.f32 0.0, %v1818
  %v1820 = vpop.f32.mrb[0].mxu0
  %v1821 = vadd.f32 0.0, %v1820
  %v1822 = vpop.f32.mrb[0].mxu0
  %v1823 = vpop.f32.mrb[0].mxu0
  %1824 = vdwg.mxu0
  %v1825 = vadd.f32 %v1738, %v1778
  %v1826 = vadd.f32 %v1739, %v1780
  %v1827 = vadd.f32 %v1740, %v1819
  %v1828 = vadd.f32 %v1741, %v1821
  %v1829 = vmul.f32 %v1825, 0.5
  %v1830 = vmul.f32 %v1826, 0.5
  %v1831 = vmul.f32 %v1827, 0.5
  %v1832 = vtanh.pop %v1829
  %v1833 = vtanh.pop %v1830
  %v1834 = vtanh.pop %v1831
  %v1835 = vmul.f32 %v1832, 0.5
  %v1836 = vmul.f32 %v1833, 0.5
  %v1837 = vmul.f32 %v1834, 0.5
  %v1838 = vadd.f32 %v1835, 0.5
  %v1839 = vadd.f32 %v1836, 0.5
  %v1840 = vadd.f32 %v1837, 0.5
  %v1841 = vtanh.pop %v1828
  %v1842 = vmul.f32 %v1839, %v1735
  %v1843 = vmul.f32 %v1838, %v1841
  %v1844 = vadd.f32 %v1842, %v1843
  %v1845 = vtanh.pop %v1844
  %v1846 = vmul.f32 %v1840, %v1845
  %v1847 = vld [vmem:[#allocation2 + $0x100] sm:$0xff]
  %v1848 = vld [vmem:[#allocation2 + $0x108] sm:$0xff]
  %v1849 = vld [vmem:[#allocation2 + $0x110] sm:$0xff]
  %v1850 = vld [vmem:[#allocation2 + $0x118] sm:$0xff]
  %v1851 = vpack.c.bf16 %v1846, %v1846
  %1852 = vmatprep.subr.bf16.mxu0 %v917
  %1853 = vmatpush1.bf16.msra.mxu0 %v916
  %1854 = vmatprep.subr.bf16.mxu0 %v921
  %1855 = vmatpush1.bf16.msra.mxu0 %v920
  %1856 = vmatprep.subr.bf16.mxu0 %v925
  %1857 = vmatpush1.bf16.msra.mxu0 %v924
  %1858 = vmatprep.subr.bf16.mxu0 %v929
  %1859 = vmatpush1.bf16.msra.mxu0 %v928
  %1860 = vmatprep.subr.bf16.mxu0 %v933
  %1861 = vmatpush1.bf16.msra.mxu0 %v932
  %1862 = vmatprep.subr.bf16.mxu0 %v937
  %1863 = vmatpush1.bf16.msra.mxu0 %v936
  %1864 = vmatprep.subr.bf16.mxu0 %v941
  %1865 = vmatpush1.bf16.msra.mxu0 %v940
  %1866 = vmatprep.subr.bf16.mxu0 %v945
  %1867 = vmatpush1.bf16.msra.mxu0 %v944
  %1868 = vmatprep.subr.bf16.mxu0 0
  %1869 = vmatpush1.bf16.msra.mxu0 0
  %1870 = vmatprep.subr.bf16.mxu0 0
  %1871 = vmatpush1.bf16.msra.mxu0 0
  %1872 = vmatprep.subr.bf16.mxu0 0
  %1873 = vmatpush1.bf16.msra.mxu0 0
  %1874 = vmatprep.subr.bf16.mxu0 0
  %1875 = vmatpush1.bf16.msra.mxu0 0
  %1876 = vmatprep.subr.bf16.mxu0 0
  %1877 = vmatpush1.bf16.msra.mxu0 0
  %1878 = vmatprep.subr.bf16.mxu0 0
  %1879 = vmatpush1.bf16.msra.mxu0 0
  %1880 = vmatprep.subr.bf16.mxu0 0
  %1881 = vmatpush1.bf16.msra.mxu0 0
  %1882 = vmatprep.subr.bf16.mxu0 0
  %1883 = vmatpush1.bf16.msra.mxu0 0
  %1884 = vmatprep.mubr.bf16.mxu0 0
  %1885 = vmatmul.mubr.bf16.gmra.mrb[0].mxu0 %v1851
  %v1886 = vpop.f32.mrb[0].mxu0
  %v1887 = vadd.f32 0.0, %v1886
  %v1888 = vpop.f32.mrb[0].mxu0
  %v1889 = vadd.f32 0.0, %v1888
  %v1890 = vpop.f32.mrb[0].mxu0
  %v1891 = vpop.f32.mrb[0].mxu0
  %1892 = vdwg.mxu0
  %1893 = vmatprep.subr.bf16.mxu0 %v919
  %1894 = vmatpush1.bf16.msra.mxu0 %v918
  %1895 = vmatprep.subr.bf16.mxu0 %v923
  %1896 = vmatpush1.bf16.msra.mxu0 %v922
  %1897 = vmatprep.subr.bf16.mxu0 %v927
  %1898 = vmatpush1.bf16.msra.mxu0 %v926
  %1899 = vmatprep.subr.bf16.mxu0 %v931
  %1900 = vmatpush1.bf16.msra.mxu0 %v930
  %1901 = vmatprep.subr.bf16.mxu0 %v935
  %1902 = vmatpush1.bf16.msra.mxu0 %v934
  %1903 = vmatprep.subr.bf16.mxu0 %v939
  %1904 = vmatpush1.bf16.msra.mxu0 %v938
  %1905 = vmatprep.subr.bf16.mxu0 %v943
  %1906 = vmatpush1.bf16.msra.mxu0 %v942
  %1907 = vmatprep.subr.bf16.mxu0 %v947
  %1908 = vmatpush1.bf16.msra.mxu0 %v946
  %1909 = vmatprep.subr.bf16.mxu0 0
  %1910 = vmatpush1.bf16.msra.mxu0 0
  %1911 = vmatprep.subr.bf16.mxu0 0
  %1912 = vmatpush1.bf16.msra.mxu0 0
  %1913 = vmatprep.subr.bf16.mxu0 0
  %1914 = vmatpush1.bf16.msra.mxu0 0
  %1915 = vmatprep.subr.bf16.mxu0 0
  %1916 = vmatpush1.bf16.msra.mxu0 0
  %1917 = vmatprep.subr.bf16.mxu0 0
  %1918 = vmatpush1.bf16.msra.mxu0 0
  %1919 = vmatprep.subr.bf16.mxu0 0
  %1920 = vmatpush1.bf16.msra.mxu0 0
  %1921 = vmatprep.subr.bf16.mxu0 0
  %1922 = vmatpush1.bf16.msra.mxu0 0
  %1923 = vmatprep.subr.bf16.mxu0 0
  %1924 = vmatpush1.bf16.msra.mxu0 0
  %1925 = vmatprep.mubr.bf16.mxu0 0
  %1926 = vmatmul.mubr.bf16.gmra.mrb[0].mxu0 %v1851
  %v1927 = vpop.f32.mrb[0].mxu0
  %v1928 = vadd.f32 0.0, %v1927
  %v1929 = vpop.f32.mrb[0].mxu0
  %v1930 = vadd.f32 0.0, %v1929
  %v1931 = vpop.f32.mrb[0].mxu0
  %v1932 = vpop.f32.mrb[0].mxu0
  %1933 = vdwg.mxu0
  %v1934 = vadd.f32 %v1847, %v1887
  %v1935 = vadd.f32 %v1848, %v1889
  %v1936 = vadd.f32 %v1849, %v1928
  %v1937 = vadd.f32 %v1850, %v1930
  %v1938 = vmul.f32 %v1934, 0.5
  %v1939 = vmul.f32 %v1935, 0.5
  %v1940 = vmul.f32 %v1936, 0.5
  %v1941 = vtanh.pop %v1938
  %v1942 = vtanh.pop %v1939
  %v1943 = vtanh.pop %v1940
  %v1944 = vmul.f32 %v1941, 0.5
  %v1945 = vmul.f32 %v1942, 0.5
  %v1946 = vmul.f32 %v1943, 0.5
  %v1947 = vadd.f32 %v1944, 0.5
  %v1948 = vadd.f32 %v1945, 0.5
  %v1949 = vadd.f32 %v1946, 0.5
  %v1950 = vtanh.pop %v1937
  %v1951 = vmul.f32 %v1948, %v1844
  %v1952 = vmul.f32 %v1947, %v1950
  %v1953 = vadd.f32 %v1951, %v1952
  %v1954 = vtanh.pop %v1953
  %v1955 = vmul.f32 %v1949, %v1954
  %v1956 = vld [vmem:[#allocation2 + $0x120] sm:$0xff]
  %v1957 = vld [vmem:[#allocation2 + $0x128] sm:$0xff]
  %v1958 = vld [vmem:[#allocation2 + $0x130] sm:$0xff]
  %v1959 = vld [vmem:[#allocation2 + $0x138] sm:$0xff]
  %v1960 = vpack.c.bf16 %v1955, %v1955
  %1961 = vmatprep.subr.bf16.mxu0 %v917
  %1962 = vmatpush1.bf16.msra.mxu0 %v916
  %1963 = vmatprep.subr.bf16.mxu0 %v921
  %1964 = vmatpush1.bf16.msra.mxu0 %v920
  %1965 = vmatprep.subr.bf16.mxu0 %v925
  %1966 = vmatpush1.bf16.msra.mxu0 %v924
  %1967 = vmatprep.subr.bf16.mxu0 %v929
  %1968 = vmatpush1.bf16.msra.mxu0 %v928
  %1969 = vmatprep.subr.bf16.mxu0 %v933
  %1970 = vmatpush1.bf16.msra.mxu0 %v932
  %1971 = vmatprep.subr.bf16.mxu0 %v937
  %1972 = vmatpush1.bf16.msra.mxu0 %v936
  %1973 = vmatprep.subr.bf16.mxu0 %v941
  %1974 = vmatpush1.bf16.msra.mxu0 %v940
  %1975 = vmatprep.subr.bf16.mxu0 %v945
  %1976 = vmatpush1.bf16.msra.mxu0 %v944
  %1977 = vmatprep.subr.bf16.mxu0 0
  %1978 = vmatpush1.bf16.msra.mxu0 0
  %1979 = vmatprep.subr.bf16.mxu0 0
  %1980 = vmatpush1.bf16.msra.mxu0 0
  %1981 = vmatprep.subr.bf16.mxu0 0
  %1982 = vmatpush1.bf16.msra.mxu0 0
  %1983 = vmatprep.subr.bf16.mxu0 0
  %1984 = vmatpush1.bf16.msra.mxu0 0
  %1985 = vmatprep.subr.bf16.mxu0 0
  %1986 = vmatpush1.bf16.msra.mxu0 0
  %1987 = vmatprep.subr.bf16.mxu0 0
  %1988 = vmatpush1.bf16.msra.mxu0 0
  %1989 = vmatprep.subr.bf16.mxu0 0
  %1990 = vmatpush1.bf16.msra.mxu0 0
  %1991 = vmatprep.subr.bf16.mxu0 0
  %1992 = vmatpush1.bf16.msra.mxu0 0
  %1993 = vmatprep.mubr.bf16.mxu0 0
  %1994 = vmatmul.mubr.bf16.gmra.mrb[0].mxu0 %v1960
  %v1995 = vpop.f32.mrb[0].mxu0
  %v1996 = vadd.f32 0.0, %v1995
  %v1997 = vpop.f32.mrb[0].mxu0
  %v1998 = vadd.f32 0.0, %v1997
  %v1999 = vpop.f32.mrb[0].mxu0
  %v2000 = vpop.f32.mrb[0].mxu0
  %2001 = vdwg.mxu0
  %2002 = vmatprep.subr.bf16.mxu0 %v919
  %2003 = vmatpush1.bf16.msra.mxu0 %v918
  %2004 = vmatprep.subr.bf16.mxu0 %v923
  %2005 = vmatpush1.bf16.msra.mxu0 %v922
  %2006 = vmatprep.subr.bf16.mxu0 %v927
  %2007 = vmatpush1.bf16.msra.mxu0 %v926
  %2008 = vmatprep.subr.bf16.mxu0 %v931
  %2009 = vmatpush1.bf16.msra.mxu0 %v930
  %2010 = vmatprep.subr.bf16.mxu0 %v935
  %2011 = vmatpush1.bf16.msra.mxu0 %v934
  %2012 = vmatprep.subr.bf16.mxu0 %v939
  %2013 = vmatpush1.bf16.msra.mxu0 %v938
  %2014 = vmatprep.subr.bf16.mxu0 %v943
  %2015 = vmatpush1.bf16.msra.mxu0 %v942
  %2016 = vmatprep.subr.bf16.mxu0 %v947
  %2017 = vmatpush1.bf16.msra.mxu0 %v946
  %2018 = vmatprep.subr.bf16.mxu0 0
  %2019 = vmatpush1.bf16.msra.mxu0 0
  %2020 = vmatprep.subr.bf16.mxu0 0
  %2021 = vmatpush1.bf16.msra.mxu0 0
  %2022 = vmatprep.subr.bf16.mxu0 0
  %2023 = vmatpush1.bf16.msra.mxu0 0
  %2024 = vmatprep.subr.bf16.mxu0 0
  %2025 = vmatpush1.bf16.msra.mxu0 0
  %2026 = vmatprep.subr.bf16.mxu0 0
  %2027 = vmatpush1.bf16.msra.mxu0 0
  %2028 = vmatprep.subr.bf16.mxu0 0
  %2029 = vmatpush1.bf16.msra.mxu0 0
  %2030 = vmatprep.subr.bf16.mxu0 0
  %2031 = vmatpush1.bf16.msra.mxu0 0
  %2032 = vmatprep.subr.bf16.mxu0 0
  %2033 = vmatpush1.bf16.msra.mxu0 0
  %2034 = vmatprep.mubr.bf16.mxu0 0
  %2035 = vmatmul.mubr.bf16.gmra.mrb[0].mxu0 %v1960
  %v2036 = vpop.f32.mrb[0].mxu0
  %v2037 = vadd.f32 0.0, %v2036
  %v2038 = vpop.f32.mrb[0].mxu0
  %v2039 = vadd.f32 0.0, %v2038
  %v2040 = vpop.f32.mrb[0].mxu0
  %v2041 = vpop.f32.mrb[0].mxu0
  %2042 = vdwg.mxu0
  %v2043 = vadd.f32 %v1956, %v1996
  %v2044 = vadd.f32 %v1957, %v1998
  %v2045 = vadd.f32 %v1958, %v2037
  %v2046 = vadd.f32 %v1959, %v2039
  %v2047 = vmul.f32 %v2043, 0.5
  %v2048 = vmul.f32 %v2044, 0.5
  %v2049 = vmul.f32 %v2045, 0.5
  %v2050 = vtanh.pop %v2047
  %v2051 = vtanh.pop %v2048
  %v2052 = vtanh.pop %v2049
  %v2053 = vmul.f32 %v2050, 0.5
  %v2054 = vmul.f32 %v2051, 0.5
  %v2055 = vmul.f32 %v2052, 0.5
  %v2056 = vadd.f32 %v2053, 0.5
  %v2057 = vadd.f32 %v2054, 0.5
  %v2058 = vadd.f32 %v2055, 0.5
  %v2059 = vtanh.pop %v2046
  %v2060 = vmul.f32 %v2057, %v1953
  %v2061 = vmul.f32 %v2056, %v2059
  %v2062 = vadd.f32 %v2060, %v2061
  %v2063 = vtanh.pop %v2062
  %v2064 = vmul.f32 %v2058, %v2063
  %v2065 = vld [vmem:[#allocation2 + $0x140] sm:$0xff]
  %v2066 = vld [vmem:[#allocation2 + $0x148] sm:$0xff]
  %v2067 = vld [vmem:[#allocation2 + $0x150] sm:$0xff]
  %v2068 = vld [vmem:[#allocation2 + $0x158] sm:$0xff]
  %v2069 = vpack.c.bf16 %v2064, %v2064
  %2070 = vmatprep.subr.bf16.mxu0 %v917
  %2071 = vmatpush1.bf16.msra.mxu0 %v916
  %2072 = vmatprep.subr.bf16.mxu0 %v921
  %2073 = vmatpush1.bf16.msra.mxu0 %v920
  %2074 = vmatprep.subr.bf16.mxu0 %v925
  %2075 = vmatpush1.bf16.msra.mxu0 %v924
  %2076 = vmatprep.subr.bf16.mxu0 %v929
  %2077 = vmatpush1.bf16.msra.mxu0 %v928
  %2078 = vmatprep.subr.bf16.mxu0 %v933
  %2079 = vmatpush1.bf16.msra.mxu0 %v932
  %2080 = vmatprep.subr.bf16.mxu0 %v937
  %2081 = vmatpush1.bf16.msra.mxu0 %v936
  %2082 = vmatprep.subr.bf16.mxu0 %v941
  %2083 = vmatpush1.bf16.msra.mxu0 %v940
  %2084 = vmatprep.subr.bf16.mxu0 %v945
  %2085 = vmatpush1.bf16.msra.mxu0 %v944
  %2086 = vmatprep.subr.bf16.mxu0 0
  %2087 = vmatpush1.bf16.msra.mxu0 0
  %2088 = vmatprep.subr.bf16.mxu0 0
  %2089 = vmatpush1.bf16.msra.mxu0 0
  %2090 = vmatprep.subr.bf16.mxu0 0
  %2091 = vmatpush1.bf16.msra.mxu0 0
  %2092 = vmatprep.subr.bf16.mxu0 0
  %2093 = vmatpush1.bf16.msra.mxu0 0
  %2094 = vmatprep.subr.bf16.mxu0 0
  %2095 = vmatpush1.bf16.msra.mxu0 0
  %2096 = vmatprep.subr.bf16.mxu0 0
  %2097 = vmatpush1.bf16.msra.mxu0 0
  %2098 = vmatprep.subr.bf16.mxu0 0
  %2099 = vmatpush1.bf16.msra.mxu0 0
  %2100 = vmatprep.subr.bf16.mxu0 0
  %2101 = vmatpush1.bf16.msra.mxu0 0
  %2102 = vmatprep.mubr.bf16.mxu0 0
  %2103 = vmatmul.mubr.bf16.gmra.mrb[0].mxu0 %v2069
  %v2104 = vpop.f32.mrb[0].mxu0
  %v2105 = vadd.f32 0.0, %v2104
  %v2106 = vpop.f32.mrb[0].mxu0
  %v2107 = vadd.f32 0.0, %v2106
  %v2108 = vpop.f32.mrb[0].mxu0
  %v2109 = vpop.f32.mrb[0].mxu0
  %2110 = vdwg.mxu0
  %2111 = vmatprep.subr.bf16.mxu0 %v919
  %2112 = vmatpush1.bf16.msra.mxu0 %v918
  %2113 = vmatprep.subr.bf16.mxu0 %v923
  %2114 = vmatpush1.bf16.msra.mxu0 %v922
  %2115 = vmatprep.subr.bf16.mxu0 %v927
  %2116 = vmatpush1.bf16.msra.mxu0 %v926
  %2117 = vmatprep.subr.bf16.mxu0 %v931
  %2118 = vmatpush1.bf16.msra.mxu0 %v930
  %2119 = vmatprep.subr.bf16.mxu0 %v935
  %2120 = vmatpush1.bf16.msra.mxu0 %v934
  %2121 = vmatprep.subr.bf16.mxu0 %v939
  %2122 = vmatpush1.bf16.msra.mxu0 %v938
  %2123 = vmatprep.subr.bf16.mxu0 %v943
  %2124 = vmatpush1.bf16.msra.mxu0 %v942
  %2125 = vmatprep.subr.bf16.mxu0 %v947
  %2126 = vmatpush1.bf16.msra.mxu0 %v946
  %2127 = vmatprep.subr.bf16.mxu0 0
  %2128 = vmatpush1.bf16.msra.mxu0 0
  %2129 = vmatprep.subr.bf16.mxu0 0
  %2130 = vmatpush1.bf16.msra.mxu0 0
  %2131 = vmatprep.subr.bf16.mxu0 0
  %2132 = vmatpush1.bf16.msra.mxu0 0
  %2133 = vmatprep.subr.bf16.mxu0 0
  %2134 = vmatpush1.bf16.msra.mxu0 0
  %2135 = vmatprep.subr.bf16.mxu0 0
  %2136 = vmatpush1.bf16.msra.mxu0 0
  %2137 = vmatprep.subr.bf16.mxu0 0
  %2138 = vmatpush1.bf16.msra.mxu0 0
  %2139 = vmatprep.subr.bf16.mxu0 0
  %2140 = vmatpush1.bf16.msra.mxu0 0
  %2141 = vmatprep.subr.bf16.mxu0 0
  %2142 = vmatpush1.bf16.msra.mxu0 0
  %2143 = vmatprep.mubr.bf16.mxu0 0
  %2144 = vmatmul.mubr.bf16.gmra.mrb[0].mxu0 %v2069
  %v2145 = vpop.f32.mrb[0].mxu0
  %v2146 = vadd.f32 0.0, %v2145
  %v2147 = vpop.f32.mrb[0].mxu0
  %v2148 = vadd.f32 0.0, %v2147
  %v2149 = vpop.f32.mrb[0].mxu0
  %v2150 = vpop.f32.mrb[0].mxu0
  %2151 = vdwg.mxu0
  %v2152 = vadd.f32 %v2065, %v2105
  %v2153 = vadd.f32 %v2066, %v2107
  %v2154 = vadd.f32 %v2067, %v2146
  %v2155 = vadd.f32 %v2068, %v2148
  %v2156 = vmul.f32 %v2152, 0.5
  %v2157 = vmul.f32 %v2153, 0.5
  %v2158 = vmul.f32 %v2154, 0.5
  %v2159 = vtanh.pop %v2156
  %v2160 = vtanh.pop %v2157
  %v2161 = vtanh.pop %v2158
  %v2162 = vmul.f32 %v2159, 0.5
  %v2163 = vmul.f32 %v2160, 0.5
  %v2164 = vmul.f32 %v2161, 0.5
  %v2165 = vadd.f32 %v2162, 0.5
  %v2166 = vadd.f32 %v2163, 0.5
  %v2167 = vadd.f32 %v2164, 0.5
  %v2168 = vtanh.pop %v2155
  %v2169 = vmul.f32 %v2166, %v2062
  %v2170 = vmul.f32 %v2165, %v2168
  %v2171 = vadd.f32 %v2169, %v2170
  %v2172 = vtanh.pop %v2171
  %v2173 = vmul.f32 %v2167, %v2172
  %v2174 = vld [vmem:[#allocation2 + $0x160] sm:$0xff]
  %v2175 = vld [vmem:[#allocation2 + $0x168] sm:$0xff]
  %v2176 = vld [vmem:[#allocation2 + $0x170] sm:$0xff]
  %v2177 = vld [vmem:[#allocation2 + $0x178] sm:$0xff]
  %v2178 = vpack.c.bf16 %v2173, %v2173
  %2179 = vmatprep.subr.bf16.mxu0 %v917
  %2180 = vmatpush1.bf16.msra.mxu0 %v916
  %2181 = vmatprep.subr.bf16.mxu0 %v921
  %2182 = vmatpush1.bf16.msra.mxu0 %v920
  %2183 = vmatprep.subr.bf16.mxu0 %v925
  %2184 = vmatpush1.bf16.msra.mxu0 %v924
  %2185 = vmatprep.subr.bf16.mxu0 %v929
  %2186 = vmatpush1.bf16.msra.mxu0 %v928
  %2187 = vmatprep.subr.bf16.mxu0 %v933
  %2188 = vmatpush1.bf16.msra.mxu0 %v932
  %2189 = vmatprep.subr.bf16.mxu0 %v937
  %2190 = vmatpush1.bf16.msra.mxu0 %v936
  %2191 = vmatprep.subr.bf16.mxu0 %v941
  %2192 = vmatpush1.bf16.msra.mxu0 %v940
  %2193 = vmatprep.subr.bf16.mxu0 %v945
  %2194 = vmatpush1.bf16.msra.mxu0 %v944
  %2195 = vmatprep.subr.bf16.mxu0 0
  %2196 = vmatpush1.bf16.msra.mxu0 0
  %2197 = vmatprep.subr.bf16.mxu0 0
  %2198 = vmatpush1.bf16.msra.mxu0 0
  %2199 = vmatprep.subr.bf16.mxu0 0
  %2200 = vmatpush1.bf16.msra.mxu0 0
  %2201 = vmatprep.subr.bf16.mxu0 0
  %2202 = vmatpush1.bf16.msra.mxu0 0
  %2203 = vmatprep.subr.bf16.mxu0 0
  %2204 = vmatpush1.bf16.msra.mxu0 0
  %2205 = vmatprep.subr.bf16.mxu0 0
  %2206 = vmatpush1.bf16.msra.mxu0 0
  %2207 = vmatprep.subr.bf16.mxu0 0
  %2208 = vmatpush1.bf16.msra.mxu0 0
  %2209 = vmatprep.subr.bf16.mxu0 0
  %2210 = vmatpush1.bf16.msra.mxu0 0
  %2211 = vmatprep.mubr.bf16.mxu0 0
  %2212 = vmatmul.mubr.bf16.gmra.mrb[0].mxu0 %v2178
  %v2213 = vpop.f32.mrb[0].mxu0
  %v2214 = vadd.f32 0.0, %v2213
  %v2215 = vpop.f32.mrb[0].mxu0
  %v2216 = vadd.f32 0.0, %v2215
  %v2217 = vpop.f32.mrb[0].mxu0
  %v2218 = vpop.f32.mrb[0].mxu0
  %2219 = vdwg.mxu0
  %2220 = vmatprep.subr.bf16.mxu0 %v919
  %2221 = vmatpush1.bf16.msra.mxu0 %v918
  %2222 = vmatprep.subr.bf16.mxu0 %v923
  %2223 = vmatpush1.bf16.msra.mxu0 %v922
  %2224 = vmatprep.subr.bf16.mxu0 %v927
  %2225 = vmatpush1.bf16.msra.mxu0 %v926
  %2226 = vmatprep.subr.bf16.mxu0 %v931
  %2227 = vmatpush1.bf16.msra.mxu0 %v930
  %2228 = vmatprep.subr.bf16.mxu0 %v935
  %2229 = vmatpush1.bf16.msra.mxu0 %v934
  %2230 = vmatprep.subr.bf16.mxu0 %v939
  %2231 = vmatpush1.bf16.msra.mxu0 %v938
  %2232 = vmatprep.subr.bf16.mxu0 %v943
  %2233 = vmatpush1.bf16.msra.mxu0 %v942
  %2234 = vmatprep.subr.bf16.mxu0 %v947
  %2235 = vmatpush1.bf16.msra.mxu0 %v946
  %2236 = vmatprep.subr.bf16.mxu0 0
  %2237 = vmatpush1.bf16.msra.mxu0 0
  %2238 = vmatprep.subr.bf16.mxu0 0
  %2239 = vmatpush1.bf16.msra.mxu0 0
  %2240 = vmatprep.subr.bf16.mxu0 0
  %2241 = vmatpush1.bf16.msra.mxu0 0
  %2242 = vmatprep.subr.bf16.mxu0 0
  %2243 = vmatpush1.bf16.msra.mxu0 0
  %2244 = vmatprep.subr.bf16.mxu0 0
  %2245 = vmatpush1.bf16.msra.mxu0 0
  %2246 = vmatprep.subr.bf16.mxu0 0
  %2247 = vmatpush1.bf16.msra.mxu0 0
  %2248 = vmatprep.subr.bf16.mxu0 0
  %2249 = vmatpush1.bf16.msra.mxu0 0
  %2250 = vmatprep.subr.bf16.mxu0 0
  %2251 = vmatpush1.bf16.msra.mxu0 0
  %2252 = vmatprep.mubr.bf16.mxu0 0
  %2253 = vmatmul.mubr.bf16.gmra.mrb[0].mxu0 %v2178
  %v2254 = vpop.f32.mrb[0].mxu0
  %v2255 = vadd.f32 0.0, %v2254
  %v2256 = vpop.f32.mrb[0].mxu0
  %v2257 = vadd.f32 0.0, %v2256
  %v2258 = vpop.f32.mrb[0].mxu0
  %v2259 = vpop.f32.mrb[0].mxu0
  %2260 = vdwg.mxu0
  %v2261 = vadd.f32 %v2174, %v2214
  %v2262 = vadd.f32 %v2175, %v2216
  %v2263 = vadd.f32 %v2176, %v2255
  %v2264 = vadd.f32 %v2177, %v2257
  %v2265 = vmul.f32 %v2261, 0.5
  %v2266 = vmul.f32 %v2262, 0.5
  %v2267 = vmul.f32 %v2263, 0.5
  %v2268 = vtanh.pop %v2265
  %v2269 = vtanh.pop %v2266
  %v2270 = vtanh.pop %v2267
  %v2271 = vmul.f32 %v2268, 0.5
  %v2272 = vmul.f32 %v2269, 0.5
  %v2273 = vmul.f32 %v2270, 0.5
  %v2274 = vadd.f32 %v2271, 0.5
  %v2275 = vadd.f32 %v2272, 0.5
  %v2276 = vadd.f32 %v2273, 0.5
  %v2277 = vtanh.pop %v2264
  %v2278 = vmul.f32 %v2275, %v2171
  %v2279 = vmul.f32 %v2274, %v2277
  %v2280 = vadd.f32 %v2278, %v2279
  %v2281 = vtanh.pop %v2280
  %v2282 = vmul.f32 %v2276, %v2281
  %v2283 = vld [vmem:[#allocation2 + $0x180] sm:$0xff]
  %v2284 = vld [vmem:[#allocation2 + $0x188] sm:$0xff]
  %v2285 = vld [vmem:[#allocation2 + $0x190] sm:$0xff]
  %v2286 = vld [vmem:[#allocation2 + $0x198] sm:$0xff]
  %v2287 = vpack.c.bf16 %v2282, %v2282
  %2288 = vmatprep.subr.bf16.mxu0 %v917
  %2289 = vmatpush1.bf16.msra.mxu0 %v916
  %2290 = vmatprep.subr.bf16.mxu0 %v921
  %2291 = vmatpush1.bf16.msra.mxu0 %v920
  %2292 = vmatprep.subr.bf16.mxu0 %v925
  %2293 = vmatpush1.bf16.msra.mxu0 %v924
  %2294 = vmatprep.subr.bf16.mxu0 %v929
  %2295 = vmatpush1.bf16.msra.mxu0 %v928
  %2296 = vmatprep.subr.bf16.mxu0 %v933
  %2297 = vmatpush1.bf16.msra.mxu0 %v932
  %2298 = vmatprep.subr.bf16.mxu0 %v937
  %2299 = vmatpush1.bf16.msra.mxu0 %v936
  %2300 = vmatprep.subr.bf16.mxu0 %v941
  %2301 = vmatpush1.bf16.msra.mxu0 %v940
  %2302 = vmatprep.subr.bf16.mxu0 %v945
  %2303 = vmatpush1.bf16.msra.mxu0 %v944
  %2304 = vmatprep.subr.bf16.mxu0 0
  %2305 = vmatpush1.bf16.msra.mxu0 0
  %2306 = vmatprep.subr.bf16.mxu0 0
  %2307 = vmatpush1.bf16.msra.mxu0 0
  %2308 = vmatprep.subr.bf16.mxu0 0
  %2309 = vmatpush1.bf16.msra.mxu0 0
  %2310 = vmatprep.subr.bf16.mxu0 0
  %2311 = vmatpush1.bf16.msra.mxu0 0
  %2312 = vmatprep.subr.bf16.mxu0 0
  %2313 = vmatpush1.bf16.msra.mxu0 0
  %2314 = vmatprep.subr.bf16.mxu0 0
  %2315 = vmatpush1.bf16.msra.mxu0 0
  %2316 = vmatprep.subr.bf16.mxu0 0
  %2317 = vmatpush1.bf16.msra.mxu0 0
  %2318 = vmatprep.subr.bf16.mxu0 0
  %2319 = vmatpush1.bf16.msra.mxu0 0
  %2320 = vmatprep.mubr.bf16.mxu0 0
  %2321 = vmatmul.mubr.bf16.gmra.mrb[0].mxu0 %v2287
  %v2322 = vpop.f32.mrb[0].mxu0
  %v2323 = vadd.f32 0.0, %v2322
  %v2324 = vpop.f32.mrb[0].mxu0
  %v2325 = vadd.f32 0.0, %v2324
  %v2326 = vpop.f32.mrb[0].mxu0
  %v2327 = vpop.f32.mrb[0].mxu0
  %2328 = vdwg.mxu0
  %2329 = vmatprep.subr.bf16.mxu0 %v919
  %2330 = vmatpush1.bf16.msra.mxu0 %v918
  %2331 = vmatprep.subr.bf16.mxu0 %v923
  %2332 = vmatpush1.bf16.msra.mxu0 %v922
  %2333 = vmatprep.subr.bf16.mxu0 %v927
  %2334 = vmatpush1.bf16.msra.mxu0 %v926
  %2335 = vmatprep.subr.bf16.mxu0 %v931
  %2336 = vmatpush1.bf16.msra.mxu0 %v930
  %2337 = vmatprep.subr.bf16.mxu0 %v935
  %2338 = vmatpush1.bf16.msra.mxu0 %v934
  %2339 = vmatprep.subr.bf16.mxu0 %v939
  %2340 = vmatpush1.bf16.msra.mxu0 %v938
  %2341 = vmatprep.subr.bf16.mxu0 %v943
  %2342 = vmatpush1.bf16.msra.mxu0 %v942
  %2343 = vmatprep.subr.bf16.mxu0 %v947
  %2344 = vmatpush1.bf16.msra.mxu0 %v946
  %2345 = vmatprep.subr.bf16.mxu0 0
  %2346 = vmatpush1.bf16.msra.mxu0 0
  %2347 = vmatprep.subr.bf16.mxu0 0
  %2348 = vmatpush1.bf16.msra.mxu0 0
  %2349 = vmatprep.subr.bf16.mxu0 0
  %2350 = vmatpush1.bf16.msra.mxu0 0
  %2351 = vmatprep.subr.bf16.mxu0 0
  %2352 = vmatpush1.bf16.msra.mxu0 0
  %2353 = vmatprep.subr.bf16.mxu0 0
  %2354 = vmatpush1.bf16.msra.mxu0 0
  %2355 = vmatprep.subr.bf16.mxu0 0
  %2356 = vmatpush1.bf16.msra.mxu0 0
  %2357 = vmatprep.subr.bf16.mxu0 0
  %2358 = vmatpush1.bf16.msra.mxu0 0
  %2359 = vmatprep.subr.bf16.mxu0 0
  %2360 = vmatpush1.bf16.msra.mxu0 0
  %2361 = vmatprep.mubr.bf16.mxu0 0
  %2362 = vmatmul.mubr.bf16.gmra.mrb[0].mxu0 %v2287
  %v2363 = vpop.f32.mrb[0].mxu0
  %v2364 = vadd.f32 0.0, %v2363
  %v2365 = vpop.f32.mrb[0].mxu0
  %v2366 = vadd.f32 0.0, %v2365
  %v2367 = vpop.f32.mrb[0].mxu0
  %v2368 = vpop.f32.mrb[0].mxu0
  %2369 = vdwg.mxu0
  %v2370 = vadd.f32 %v2283, %v2323
  %v2371 = vadd.f32 %v2284, %v2325
  %v2372 = vadd.f32 %v2285, %v2364
  %v2373 = vadd.f32 %v2286, %v2366
  %v2374 = vmul.f32 %v2370, 0.5
  %v2375 = vmul.f32 %v2371, 0.5
  %v2376 = vmul.f32 %v2372, 0.5
  %v2377 = vtanh.pop %v2374
  %v2378 = vtanh.pop %v2375
  %v2379 = vtanh.pop %v2376
  %v2380 = vmul.f32 %v2377, 0.5
  %v2381 = vmul.f32 %v2378, 0.5
  %v2382 = vmul.f32 %v2379, 0.5
  %v2383 = vadd.f32 %v2380, 0.5
  %v2384 = vadd.f32 %v2381, 0.5
  %v2385 = vadd.f32 %v2382, 0.5
  %v2386 = vtanh.pop %v2373
  %v2387 = vmul.f32 %v2384, %v2280
  %v2388 = vmul.f32 %v2383, %v2386
  %v2389 = vadd.f32 %v2387, %v2388
  %v2390 = vtanh.pop %v2389
  %v2391 = vmul.f32 %v2385, %v2390
  %v2392 = vld [vmem:[#allocation2 + $0x1a0] sm:$0xff]
  %v2393 = vld [vmem:[#allocation2 + $0x1a8] sm:$0xff]
  %v2394 = vld [vmem:[#allocation2 + $0x1b0] sm:$0xff]
  %v2395 = vld [vmem:[#allocation2 + $0x1b8] sm:$0xff]
  %v2396 = vpack.c.bf16 %v2391, %v2391
  %2397 = vmatprep.subr.bf16.mxu0 %v917
  %2398 = vmatpush1.bf16.msra.mxu0 %v916
  %2399 = vmatprep.subr.bf16.mxu0 %v921
  %2400 = vmatpush1.bf16.msra.mxu0 %v920
  %2401 = vmatprep.subr.bf16.mxu0 %v925
  %2402 = vmatpush1.bf16.msra.mxu0 %v924
  %2403 = vmatprep.subr.bf16.mxu0 %v929
  %2404 = vmatpush1.bf16.msra.mxu0 %v928
  %2405 = vmatprep.subr.bf16.mxu0 %v933
  %2406 = vmatpush1.bf16.msra.mxu0 %v932
  %2407 = vmatprep.subr.bf16.mxu0 %v937
  %2408 = vmatpush1.bf16.msra.mxu0 %v936
  %2409 = vmatprep.subr.bf16.mxu0 %v941
  %2410 = vmatpush1.bf16.msra.mxu0 %v940
  %2411 = vmatprep.subr.bf16.mxu0 %v945
  %2412 = vmatpush1.bf16.msra.mxu0 %v944
  %2413 = vmatprep.subr.bf16.mxu0 0
  %2414 = vmatpush1.bf16.msra.mxu0 0
  %2415 = vmatprep.subr.bf16.mxu0 0
  %2416 = vmatpush1.bf16.msra.mxu0 0
  %2417 = vmatprep.subr.bf16.mxu0 0
  %2418 = vmatpush1.bf16.msra.mxu0 0
  %2419 = vmatprep.subr.bf16.mxu0 0
  %2420 = vmatpush1.bf16.msra.mxu0 0
  %2421 = vmatprep.subr.bf16.mxu0 0
  %2422 = vmatpush1.bf16.msra.mxu0 0
  %2423 = vmatprep.subr.bf16.mxu0 0
  %2424 = vmatpush1.bf16.msra.mxu0 0
  %2425 = vmatprep.subr.bf16.mxu0 0
  %2426 = vmatpush1.bf16.msra.mxu0 0
  %2427 = vmatprep.subr.bf16.mxu0 0
  %2428 = vmatpush1.bf16.msra.mxu0 0
  %2429 = vmatprep.mubr.bf16.mxu0 0
  %2430 = vmatmul.mubr.bf16.gmra.mrb[0].mxu0 %v2396
  %v2431 = vpop.f32.mrb[0].mxu0
  %v2432 = vadd.f32 0.0, %v2431
  %v2433 = vpop.f32.mrb[0].mxu0
  %v2434 = vadd.f32 0.0, %v2433
  %v2435 = vpop.f32.mrb[0].mxu0
  %v2436 = vpop.f32.mrb[0].mxu0
  %2437 = vdwg.mxu0
  %2438 = vmatprep.subr.bf16.mxu0 %v919
  %2439 = vmatpush1.bf16.msra.mxu0 %v918
  %2440 = vmatprep.subr.bf16.mxu0 %v923
  %2441 = vmatpush1.bf16.msra.mxu0 %v922
  %2442 = vmatprep.subr.bf16.mxu0 %v927
  %2443 = vmatpush1.bf16.msra.mxu0 %v926
  %2444 = vmatprep.subr.bf16.mxu0 %v931
  %2445 = vmatpush1.bf16.msra.mxu0 %v930
  %2446 = vmatprep.subr.bf16.mxu0 %v935
  %2447 = vmatpush1.bf16.msra.mxu0 %v934
  %2448 = vmatprep.subr.bf16.mxu0 %v939
  %2449 = vmatpush1.bf16.msra.mxu0 %v938
  %2450 = vmatprep.subr.bf16.mxu0 %v943
  %2451 = vmatpush1.bf16.msra.mxu0 %v942
  %2452 = vmatprep.subr.bf16.mxu0 %v947
  %2453 = vmatpush1.bf16.msra.mxu0 %v946
  %2454 = vmatprep.subr.bf16.mxu0 0
  %2455 = vmatpush1.bf16.msra.mxu0 0
  %2456 = vmatprep.subr.bf16.mxu0 0
  %2457 = vmatpush1.bf16.msra.mxu0 0
  %2458 = vmatprep.subr.bf16.mxu0 0
  %2459 = vmatpush1.bf16.msra.mxu0 0
  %2460 = vmatprep.subr.bf16.mxu0 0
  %2461 = vmatpush1.bf16.msra.mxu0 0
  %2462 = vmatprep.subr.bf16.mxu0 0
  %2463 = vmatpush1.bf16.msra.mxu0 0
  %2464 = vmatprep.subr.bf16.mxu0 0
  %2465 = vmatpush1.bf16.msra.mxu0 0
  %2466 = vmatprep.subr.bf16.mxu0 0
  %2467 = vmatpush1.bf16.msra.mxu0 0
  %2468 = vmatprep.subr.bf16.mxu0 0
  %2469 = vmatpush1.bf16.msra.mxu0 0
  %2470 = vmatprep.mubr.bf16.mxu0 0
  %2471 = vmatmul.mubr.bf16.gmra.mrb[0].mxu0 %v2396
  %v2472 = vpop.f32.mrb[0].mxu0
  %v2473 = vadd.f32 0.0, %v2472
  %v2474 = vpop.f32.mrb[0].mxu0
  %v2475 = vadd.f32 0.0, %v2474
  %v2476 = vpop.f32.mrb[0].mxu0
  %v2477 = vpop.f32.mrb[0].mxu0
  %2478 = vdwg.mxu0
  %v2479 = vadd.f32 %v2392, %v2432
  %v2480 = vadd.f32 %v2393, %v2434
  %v2481 = vadd.f32 %v2394, %v2473
  %v2482 = vadd.f32 %v2395, %v2475
  %v2483 = vmul.f32 %v2479, 0.5
  %v2484 = vmul.f32 %v2480, 0.5
  %v2485 = vmul.f32 %v2481, 0.5
  %v2486 = vtanh.pop %v2483
  %v2487 = vtanh.pop %v2484
  %v2488 = vtanh.pop %v2485
  %v2489 = vmul.f32 %v2486, 0.5
  %v2490 = vmul.f32 %v2487, 0.5
  %v2491 = vmul.f32 %v2488, 0.5
  %v2492 = vadd.f32 %v2489, 0.5
  %v2493 = vadd.f32 %v2490, 0.5
  %v2494 = vadd.f32 %v2491, 0.5
  %v2495 = vtanh.pop %v2482
  %v2496 = vmul.f32 %v2493, %v2389
  %v2497 = vmul.f32 %v2492, %v2495
  %v2498 = vadd.f32 %v2496, %v2497
  %v2499 = vtanh.pop %v2498
  %v2500 = vmul.f32 %v2494, %v2499
  %v2501 = vld [vmem:[#allocation2 + $0x1c0] sm:$0xff]
  %v2502 = vld [vmem:[#allocation2 + $0x1c8] sm:$0xff]
  %v2503 = vld [vmem:[#allocation2 + $0x1d0] sm:$0xff]
  %v2504 = vld [vmem:[#allocation2 + $0x1d8] sm:$0xff]
  %v2505 = vpack.c.bf16 %v2500, %v2500
  %2506 = vmatprep.subr.bf16.mxu0 %v917
  %2507 = vmatpush1.bf16.msra.mxu0 %v916
  %2508 = vmatprep.subr.bf16.mxu0 %v921
  %2509 = vmatpush1.bf16.msra.mxu0 %v920
  %2510 = vmatprep.subr.bf16.mxu0 %v925
  %2511 = vmatpush1.bf16.msra.mxu0 %v924
  %2512 = vmatprep.subr.bf16.mxu0 %v929
  %2513 = vmatpush1.bf16.msra.mxu0 %v928
  %2514 = vmatprep.subr.bf16.mxu0 %v933
  %2515 = vmatpush1.bf16.msra.mxu0 %v932
  %2516 = vmatprep.subr.bf16.mxu0 %v937
  %2517 = vmatpush1.bf16.msra.mxu0 %v936
  %2518 = vmatprep.subr.bf16.mxu0 %v941
  %2519 = vmatpush1.bf16.msra.mxu0 %v940
  %2520 = vmatprep.subr.bf16.mxu0 %v945
  %2521 = vmatpush1.bf16.msra.mxu0 %v944
  %2522 = vmatprep.subr.bf16.mxu0 0
  %2523 = vmatpush1.bf16.msra.mxu0 0
  %2524 = vmatprep.subr.bf16.mxu0 0
  %2525 = vmatpush1.bf16.msra.mxu0 0
  %2526 = vmatprep.subr.bf16.mxu0 0
  %2527 = vmatpush1.bf16.msra.mxu0 0
  %2528 = vmatprep.subr.bf16.mxu0 0
  %2529 = vmatpush1.bf16.msra.mxu0 0
  %2530 = vmatprep.subr.bf16.mxu0 0
  %2531 = vmatpush1.bf16.msra.mxu0 0
  %2532 = vmatprep.subr.bf16.mxu0 0
  %2533 = vmatpush1.bf16.msra.mxu0 0
  %2534 = vmatprep.subr.bf16.mxu0 0
  %2535 = vmatpush1.bf16.msra.mxu0 0
  %2536 = vmatprep.subr.bf16.mxu0 0
  %2537 = vmatpush1.bf16.msra.mxu0 0
  %2538 = vmatprep.mubr.bf16.mxu0 0
  %2539 = vmatmul.mubr.bf16.gmra.mrb[0].mxu0 %v2505
  %v2540 = vpop.f32.mrb[0].mxu0
  %v2541 = vadd.f32 0.0, %v2540
  %v2542 = vpop.f32.mrb[0].mxu0
  %v2543 = vadd.f32 0.0, %v2542
  %v2544 = vpop.f32.mrb[0].mxu0
  %v2545 = vpop.f32.mrb[0].mxu0
  %2546 = vdwg.mxu0
  %2547 = vmatprep.subr.bf16.mxu0 %v919
  %2548 = vmatpush1.bf16.msra.mxu0 %v918
  %2549 = vmatprep.subr.bf16.mxu0 %v923
  %2550 = vmatpush1.bf16.msra.mxu0 %v922
  %2551 = vmatprep.subr.bf16.mxu0 %v927
  %2552 = vmatpush1.bf16.msra.mxu0 %v926
  %2553 = vmatprep.subr.bf16.mxu0 %v931
  %2554 = vmatpush1.bf16.msra.mxu0 %v930
  %2555 = vmatprep.subr.bf16.mxu0 %v935
  %2556 = vmatpush1.bf16.msra.mxu0 %v934
  %2557 = vmatprep.subr.bf16.mxu0 %v939
  %2558 = vmatpush1.bf16.msra.mxu0 %v938
  %2559 = vmatprep.subr.bf16.mxu0 %v943
  %2560 = vmatpush1.bf16.msra.mxu0 %v942
  %2561 = vmatprep.subr.bf16.mxu0 %v947
  %2562 = vmatpush1.bf16.msra.mxu0 %v946
  %2563 = vmatprep.subr.bf16.mxu0 0
  %2564 = vmatpush1.bf16.msra.mxu0 0
  %2565 = vmatprep.subr.bf16.mxu0 0
  %2566 = vmatpush1.bf16.msra.mxu0 0
  %2567 = vmatprep.subr.bf16.mxu0 0
  %2568 = vmatpush1.bf16.msra.mxu0 0
  %2569 = vmatprep.subr.bf16.mxu0 0
  %2570 = vmatpush1.bf16.msra.mxu0 0
  %2571 = vmatprep.subr.bf16.mxu0 0
  %2572 = vmatpush1.bf16.msra.mxu0 0
  %2573 = vmatprep.subr.bf16.mxu0 0
  %2574 = vmatpush1.bf16.msra.mxu0 0
  %2575 = vmatprep.subr.bf16.mxu0 0
  %2576 = vmatpush1.bf16.msra.mxu0 0
  %2577 = vmatprep.subr.bf16.mxu0 0
  %2578 = vmatpush1.bf16.msra.mxu0 0
  %2579 = vmatprep.mubr.bf16.mxu0 0
  %2580 = vmatmul.mubr.bf16.gmra.mrb[0].mxu0 %v2505
  %v2581 = vpop.f32.mrb[0].mxu0
  %v2582 = vadd.f32 0.0, %v2581
  %v2583 = vpop.f32.mrb[0].mxu0
  %v2584 = vadd.f32 0.0, %v2583
  %v2585 = vpop.f32.mrb[0].mxu0
  %v2586 = vpop.f32.mrb[0].mxu0
  %2587 = vdwg.mxu0
  %v2588 = vadd.f32 %v2501, %v2541
  %v2589 = vadd.f32 %v2502, %v2543
  %v2590 = vadd.f32 %v2503, %v2582
  %v2591 = vadd.f32 %v2504, %v2584
  %v2592 = vmul.f32 %v2588, 0.5
  %v2593 = vmul.f32 %v2589, 0.5
  %v2594 = vmul.f32 %v2590, 0.5
  %v2595 = vtanh.pop %v2592
  %v2596 = vtanh.pop %v2593
  %v2597 = vtanh.pop %v2594
  %v2598 = vmul.f32 %v2595, 0.5
  %v2599 = vmul.f32 %v2596, 0.5
  %v2600 = vmul.f32 %v2597, 0.5
  %v2601 = vadd.f32 %v2598, 0.5
  %v2602 = vadd.f32 %v2599, 0.5
  %v2603 = vadd.f32 %v2600, 0.5
  %v2604 = vtanh.pop %v2591
  %v2605 = vmul.f32 %v2602, %v2498
  %v2606 = vmul.f32 %v2601, %v2604
  %v2607 = vadd.f32 %v2605, %v2606
  %v2608 = vtanh.pop %v2607
  %v2609 = vmul.f32 %v2603, %v2608
  %v2610 = vld [vmem:[#allocation2 + $0x1e0] sm:$0xff]
  %v2611 = vld [vmem:[#allocation2 + $0x1e8] sm:$0xff]
  %v2612 = vld [vmem:[#allocation2 + $0x1f0] sm:$0xff]
  %v2613 = vld [vmem:[#allocation2 + $0x1f8] sm:$0xff]
  %v2614 = vpack.c.bf16 %v2609, %v2609
  %2615 = vmatprep.subr.bf16.mxu0 %v917
  %2616 = vmatpush1.bf16.msra.mxu0 %v916
  %2617 = vmatprep.subr.bf16.mxu0 %v921
  %2618 = vmatpush1.bf16.msra.mxu0 %v920
  %2619 = vmatprep.subr.bf16.mxu0 %v925
  %2620 = vmatpush1.bf16.msra.mxu0 %v924
  %2621 = vmatprep.subr.bf16.mxu0 %v929
  %2622 = vmatpush1.bf16.msra.mxu0 %v928
  %2623 = vmatprep.subr.bf16.mxu0 %v933
  %2624 = vmatpush1.bf16.msra.mxu0 %v932
  %2625 = vmatprep.subr.bf16.mxu0 %v937
  %2626 = vmatpush1.bf16.msra.mxu0 %v936
  %2627 = vmatprep.subr.bf16.mxu0 %v941
  %2628 = vmatpush1.bf16.msra.mxu0 %v940
  %2629 = vmatprep.subr.bf16.mxu0 %v945
  %2630 = vmatpush1.bf16.msra.mxu0 %v944
  %2631 = vmatprep.subr.bf16.mxu0 0
  %2632 = vmatpush1.bf16.msra.mxu0 0
  %2633 = vmatprep.subr.bf16.mxu0 0
  %2634 = vmatpush1.bf16.msra.mxu0 0
  %2635 = vmatprep.subr.bf16.mxu0 0
  %2636 = vmatpush1.bf16.msra.mxu0 0
  %2637 = vmatprep.subr.bf16.mxu0 0
  %2638 = vmatpush1.bf16.msra.mxu0 0
  %2639 = vmatprep.subr.bf16.mxu0 0
  %2640 = vmatpush1.bf16.msra.mxu0 0
  %2641 = vmatprep.subr.bf16.mxu0 0
  %2642 = vmatpush1.bf16.msra.mxu0 0
  %2643 = vmatprep.subr.bf16.mxu0 0
  %2644 = vmatpush1.bf16.msra.mxu0 0
  %2645 = vmatprep.subr.bf16.mxu0 0
  %2646 = vmatpush1.bf16.msra.mxu0 0
  %2647 = vmatprep.mubr.bf16.mxu0 0
  %2648 = vmatmul.mubr.bf16.gmra.mrb[0].mxu0 %v2614
  %v2649 = vpop.f32.mrb[0].mxu0
  %v2650 = vadd.f32 0.0, %v2649
  %v2651 = vpop.f32.mrb[0].mxu0
  %v2652 = vadd.f32 0.0, %v2651
  %v2653 = vpop.f32.mrb[0].mxu0
  %v2654 = vpop.f32.mrb[0].mxu0
  %2655 = vdwg.mxu0
  %2656 = vmatprep.subr.bf16.mxu0 %v919
  %2657 = vmatpush1.bf16.msra.mxu0 %v918
  %2658 = vmatprep.subr.bf16.mxu0 %v923
  %2659 = vmatpush1.bf16.msra.mxu0 %v922
  %2660 = vmatprep.subr.bf16.mxu0 %v927
  %2661 = vmatpush1.bf16.msra.mxu0 %v926
  %2662 = vmatprep.subr.bf16.mxu0 %v931
  %2663 = vmatpush1.bf16.msra.mxu0 %v930
  %2664 = vmatprep.subr.bf16.mxu0 %v935
  %2665 = vmatpush1.bf16.msra.mxu0 %v934
  %2666 = vmatprep.subr.bf16.mxu0 %v939
  %2667 = vmatpush1.bf16.msra.mxu0 %v938
  %2668 = vmatprep.subr.bf16.mxu0 %v943
  %2669 = vmatpush1.bf16.msra.mxu0 %v942
  %2670 = vmatprep.subr.bf16.mxu0 %v947
  %2671 = vmatpush1.bf16.msra.mxu0 %v946
  %2672 = vmatprep.subr.bf16.mxu0 0
  %2673 = vmatpush1.bf16.msra.mxu0 0
  %2674 = vmatprep.subr.bf16.mxu0 0
  %2675 = vmatpush1.bf16.msra.mxu0 0
  %2676 = vmatprep.subr.bf16.mxu0 0
  %2677 = vmatpush1.bf16.msra.mxu0 0
  %2678 = vmatprep.subr.bf16.mxu0 0
  %2679 = vmatpush1.bf16.msra.mxu0 0
  %2680 = vmatprep.subr.bf16.mxu0 0
  %2681 = vmatpush1.bf16.msra.mxu0 0
  %2682 = vmatprep.subr.bf16.mxu0 0
  %2683 = vmatpush1.bf16.msra.mxu0 0
  %2684 = vmatprep.subr.bf16.mxu0 0
  %2685 = vmatpush1.bf16.msra.mxu0 0
  %2686 = vmatprep.subr.bf16.mxu0 0
  %2687 = vmatpush1.bf16.msra.mxu0 0
  %2688 = vmatprep.mubr.bf16.mxu0 0
  %2689 = vmatmul.mubr.bf16.gmra.mrb[0].mxu0 %v2614
  %v2690 = vpop.f32.mrb[0].mxu0
  %v2691 = vadd.f32 0.0, %v2690
  %v2692 = vpop.f32.mrb[0].mxu0
  %v2693 = vadd.f32 0.0, %v2692
  %v2694 = vpop.f32.mrb[0].mxu0
  %v2695 = vpop.f32.mrb[0].mxu0
  %2696 = vdwg.mxu0
  %v2697 = vadd.f32 %v2610, %v2650
  %v2698 = vadd.f32 %v2611, %v2652
  %v2699 = vadd.f32 %v2612, %v2691
  %v2700 = vadd.f32 %v2613, %v2693
  %v2701 = vmul.f32 %v2697, 0.5
  %v2702 = vmul.f32 %v2698, 0.5
  %v2703 = vmul.f32 %v2699, 0.5
  %v2704 = vtanh.pop %v2701
  %v2705 = vtanh.pop %v2702
  %v2706 = vtanh.pop %v2703
  %v2707 = vmul.f32 %v2704, 0.5
  %v2708 = vmul.f32 %v2705, 0.5
  %v2709 = vmul.f32 %v2706, 0.5
  %v2710 = vadd.f32 %v2707, 0.5
  %v2711 = vadd.f32 %v2708, 0.5
  %v2712 = vadd.f32 %v2709, 0.5
  %v2713 = vtanh.pop %v2700
  %v2714 = vmul.f32 %v2711, %v2607
  %v2715 = vmul.f32 %v2710, %v2713
  %v2716 = vadd.f32 %v2714, %v2715
  %v2717 = vtanh.pop %v2716
  %v2718 = vmul.f32 %v2712, %v2717
  %v2719 = vpack.c.bf16 %v391, %v391
  %v2720 = vld [vmem:[%s5] sm:$0xff]
  %v2721 = vld [vmem:[%s5 + $0x8] sm:$0xf]
  %v2722 = vld [vmem:[%s5 + $0xc] sm:$0xff]
  %v2723 = vld [vmem:[%s5 + $0x14] sm:$0xf]
  %v2724 = vld [vmem:[%s5 + $0x18] sm:$0xff]
  %v2725 = vld [vmem:[%s5 + $0x20] sm:$0xf]
  %v2726 = vld [vmem:[%s5 + $0x24] sm:$0xff]
  %v2727 = vld [vmem:[%s5 + $0x2c] sm:$0xf]
  %v2729 = vlaneseq
  %v2730 = vshrl.u32 %v2729, 7
  %v2731 = vsub.s32 0, %v2730
  %v2732 = vrot.slane %v32, %v2731
  %v2733 = vlaneseq
  %v2734 = vshrl.u32 %v2733, 7
  %v2735 = vsub.s32 1, %v2734
  %v2736 = vrot.slane %v32, %v2735
  %v2737 = vlaneseq
  %v2738 = vshrl.u32 %v2737, 7
  %v2739 = vsub.s32 2, %v2738
  %v2740 = vrot.slane %v32, %v2739
  %v2752 = vunpack.c.l.b16 %v2720
  %v2753 = vunpack.c.h.b16 %v2720
  %v2754 = vunpack.c.l.b16 %v2721
  %v2755 = vunpack.c.l.b16 %v2722
  %v2756 = vunpack.c.h.b16 %v2722
  %v2757 = vunpack.c.l.b16 %v2723
  %v2758 = vunpack.c.l.b16 %v2724
  %v2759 = vunpack.c.h.b16 %v2724
  %v2760 = vunpack.c.l.b16 %v2725
  %v2761 = vunpack.c.l.b16 %v2726
  %v2762 = vunpack.c.h.b16 %v2726
  %v2763 = vunpack.c.l.b16 %v2727
  %v2764 = vpack.c.b16 %v2755, %v2752
  %v2765 = vpack.c.b16 %v2756, %v2753
  %v2766 = vpack.c.b16 %v2757, %v2754
  %v2767 = vpack.c.b16 %v2761, %v2758
  %v2768 = vpack.c.b16 %v2762, %v2759
  %v2769 = vpack.c.b16 %v2763, %v2760
  %v2777 = vsel %vm469, %v2719, 0
  %2779 = vmatprep.subr.bf16.mxu0 %v2765
  %2780 = vmatpush1.bf16.msra.mxu0 %v2764
  %2781 = vmatprep.subr.bf16.mxu0 %v2768
  %2782 = vmatpush1.bf16.msra.mxu0 %v2767
  %2783 = vmatprep.subr.bf16.mxu0 0
  %2784 = vmatpush1.bf16.msra.mxu0 0
  %2785 = vmatprep.subr.bf16.mxu0 0
  %2786 = vmatpush1.bf16.msra.mxu0 0
  %2787 = vmatprep.subr.bf16.mxu0 0
  %2788 = vmatpush1.bf16.msra.mxu0 0
  %2789 = vmatprep.subr.bf16.mxu0 0
  %2790 = vmatpush1.bf16.msra.mxu0 0
  %2791 = vmatprep.subr.bf16.mxu0 0
  %2792 = vmatpush1.bf16.msra.mxu0 0
  %2793 = vmatprep.subr.bf16.mxu0 0
  %2794 = vmatpush1.bf16.msra.mxu0 0
  %2795 = vmatprep.subr.bf16.mxu0 0
  %2796 = vmatpush1.bf16.msra.mxu0 0
  %2797 = vmatprep.subr.bf16.mxu0 0
  %2798 = vmatpush1.bf16.msra.mxu0 0
  %2799 = vmatprep.subr.bf16.mxu0 0
  %2800 = vmatpush1.bf16.msra.mxu0 0
  %2801 = vmatprep.subr.bf16.mxu0 0
  %2802 = vmatpush1.bf16.msra.mxu0 0
  %2803 = vmatprep.subr.bf16.mxu0 0
  %2804 = vmatpush1.bf16.msra.mxu0 0
  %2805 = vmatprep.subr.bf16.mxu0 0
  %2806 = vmatpush1.bf16.msra.mxu0 0
  %2807 = vmatprep.subr.bf16.mxu0 0
  %2808 = vmatpush1.bf16.msra.mxu0 0
  %2809 = vmatprep.subr.bf16.mxu0 0
  %2810 = vmatpush1.bf16.msra.mxu0 0
  %2811 = vmatprep.mubr.bf16.mxu0 0
  %2812 = vmatmul.mubr.bf16.gmra.mrb[0].mxu0 %v2777
  %v2813 = vpop.f32.mrb[0].mxu0
  %v2814 = vadd.f32 %v2732, %v2813
  %v2815 = vpop.f32.mrb[0].mxu0
  %v2816 = vadd.f32 %v2736, %v2815
  %v2817 = vpop.f32.mrb[0].mxu0
  %v2818 = vpop.f32.mrb[0].mxu0
  %2819 = vdwg.mxu0
  %2820 = vmatprep.subr.bf16.mxu0 0
  %2821 = vmatpush1.bf16.msra.mxu0 %v2766
  %2822 = vmatprep.subr.bf16.mxu0 0
  %2823 = vmatpush1.bf16.msra.mxu0 %v2769
  %2824 = vmatprep.subr.bf16.mxu0 0
  %2825 = vmatpush1.bf16.msra.mxu0 0
  %2826 = vmatprep.subr.bf16.mxu0 0
  %2827 = vmatpush1.bf16.msra.mxu0 0
  %2828 = vmatprep.subr.bf16.mxu0 0
  %2829 = vmatpush1.bf16.msra.mxu0 0
  %2830 = vmatprep.subr.bf16.mxu0 0
  %2831 = vmatpush1.bf16.msra.mxu0 0
  %2832 = vmatprep.subr.bf16.mxu0 0
  %2833 = vmatpush1.bf16.msra.mxu0 0
  %2834 = vmatprep.subr.bf16.mxu0 0
  %2835 = vmatpush1.bf16.msra.mxu0 0
  %2836 = vmatprep.subr.bf16.mxu0 0
  %2837 = vmatpush1.bf16.msra.mxu0 0
  %2838 = vmatprep.subr.bf16.mxu0 0
  %2839 = vmatpush1.bf16.msra.mxu0 0
  %2840 = vmatprep.subr.bf16.mxu0 0
  %2841 = vmatpush1.bf16.msra.mxu0 0
  %2842 = vmatprep.subr.bf16.mxu0 0
  %2843 = vmatpush1.bf16.msra.mxu0 0
  %2844 = vmatprep.subr.bf16.mxu0 0
  %2845 = vmatpush1.bf16.msra.mxu0 0
  %2846 = vmatprep.subr.bf16.mxu0 0
  %2847 = vmatpush1.bf16.msra.mxu0 0
  %2848 = vmatprep.subr.bf16.mxu0 0
  %2849 = vmatpush1.bf16.msra.mxu0 0
  %2850 = vmatprep.subr.bf16.mxu0 0
  %2851 = vmatpush1.bf16.msra.mxu0 0
  %2852 = vmatprep.mubr.bf16.mxu0 0
  %2853 = vmatmul.mubr.bf16.gmra.mrb[0].mxu0 %v2777
  %v2854 = vpop.f32.mrb[0].mxu0
  %v2855 = vadd.f32 %v2740, %v2854
  %v2856 = vpop.f32.mrb[0].mxu0
  %v2857 = vpop.f32.mrb[0].mxu0
  %v2858 = vpop.f32.mrb[0].mxu0
  %2859 = vdwg.mxu0
  %v2860 = vmul.f32 %v2814, 0.5
  %v2861 = vmul.f32 %v2816, 0.5
  %v2862 = vtanh.pop %v2860
  %v2863 = vtanh.pop %v2861
  %v2864 = vmul.f32 %v2862, 0.5
  %v2865 = vmul.f32 %v2863, 0.5
  %v2866 = vadd.f32 %v2864, 0.5
  %v2867 = vadd.f32 %v2865, 0.5
  %v2868 = vtanh.pop %v2855
  %v2869 = vmul.f32 %v2866, %v2868
  %v2870 = vtanh.pop %v2869
  %v2871 = vmul.f32 %v2867, %v2870
  %v2872 = vpack.c.bf16 %v2718, %v2718
  %v2873 = vld [vmem:[%s6] sm:$0xf]
  %v2874 = vld [vmem:[%s6 + $0x4] sm:$0xf]
  %v2875 = vld [vmem:[%s6 + $0x8] sm:$0xf]
  %v2876 = vld [vmem:[%s6 + $0xc] sm:$0xf]
  %v2877 = vld [vmem:[%s6 + $0x10] sm:$0xf]
  %v2878 = vld [vmem:[%s6 + $0x14] sm:$0xf]
  %v2879 = vld [vmem:[%s6 + $0x18] sm:$0xf]
  %v2880 = vld [vmem:[%s6 + $0x1c] sm:$0xf]
  %v2881 = vld [vmem:[%s6 + $0x20] sm:$0xf]
  %v2882 = vld [vmem:[%s6 + $0x24] sm:$0xf]
  %v2883 = vld [vmem:[%s6 + $0x28] sm:$0xf]
  %v2884 = vld [vmem:[%s6 + $0x2c] sm:$0xf]
  %v2885 = vld [vmem:[%s6 + $0x30] sm:$0xf]
  %v2886 = vld [vmem:[%s6 + $0x34] sm:$0xf]
  %v2887 = vld [vmem:[%s6 + $0x38] sm:$0xf]
  %v2888 = vld [vmem:[%s6 + $0x3c] sm:$0xf]
  %v2889 = vpack.c.bf16 %v2871, %v2871
  %v2890 = vld [vmem:[%s6 + $0x40] sm:$0xf]
  %v2891 = vld [vmem:[%s6 + $0x44] sm:$0xf]
  %v2892 = vld [vmem:[%s6 + $0x48] sm:$0xf]
  %v2893 = vld [vmem:[%s6 + $0x4c] sm:$0xf]
  %v2894 = vld [vmem:[%s6 + $0x50] sm:$0xf]
  %v2895 = vld [vmem:[%s6 + $0x54] sm:$0xf]
  %v2896 = vld [vmem:[%s6 + $0x58] sm:$0xf]
  %v2897 = vld [vmem:[%s6 + $0x5c] sm:$0xf]
  %v2898 = vld [vmem:[%s6 + $0x60] sm:$0xf]
  %v2899 = vld [vmem:[%s6 + $0x64] sm:$0xf]
  %v2900 = vld [vmem:[%s6 + $0x68] sm:$0xf]
  %v2901 = vld [vmem:[%s6 + $0x6c] sm:$0xf]
  %v2902 = vld [vmem:[%s6 + $0x70] sm:$0xf]
  %v2903 = vld [vmem:[%s6 + $0x74] sm:$0xf]
  %v2904 = vld [vmem:[%s6 + $0x78] sm:$0xf]
  %v2905 = vld [vmem:[%s6 + $0x7c] sm:$0xf]
  %v2922 = vunpack.c.l.b16 %v2890
  %v2923 = vunpack.c.l.b16 %v2891
  %v2924 = vunpack.c.l.b16 %v2892
  %v2925 = vunpack.c.l.b16 %v2893
  %v2926 = vunpack.c.l.b16 %v2894
  %v2927 = vunpack.c.l.b16 %v2895
  %v2928 = vunpack.c.l.b16 %v2896
  %v2929 = vunpack.c.l.b16 %v2897
  %v2930 = vunpack.c.l.b16 %v2898
  %v2931 = vunpack.c.l.b16 %v2899
  %v2932 = vunpack.c.l.b16 %v2900
  %v2933 = vunpack.c.l.b16 %v2901
  %v2934 = vunpack.c.l.b16 %v2902
  %v2935 = vunpack.c.l.b16 %v2903
  %v2936 = vunpack.c.l.b16 %v2904
  %v2937 = vunpack.c.l.b16 %v2905
  %v2938 = vpack.c.b16 %v2923, %v2922
  %v2939 = vpack.c.b16 %v2925, %v2924
  %v2940 = vpack.c.b16 %v2927, %v2926
  %v2941 = vpack.c.b16 %v2929, %v2928
  %v2942 = vpack.c.b16 %v2931, %v2930
  %v2943 = vpack.c.b16 %v2933, %v2932
  %v2944 = vpack.c.b16 %v2935, %v2934
  %v2945 = vpack.c.b16 %v2937, %v2936
  %2954 = vmatprep.subr.bf16.mxu0 0
  %2955 = vmatpush1.bf16.msra.mxu0 %v2938
  %2956 = vmatprep.subr.bf16.mxu0 0
  %2957 = vmatpush1.bf16.msra.mxu0 %v2939
  %2958 = vmatprep.subr.bf16.mxu0 0
  %2959 = vmatpush1.bf16.msra.mxu0 %v2940
  %2960 = vmatprep.subr.bf16.mxu0 0
  %2961 = vmatpush1.bf16.msra.mxu0 %v2941
  %2962 = vmatprep.subr.bf16.mxu0 0
  %2963 = vmatpush1.bf16.msra.mxu0 %v2942
  %2964 = vmatprep.subr.bf16.mxu0 0
  %2965 = vmatpush1.bf16.msra.mxu0 %v2943
  %2966 = vmatprep.subr.bf16.mxu0 0
  %2967 = vmatpush1.bf16.msra.mxu0 %v2944
  %2968 = vmatprep.subr.bf16.mxu0 0
  %2969 = vmatpush1.bf16.msra.mxu0 %v2945
  %2970 = vmatprep.subr.bf16.mxu0 0
  %2971 = vmatpush1.bf16.msra.mxu0 0
  %2972 = vmatprep.subr.bf16.mxu0 0
  %2973 = vmatpush1.bf16.msra.mxu0 0
  %2974 = vmatprep.subr.bf16.mxu0 0
  %2975 = vmatpush1.bf16.msra.mxu0 0
  %2976 = vmatprep.subr.bf16.mxu0 0
  %2977 = vmatpush1.bf16.msra.mxu0 0
  %2978 = vmatprep.subr.bf16.mxu0 0
  %2979 = vmatpush1.bf16.msra.mxu0 0
  %2980 = vmatprep.subr.bf16.mxu0 0
  %2981 = vmatpush1.bf16.msra.mxu0 0
  %2982 = vmatprep.subr.bf16.mxu0 0
  %2983 = vmatpush1.bf16.msra.mxu0 0
  %2984 = vmatprep.subr.bf16.mxu0 0
  %2985 = vmatpush1.bf16.msra.mxu0 0
  %2986 = vmatprep.mubr.bf16.mxu0 0
  %2987 = vmatmul.mubr.bf16.gmra.mrb[0].mxu0 %v2889
  %v2988 = vpop.f32.mrb[0].mxu0
  %v2989 = vadd.f32 0.0, %v2988
  %v2990 = vpop.f32.mrb[0].mxu0
  %v2991 = vpop.f32.mrb[0].mxu0
  %v2992 = vpop.f32.mrb[0].mxu0
  %2993 = vdwg.mxu0
  %v3010 = vunpack.c.l.b16 %v2873
  %v3011 = vunpack.c.l.b16 %v2874
  %v3012 = vunpack.c.l.b16 %v2875
  %v3013 = vunpack.c.l.b16 %v2876
  %v3014 = vunpack.c.l.b16 %v2877
  %v3015 = vunpack.c.l.b16 %v2878
  %v3016 = vunpack.c.l.b16 %v2879
  %v3017 = vunpack.c.l.b16 %v2880
  %v3018 = vunpack.c.l.b16 %v2881
  %v3019 = vunpack.c.l.b16 %v2882
  %v3020 = vunpack.c.l.b16 %v2883
  %v3021 = vunpack.c.l.b16 %v2884
  %v3022 = vunpack.c.l.b16 %v2885
  %v3023 = vunpack.c.l.b16 %v2886
  %v3024 = vunpack.c.l.b16 %v2887
  %v3025 = vunpack.c.l.b16 %v2888
  %v3026 = vpack.c.b16 %v3011, %v3010
  %v3027 = vpack.c.b16 %v3013, %v3012
  %v3028 = vpack.c.b16 %v3015, %v3014
  %v3029 = vpack.c.b16 %v3017, %v3016
  %v3030 = vpack.c.b16 %v3019, %v3018
  %v3031 = vpack.c.b16 %v3021, %v3020
  %v3032 = vpack.c.b16 %v3023, %v3022
  %v3033 = vpack.c.b16 %v3025, %v3024
  %3042 = vmatprep.subr.bf16.mxu0 0
  %3043 = vmatpush1.bf16.msra.mxu0 %v3026
  %3044 = vmatprep.subr.bf16.mxu0 0
  %3045 = vmatpush1.bf16.msra.mxu0 %v3027
  %3046 = vmatprep.subr.bf16.mxu0 0
  %3047 = vmatpush1.bf16.msra.mxu0 %v3028
  %3048 = vmatprep.subr.bf16.mxu0 0
  %3049 = vmatpush1.bf16.msra.mxu0 %v3029
  %3050 = vmatprep.subr.bf16.mxu0 0
  %3051 = vmatpush1.bf16.msra.mxu0 %v3030
  %3052 = vmatprep.subr.bf16.mxu0 0
  %3053 = vmatpush1.bf16.msra.mxu0 %v3031
  %3054 = vmatprep.subr.bf16.mxu0 0
  %3055 = vmatpush1.bf16.msra.mxu0 %v3032
  %3056 = vmatprep.subr.bf16.mxu0 0
  %3057 = vmatpush1.bf16.msra.mxu0 %v3033
  %3058 = vmatprep.subr.bf16.mxu0 0
  %3059 = vmatpush1.bf16.msra.mxu0 0
  %3060 = vmatprep.subr.bf16.mxu0 0
  %3061 = vmatpush1.bf16.msra.mxu0 0
  %3062 = vmatprep.subr.bf16.mxu0 0
  %3063 = vmatpush1.bf16.msra.mxu0 0
  %3064 = vmatprep.subr.bf16.mxu0 0
  %3065 = vmatpush1.bf16.msra.mxu0 0
  %3066 = vmatprep.subr.bf16.mxu0 0
  %3067 = vmatpush1.bf16.msra.mxu0 0
  %3068 = vmatprep.subr.bf16.mxu0 0
  %3069 = vmatpush1.bf16.msra.mxu0 0
  %3070 = vmatprep.subr.bf16.mxu0 0
  %3071 = vmatpush1.bf16.msra.mxu0 0
  %3072 = vmatprep.subr.bf16.mxu0 0
  %3073 = vmatpush1.bf16.msra.mxu0 0
  %3074 = vmatprep.mubr.bf16.mxu0 0
  %3075 = vmatmul.mubr.bf16.gmra.mrb[0].mxu0 %v2872
  %v3076 = vpop.f32.mrb[0].mxu0
  %v3077 = vadd.f32 %v2989, %v3076
  %v3078 = vpop.f32.mrb[0].mxu0
  %v3079 = vpop.f32.mrb[0].mxu0
  %v3080 = vpop.f32.mrb[0].mxu0
  %3081 = vdwg.mxu0
  %v3083 = vlaneseq
  %v3084 = vshrl.u32 %v3083, 7
  %v3085 = vsub.s32 0, %v3084
  %v3086 = vrot.slane %v33, %v3085
  %v3088 = vadd.f32 %v3077, %v3086
  %v3089 = vmax.f32 %v3088, 0.0
  %v3090 = vpack.c.bf16 %v3089, %v3089
  %v3091 = vld [vmem:[%s7] sm:$0xf]
  %v3092 = vld [vmem:[%s7 + $0x4] sm:$0xf]
  %v3093 = vld [vmem:[%s7 + $0x8] sm:$0xf]
  %v3094 = vld [vmem:[%s7 + $0xc] sm:$0xf]
  %v3095 = vld [vmem:[%s7 + $0x10] sm:$0xf]
  %v3096 = vld [vmem:[%s7 + $0x14] sm:$0xf]
  %v3097 = vld [vmem:[%s7 + $0x18] sm:$0xf]
  %v3098 = vld [vmem:[%s7 + $0x1c] sm:$0xf]
  %v3100 = vlaneseq
  %v3101 = vshrl.u32 %v3100, 7
  %v3102 = vsub.s32 0, %v3101
  %v3103 = vrot.slane %v34, %v3102
  %v3113 = vunpack.c.l.b16 %v3091
  %v3114 = vunpack.c.l.b16 %v3092
  %v3115 = vunpack.c.l.b16 %v3093
  %v3116 = vunpack.c.l.b16 %v3094
  %v3117 = vunpack.c.l.b16 %v3095
  %v3118 = vunpack.c.l.b16 %v3096
  %v3119 = vunpack.c.l.b16 %v3097
  %v3120 = vunpack.c.l.b16 %v3098
  %v3121 = vpack.c.b16 %v3114, %v3113
  %v3122 = vpack.c.b16 %v3116, %v3115
  %v3123 = vpack.c.b16 %v3118, %v3117
  %v3124 = vpack.c.b16 %v3120, %v3119
  %vm3129 = vcmask 523264
  %v3131 = vsel %vm3129, %v3090, 0
  %3133 = vmatprep.subr.bf16.mxu0 0
  %3134 = vmatpush1.bf16.msra.mxu0 %v3121
  %3135 = vmatprep.subr.bf16.mxu0 0
  %3136 = vmatpush1.bf16.msra.mxu0 %v3122
  %3137 = vmatprep.subr.bf16.mxu0 0
  %3138 = vmatpush1.bf16.msra.mxu0 %v3123
  %3139 = vmatprep.subr.bf16.mxu0 0
  %3140 = vmatpush1.bf16.msra.mxu0 %v3124
  %3141 = vmatprep.subr.bf16.mxu0 0
  %3142 = vmatpush1.bf16.msra.mxu0 0
  %3143 = vmatprep.subr.bf16.mxu0 0
  %3144 = vmatpush1.bf16.msra.mxu0 0
  %3145 = vmatprep.subr.bf16.mxu0 0
  %3146 = vmatpush1.bf16.msra.mxu0 0
  %3147 = vmatprep.subr.bf16.mxu0 0
  %3148 = vmatpush1.bf16.msra.mxu0 0
  %3149 = vmatprep.subr.bf16.mxu0 0
  %3150 = vmatpush1.bf16.msra.mxu0 0
  %3151 = vmatprep.subr.bf16.mxu0 0
  %3152 = vmatpush1.bf16.msra.mxu0 0
  %3153 = vmatprep.subr.bf16.mxu0 0
  %3154 = vmatpush1.bf16.msra.mxu0 0
  %3155 = vmatprep.subr.bf16.mxu0 0
  %3156 = vmatpush1.bf16.msra.mxu0 0
  %3157 = vmatprep.subr.bf16.mxu0 0
  %3158 = vmatpush1.bf16.msra.mxu0 0
  %3159 = vmatprep.subr.bf16.mxu0 0
  %3160 = vmatpush1.bf16.msra.mxu0 0
  %3161 = vmatprep.subr.bf16.mxu0 0
  %3162 = vmatpush1.bf16.msra.mxu0 0
  %3163 = vmatprep.subr.bf16.mxu0 0
  %3164 = vmatpush1.bf16.msra.mxu0 0
  %3165 = vmatprep.mubr.bf16.mxu0 0
  %3166 = vmatmul.mubr.bf16.gmra.mrb[0].mxu0 %v3131
  %v3167 = vpop.f32.mrb[0].mxu0
  %v3168 = vadd.f32 %v3103, %v3167
  %v3169 = vpop.f32.mrb[0].mxu0
  %v3170 = vpop.f32.mrb[0].mxu0
  %v3171 = vpop.f32.mrb[0].mxu0
  %3172 = vdwg.mxu0
  %vm3173 = vcmask 31744
  %3174 = vst.msk [vmem:[%s8] sm:$0xff] %vm3173, %v3168
  // Predicated region
  $region34: #{cnn_bilstm_forward.1} parent=0 // pred_check
    _
  $region35: #{cnn_bilstm_forward.1} parent=0 // pred_check_branch
    %3176 = sbr.rel (0) target = $region37
  $region36: #{cnn_bilstm_forward.1} parent=0 // pred_region
    _
  $region37: #{cnn_bilstm_forward.1} parent=0 // pred_fallthru
    _
  // Predicated region
  $region38: #{cnn_bilstm_forward.1} parent=0 // pred_check
    _
  $region39: #{cnn_bilstm_forward.1} parent=0 // pred_check_branch
    %3178 = sbr.rel (0) target = $region41
  $region40: #{cnn_bilstm_forward.1} parent=0 // pred_region
    _
  $region41: #{cnn_bilstm_forward.1} parent=0 // pred_fallthru
    _

</llo_original>
